<compile_context>
chip_gen: v7x
topology: tpu7x:2x2x1
jax: 0.10.0
libtpu: 0.0.40
codegen_flags: <defaults>
</compile_context>

<pallas_src>
import functools

import jax
import jax.numpy as jnp
from jax import lax
from jax.experimental import pallas as pl
from jax.experimental.pallas import tpu as pltpu


# ----------------------------------------------------------------------------
# Pallas kernel: one whole image of the fused Bottleneck per grid step.
# ----------------------------------------------------------------------------
def bottleneck_kernel(x_ref, w1_ref, w2_ref, w3_ref,
                      b1_ref, b2_ref, b3_ref, o_ref, h1pad_ref):
    # x_ref     : (1, H, W, Cin)  bf16  one image (also the residual)
    # w1_ref    : (Cin, P)        bf16  conv1 1x1, bn1 scale folded in
    # w2_ref    : (3, 3P, P)      bf16  conv2 3x3, (kw, cin) merged, bn2 scale folded
    # w3_ref    : (P, Cout)       bf16  conv3 1x1, bn3 scale folded in
    # b*_ref    : (1, C)          f32   folded BN shifts
    # o_ref     : (1, H, W, Cout) bf16
    # h1pad_ref : (2G + (H+2)W, P) f32  zero-padded relu(conv1) slab (scratch)
    H, W, Cin = x_ref.shape[1], x_ref.shape[2], x_ref.shape[3]
    P = w1_ref.shape[1]
    Cout = w3_ref.shape[1]
    Ro = H * W               # flattened output rows (h*W + w)
    R2 = (H + 2) * W         # rows including conv2's one-row zero padding
    G = (h1pad_ref.shape[0] - R2) // 2   # guard rows at each end of the scratch
    ZPAD = G + W                          # zero region at each end (guard + pad row)

    # ---- conv1 (1x1) + bn1 shift + relu -------------------------------------
    x2d = x_ref[0].reshape(Ro, Cin)                                   # bf16
    h1 = jnp.dot(x2d, w1_ref[...], preferred_element_type=jnp.float32)
    h1 = jnp.maximum(h1 + b1_ref[...], 0.0)                           # (Ro, P) f32

    # Write into the zero-padded slab: guards + conv2's H zero padding are the
    # zeroed ends; the body sits at rows [ZPAD, ZPAD + Ro).
    h1pad_ref[pl.ds(0, ZPAD), :] = jnp.zeros((ZPAD, P), jnp.float32)
    h1pad_ref[pl.ds(ZPAD + Ro, ZPAD), :] = jnp.zeros((ZPAD, P), jnp.float32)
    h1pad_ref[pl.ds(ZPAD, Ro), :] = h1

    # ---- conv2 (3x3, pad 1) + bn2 shift + relu ------------------------------
    # kw = -1 / 0 / +1 variants via static window loads of the padded slab
    # (row padding already handles kh; the wcol mask supplies conv2's W padding
    #  for positions that leak across an image-row boundary).
    hc = h1pad_ref[pl.ds(G, R2), :]                                   # h1[..,  w ]
    hm = h1pad_ref[pl.ds(G - 1, R2), :]                               # h1[.., w-1]
    hp = h1pad_ref[pl.ds(G + 1, R2), :]                               # h1[.., w+1]
    wcol = lax.broadcasted_iota(jnp.int32, (R2, 1), 0) % W
    hm = jnp.where(wcol == 0, 0.0, hm)
    hp = jnp.where(wcol == W - 1, 0.0, hp)

    # Single (R2, 3P) bf16 slab; channel order [w-1, w, w+1] matches w2_ref's
    # merged (kw, cin) axis.
    slab = jnp.concatenate([hm.astype(jnp.bfloat16),
                            hc.astype(jnp.bfloat16),
                            hp.astype(jnp.bfloat16)], axis=-1)        # (R2, 3P)

    # 3 matmuls with K = 3P; per-kh operands are aligned leading-dim slices.
    acc = None
    for kh in range(3):
        op = slab[kh * W: kh * W + Ro]                                # (Ro, 3P)
        part = jnp.dot(op, w2_ref[kh], preferred_element_type=jnp.float32)
        acc = part if kh == 0 else acc + part
    h2 = jnp.maximum(acc + b2_ref[...], 0.0).astype(jnp.bfloat16)     # (Ro, P)

    # ---- conv3 (1x1) + bn3 shift + residual + relu --------------------------
    h3 = jnp.dot(h2, w3_ref[...], preferred_element_type=jnp.float32)
    h3 = h3 + b3_ref[...]
    res = x2d.astype(jnp.float32)          # re-read residual; Cin == Cout
    out = jnp.maximum(h3 + res, 0.0)
    o_ref[0] = out.reshape(H, W, Cout).astype(o_ref.dtype)


# ----------------------------------------------------------------------------
# Wrapper: BN folding + pallas_call plumbing.
# ----------------------------------------------------------------------------
def fold_bn(gamma, beta, mean, var, eps=1e-5):
    scale = gamma * lax.rsqrt(var + eps)
    shift = beta - mean * scale
    return scale, shift


@jax.jit
def bottleneck_forward(x_nhwc, w1, w2_hwio, w3, bn1, bn2, bn3):
    N, H, W, Cin = x_nhwc.shape
    P = w1.shape[1]
    Cout = w3.shape[1]
    if Cin != Cout:
        raise ValueError("residual path requires inplanes == planes*4 "
                         "(stride=1, downsample=None scope)")

    s1, b1 = fold_bn(*bn1)
    s2, b2 = fold_bn(*bn2)
    s3, b3 = fold_bn(*bn3)

    # Fold BN scales into the conv weights; keep shifts as (1, C) f32.
    w1f = (w1 * s1[None, :]).astype(jnp.bfloat16)                      # (Cin, P)
    w2f = (w2_hwio * s2[None, None, None, :]).reshape(3, 3 * P, P)     # (3, 3P, P)
    w2f = w2f.astype(jnp.bfloat16)
    w3f = (w3 * s3[None, :]).astype(jnp.bfloat16)                      # (P, Cout)
    b1r, b2r, b3r = b1[None, :], b2[None, :], b3[None, :]

    xb = x_nhwc.astype(jnp.bfloat16)

    # Zero-padded relu(conv1) scratch: guard rows (for the +/-1 kw window
    # loads) + one padding row of W above/below the H*W body.
    G = 16
    scratch_rows = 2 * G + (H + 2) * W

    rep = lambda s: pl.BlockSpec(s, lambda n: (0,) * len(s))

    return pl.pallas_call(
        bottleneck_kernel,
        out_shape=jax.ShapeDtypeStruct((N, H, W, Cout), jnp.bfloat16),
        grid_spec=pltpu.PrefetchScalarGridSpec(
            num_scalar_prefetch=0,
            grid=(N,),
            in_specs=[
                pl.BlockSpec((1, H, W, Cin), lambda n: (n, 0, 0, 0)),
                rep(w1f.shape), rep(w2f.shape), rep(w3f.shape),
                rep(b1r.shape), rep(b2r.shape), rep(b3r.shape),
            ],
            out_specs=pl.BlockSpec((1, H, W, Cout), lambda n: (n, 0, 0, 0)),
            scratch_shapes=[pltpu.VMEM((scratch_rows, P), jnp.float32)],
        ),
        compiler_params=pltpu.CompilerParams(
            dimension_semantics=("parallel",),
            vmem_limit_bytes=48 * 1024 * 1024),
    )(xb, w1f, w2f, w3f, b1r, b2r, b3r)


# ----------------------------------------------------------------------------
# Pure-JAX f32 reference (NHWC, PyTorch semantics) for verification.
# ----------------------------------------------------------------------------
def reference_forward(x_nhwc, w1, w2_hwio, w3, bn1, bn2, bn3, eps=1e-5):
    dn = ("NHWC", "HWIO", "NHWC")

    def bn(h, p):
        g, b, m, v = p
        return (h - m) * (g / jnp.sqrt(v + eps)) + b

    h = lax.conv_general_dilated(x_nhwc, w1[None, None], (1, 1), "VALID",
                                 dimension_numbers=dn)
    h = jnp.maximum(bn(h, bn1), 0.0)
    h = lax.conv_general_dilated(h, w2_hwio, (1, 1), ((1, 1), (1, 1)),
                                 dimension_numbers=dn)
    h = jnp.maximum(bn(h, bn2), 0.0)
    h = lax.conv_general_dilated(h, w3[None, None], (1, 1), "VALID",
                                 dimension_numbers=dn)
    h = bn(h, bn3)
    return jnp.maximum(h + x_nhwc, 0.0)


# ----------------------------------------------------------------------------
# Deterministic parameter construction + run.
# ----------------------------------------------------------------------------
if __name__ == "__main__":
    import numpy as np

    key = jax.random.PRNGKey(0)
    N, H, W = 2, 16, 16
    planes = 32
    inplanes = planes * 4          # expansion = 4, no downsample needed
    Cout = planes * 4              # => Cin == Cout == 128 (lane-dense output)

    ks = jax.random.split(key, 8)

    # Input in PyTorch NCHW convention, transposed to NHWC for the kernel.
    x_nchw = jax.random.normal(ks[0], (N, inplanes, H, W), jnp.float32)
    x_nhwc = jnp.transpose(x_nchw, (0, 2, 3, 1))

    # Conv weights, init like the PyTorch module: N(0, sqrt(2 / (k*k*out_ch))).
    w1 = jax.random.normal(ks[1], (inplanes, planes), jnp.float32) * np.sqrt(2.0 / (1 * 1 * planes))
    w2 = jax.random.normal(ks[2], (3, 3, planes, planes), jnp.float32) * np.sqrt(2.0 / (3 * 3 * planes))
    w3 = jax.random.normal(ks[3], (planes, Cout), jnp.float32) * np.sqrt(2.0 / (1 * 1 * Cout))

    def make_bn(k, c):
        k1, k2, k3, k4 = jax.random.split(k, 4)
        gamma = 1.0 + 0.1 * jax.random.normal(k1, (c,), jnp.float32)
        beta = 0.1 * jax.random.normal(k2, (c,), jnp.float32)
        mean = 0.1 * jax.random.normal(k3, (c,), jnp.float32)
        var = jax.random.uniform(k4, (c,), jnp.float32, minval=0.5, maxval=1.5)
        return (gamma, beta, mean, var)

    bn1 = make_bn(ks[4], planes)
    bn2 = make_bn(ks[5], planes)
    bn3 = make_bn(ks[6], Cout)

    out = bottleneck_forward(x_nhwc, w1, w2, w3, bn1, bn2, bn3)
    out = jax.block_until_ready(out)

    ref = reference_forward(x_nhwc, w1, w2, w3, bn1, bn2, bn3)
    ref = jax.block_until_ready(ref)

    assert out.shape == (N, H, W, Cout), out.shape
    # bf16 inputs/outputs (MXU operands) vs f32 reference => loose tolerance.
    out_f32 = np.asarray(out.astype(jnp.float32))
    np.testing.assert_allclose(out_f32, np.asarray(ref), rtol=5e-2, atol=1e-1)
    print("KERNEL_OK")
</pallas_src>

<mosaic_0001>
module attributes {stable_mosaic.version = 11 : i64} {
  func.func @bottleneck_kernel(%arg0: i32, %arg1: memref<1x16x16x128xbf16, #tpu.memory_space<vmem>>, %arg2: memref<128x32xbf16, #tpu.memory_space<vmem>>, %arg3: memref<3x96x32xbf16, #tpu.memory_space<vmem>>, %arg4: memref<32x128xbf16, #tpu.memory_space<vmem>>, %arg5: memref<1x32xf32, #tpu.memory_space<vmem>>, %arg6: memref<1x32xf32, #tpu.memory_space<vmem>>, %arg7: memref<1x128xf32, #tpu.memory_space<vmem>>, %arg8: memref<1x16x16x128xbf16, #tpu.memory_space<vmem>>, %arg9: memref<320x32xf32, #tpu.memory_space<vmem>>) attributes {dimension_semantics = [#tpu.dimension_semantics<parallel>], iteration_bounds = array<i64: 2>, scalar_prefetch = 0 : i64, scratch_operands = 1 : i64, tpu.core_type = #tpu.core_type<tc>, window_params = [{transform_indices = @transform_0, window_bounds = array<i64: 1, 16, 16, 128>}, {pipeline_mode = #tpu.pipeline_mode<synchronous>, transform_indices = @transform_1, window_bounds = array<i64: 128, 32>}, {pipeline_mode = #tpu.pipeline_mode<synchronous>, transform_indices = @transform_2, window_bounds = array<i64: 3, 96, 32>}, {pipeline_mode = #tpu.pipeline_mode<synchronous>, transform_indices = @transform_3, window_bounds = array<i64: 32, 128>}, {pipeline_mode = #tpu.pipeline_mode<synchronous>, transform_indices = @transform_4, window_bounds = array<i64: 1, 32>}, {pipeline_mode = #tpu.pipeline_mode<synchronous>, transform_indices = @transform_5, window_bounds = array<i64: 1, 32>}, {pipeline_mode = #tpu.pipeline_mode<synchronous>, transform_indices = @transform_6, window_bounds = array<i64: 1, 128>}, {transform_indices = @transform_7, window_bounds = array<i64: 1, 16, 16, 128>}]} {
    %c0 = arith.constant 0 : index
    %c0_0 = arith.constant 0 : index
    %c0_1 = arith.constant 0 : index
    %c0_2 = arith.constant 0 : index
    %0 = vector.load %arg1[%c0, %c0_0, %c0_1, %c0_2] : memref<1x16x16x128xbf16, #tpu.memory_space<vmem>>, vector<1x16x16x128xbf16>
    %1 = vector.shape_cast %0 : vector<1x16x16x128xbf16> to vector<16x16x128xbf16>
    %2 = vector.shape_cast %1 : vector<16x16x128xbf16> to vector<256x128xbf16>
    %c0_3 = arith.constant 0 : index
    %c0_4 = arith.constant 0 : index
    %3 = vector.load %arg2[%c0_3, %c0_4] : memref<128x32xbf16, #tpu.memory_space<vmem>>, vector<128x32xbf16>
    %cst = arith.constant dense<0.000000e+00> : vector<256x32xf32>
    %4 = tpu.matmul %2, %3, %cst {dimension_numbers = #tpu.dot_dimension_numbers<[1], [0], [0], [1], [0, 0, 1, 1], [], []>} : vector<256x128xbf16>, vector<128x32xbf16>, vector<256x32xf32> -> vector<256x32xf32>
    %c0_5 = arith.constant 0 : index
    %c0_6 = arith.constant 0 : index
    %5 = vector.load %arg5[%c0_5, %c0_6] : memref<1x32xf32, #tpu.memory_space<vmem>>, vector<1x32xf32>
    %6 = vector.broadcast %5 : vector<1x32xf32> to vector<256x32xf32>
    %7 = arith.addf %4, %6 : vector<256x32xf32>
    %cst_7 = arith.constant 0.000000e+00 : f32
    %8 = vector.broadcast %cst_7 : f32 to vector<256x32xf32>
    %9 = arith.maximumf %7, %8 : vector<256x32xf32>
    %cst_8 = arith.constant 0.000000e+00 : f32
    %10 = vector.broadcast %cst_8 : f32 to vector<32x32xf32>
    %c0_9 = arith.constant 0 : index
    %c0_10 = arith.constant 0 : index
    %11 = vector.load %arg9[%c0_9, %c0_10] : memref<320x32xf32, #tpu.memory_space<vmem>>, vector<32x32xf32>
    tpu.vector_store %arg9[%c0_9, %c0_10], %10 {strides = array<i32>} : memref<320x32xf32, #tpu.memory_space<vmem>>, vector<32x32xf32>,
    %cst_11 = arith.constant 0.000000e+00 : f32
    %12 = vector.broadcast %cst_11 : f32 to vector<32x32xf32>
    %c288 = arith.constant 288 : index
    %c0_12 = arith.constant 0 : index
    %13 = vector.load %arg9[%c288, %c0_12] : memref<320x32xf32, #tpu.memory_space<vmem>>, vector<32x32xf32>
    tpu.vector_store %arg9[%c288, %c0_12], %12 {strides = array<i32>} : memref<320x32xf32, #tpu.memory_space<vmem>>, vector<32x32xf32>,
    %c32 = arith.constant 32 : index
    %c0_13 = arith.constant 0 : index
    %14 = vector.load %arg9[%c32, %c0_13] : memref<320x32xf32, #tpu.memory_space<vmem>>, vector<256x32xf32>
    tpu.vector_store %arg9[%c32, %c0_13], %9 {strides = array<i32>} : memref<320x32xf32, #tpu.memory_space<vmem>>, vector<256x32xf32>,
    %c16 = arith.constant 16 : index
    %c0_14 = arith.constant 0 : index
    %15 = vector.load %arg9[%c16, %c0_14] : memref<320x32xf32, #tpu.memory_space<vmem>>, vector<288x32xf32>
    %c15 = arith.constant 15 : index
    %c0_15 = arith.constant 0 : index
    %16 = vector.load %arg9[%c15, %c0_15] : memref<320x32xf32, #tpu.memory_space<vmem>>, vector<288x32xf32>
    %c17 = arith.constant 17 : index
    %c0_16 = arith.constant 0 : index
    %17 = vector.load %arg9[%c17, %c0_16] : memref<320x32xf32, #tpu.memory_space<vmem>>, vector<288x32xf32>
    %18 = tpu.iota {dimensions = array<i32: 0>} : vector<288x1xi32>
    %c16_i32 = arith.constant 16 : i32
    %c0_i32 = arith.constant 0 : i32
    %19 = arith.cmpi eq, %c16_i32, %c0_i32 : i32
    %c1_i32 = arith.constant 1 : i32
    %20 = arith.select %19, %c1_i32, %c16_i32 : i32
    %21 = vector.broadcast %20 : i32 to vector<288x1xi32>
    %22 = arith.remsi %18, %21 : vector<288x1xi32>
    %c0_i32_17 = arith.constant 0 : i32
    %23 = vector.broadcast %c0_i32_17 : i32 to vector<288x1xi32>
    %24 = arith.cmpi ne, %22, %23 : vector<288x1xi32>
    %c0_i32_18 = arith.constant 0 : i32
    %25 = vector.broadcast %c0_i32_18 : i32 to vector<288x1xi32>
    %26 = arith.cmpi slt, %22, %25 : vector<288x1xi32>
    %c0_i32_19 = arith.constant 0 : i32
    %27 = arith.cmpi slt, %20, %c0_i32_19 : i32
    %28 = vector.broadcast %27 : i1 to vector<288x1xi1>
    %29 = vector.broadcast %28 : vector<288x1xi1> to vector<288x1xi1>
    %30 = arith.xori %26, %29 : vector<288x1xi1>
    %31 = arith.andi %30, %24 : vector<288x1xi1>
    %32 = vector.broadcast %20 : i32 to vector<288x1xi32>
    %33 = arith.addi %22, %32 : vector<288x1xi32>
    %34 = arith.select %31, %33, %22 : vector<288x1xi1>, vector<288x1xi32>
    %c0_i32_20 = arith.constant 0 : i32
    %35 = vector.broadcast %c0_i32_20 : i32 to vector<288x1xi32>
    %36 = arith.cmpi eq, %34, %35 : vector<288x1xi32>
    %cst_21 = arith.constant 0.000000e+00 : f32
    %37 = vector.shape_cast %36 : vector<288x1xi1> to vector<288x1xi1>
    %38 = vector.broadcast %37 : vector<288x1xi1> to vector<288x32xi1>
    %39 = vector.broadcast %cst_21 : f32 to vector<288x32xf32>
    %40 = arith.select %38, %39, %16 : vector<288x32xi1>, vector<288x32xf32>
    %c15_i32 = arith.constant 15 : i32
    %41 = vector.broadcast %c15_i32 : i32 to vector<288x1xi32>
    %42 = arith.cmpi eq, %34, %41 : vector<288x1xi32>
    %cst_22 = arith.constant 0.000000e+00 : f32
    %43 = vector.shape_cast %42 : vector<288x1xi1> to vector<288x1xi1>
    %44 = vector.broadcast %43 : vector<288x1xi1> to vector<288x32xi1>
    %45 = vector.broadcast %cst_22 : f32 to vector<288x32xf32>
    %46 = arith.select %44, %45, %17 : vector<288x32xi1>, vector<288x32xf32>
    %47 = arith.truncf %40 : vector<288x32xf32> to vector<288x32xbf16>
    %48 = arith.truncf %15 : vector<288x32xf32> to vector<288x32xbf16>
    %49 = arith.truncf %46 : vector<288x32xf32> to vector<288x32xbf16>
    %50 = tpu.concatenate %47, %48, %49 in 1 : vector<288x32xbf16>, vector<288x32xbf16>, vector<288x32xbf16> -> vector<288x96xbf16>
    %51 = vector.extract_strided_slice %50 {offsets = [0, 0], sizes = [256, 96], strides = [1, 1]} : vector<288x96xbf16> to vector<256x96xbf16>
    %c0_23 = arith.constant 0 : index
    %c0_24 = arith.constant 0 : index
    %c0_25 = arith.constant 0 : index
    %52 = vector.load %arg3[%c0_23, %c0_24, %c0_25] : memref<3x96x32xbf16, #tpu.memory_space<vmem>>, vector<1x96x32xbf16>
    %53 = vector.shape_cast %52 : vector<1x96x32xbf16> to vector<96x32xbf16>
    %cst_26 = arith.constant dense<0.000000e+00> : vector<256x32xf32>
    %54 = tpu.matmul %51, %53, %cst_26 {dimension_numbers = #tpu.dot_dimension_numbers<[1], [0], [0], [1], [0, 0, 1, 1], [], []>} : vector<256x96xbf16>, vector<96x32xbf16>, vector<256x32xf32> -> vector<256x32xf32>
    %55 = vector.extract_strided_slice %50 {offsets = [16, 0], sizes = [256, 96], strides = [1, 1]} : vector<288x96xbf16> to vector<256x96xbf16>
    %c1 = arith.constant 1 : index
    %c0_27 = arith.constant 0 : index
    %c0_28 = arith.constant 0 : index
    %56 = vector.load %arg3[%c1, %c0_27, %c0_28] : memref<3x96x32xbf16, #tpu.memory_space<vmem>>, vector<1x96x32xbf16>
    %57 = vector.shape_cast %56 : vector<1x96x32xbf16> to vector<96x32xbf16>
    %cst_29 = arith.constant dense<0.000000e+00> : vector<256x32xf32>
    %58 = tpu.matmul %55, %57, %cst_29 {dimension_numbers = #tpu.dot_dimension_numbers<[1], [0], [0], [1], [0, 0, 1, 1], [], []>} : vector<256x96xbf16>, vector<96x32xbf16>, vector<256x32xf32> -> vector<256x32xf32>
    %59 = arith.addf %54, %58 : vector<256x32xf32>
    %60 = vector.extract_strided_slice %50 {offsets = [32, 0], sizes = [256, 96], strides = [1, 1]} : vector<288x96xbf16> to vector<256x96xbf16>
    %c2 = arith.constant 2 : index
    %c0_30 = arith.constant 0 : index
    %c0_31 = arith.constant 0 : index
    %61 = vector.load %arg3[%c2, %c0_30, %c0_31] : memref<3x96x32xbf16, #tpu.memory_space<vmem>>, vector<1x96x32xbf16>
    %62 = vector.shape_cast %61 : vector<1x96x32xbf16> to vector<96x32xbf16>
    %cst_32 = arith.constant dense<0.000000e+00> : vector<256x32xf32>
    %63 = tpu.matmul %60, %62, %cst_32 {dimension_numbers = #tpu.dot_dimension_numbers<[1], [0], [0], [1], [0, 0, 1, 1], [], []>} : vector<256x96xbf16>, vector<96x32xbf16>, vector<256x32xf32> -> vector<256x32xf32>
    %64 = arith.addf %59, %63 : vector<256x32xf32>
    %c0_33 = arith.constant 0 : index
    %c0_34 = arith.constant 0 : index
    %65 = vector.load %arg6[%c0_33, %c0_34] : memref<1x32xf32, #tpu.memory_space<vmem>>, vector<1x32xf32>
    %66 = vector.broadcast %65 : vector<1x32xf32> to vector<256x32xf32>
    %67 = arith.addf %64, %66 : vector<256x32xf32>
    %cst_35 = arith.constant 0.000000e+00 : f32
    %68 = vector.broadcast %cst_35 : f32 to vector<256x32xf32>
    %69 = arith.maximumf %67, %68 : vector<256x32xf32>
    %70 = arith.truncf %69 : vector<256x32xf32> to vector<256x32xbf16>
    %c0_36 = arith.constant 0 : index
    %c0_37 = arith.constant 0 : index
    %71 = vector.load %arg4[%c0_36, %c0_37] : memref<32x128xbf16, #tpu.memory_space<vmem>>, vector<32x128xbf16>
    %cst_38 = arith.constant dense<0.000000e+00> : vector<256x128xf32>
    %72 = tpu.matmul %70, %71, %cst_38 {dimension_numbers = #tpu.dot_dimension_numbers<[1], [0], [0], [1], [0, 0, 1, 1], [], []>} : vector<256x32xbf16>, vector<32x128xbf16>, vector<256x128xf32> -> vector<256x128xf32>
    %c0_39 = arith.constant 0 : index
    %c0_40 = arith.constant 0 : index
    %73 = vector.load %arg7[%c0_39, %c0_40] : memref<1x128xf32, #tpu.memory_space<vmem>>, vector<1x128xf32>
    %74 = vector.broadcast %73 : vector<1x128xf32> to vector<256x128xf32>
    %75 = arith.addf %72, %74 : vector<256x128xf32>
    %76 = arith.extf %2 : vector<256x128xbf16> to vector<256x128xf32>
    %77 = arith.addf %75, %76 : vector<256x128xf32>
    %cst_41 = arith.constant 0.000000e+00 : f32
    %78 = vector.broadcast %cst_41 : f32 to vector<256x128xf32>
    %79 = arith.maximumf %77, %78 : vector<256x128xf32>
    %80 = vector.shape_cast %79 : vector<256x128xf32> to vector<16x16x128xf32>
    %81 = arith.truncf %80 : vector<16x16x128xf32> to vector<16x16x128xbf16>
    %c0_42 = arith.constant 0 : index
    %c0_43 = arith.constant 0 : index
    %c0_44 = arith.constant 0 : index
    %c0_45 = arith.constant 0 : index
    %82 = vector.load %arg8[%c0_42, %c0_43, %c0_44, %c0_45] : memref<1x16x16x128xbf16, #tpu.memory_space<vmem>>, vector<1x16x16x128xbf16>
    %83 = vector.shape_cast %82 : vector<1x16x16x128xbf16> to vector<16x16x128xbf16>
    %84 = vector.shape_cast %81 : vector<16x16x128xbf16> to vector<1x16x16x128xbf16>
    tpu.vector_store %arg8[%c0_42, %c0_43, %c0_44, %c0_45], %84 {strides = array<i32>} : memref<1x16x16x128xbf16, #tpu.memory_space<vmem>>, vector<1x16x16x128xbf16>,
    return
  }
  func.func @transform_0(%arg0: i32) -> (i32, i32, i32, i32) {
    %c0_i32 = arith.constant 0 : i32
    %c0_i32_0 = arith.constant 0 : i32
    %c0_i32_1 = arith.constant 0 : i32
    %c0_i32_2 = arith.constant 0 : i32
    return %arg0, %c0_i32, %c0_i32_0, %c0_i32_1 : i32, i32, i32, i32
  }
  func.func @transform_1(%arg0: i32) -> (i32, i32) {
    %c0_i32 = arith.constant 0 : i32
    %c0_i32_0 = arith.constant 0 : i32
    %c0_i32_1 = arith.constant 0 : i32
    return %c0_i32, %c0_i32_0 : i32, i32
  }
  func.func @transform_2(%arg0: i32) -> (i32, i32, i32) {
    %c0_i32 = arith.constant 0 : i32
    %c0_i32_0 = arith.constant 0 : i32
    %c0_i32_1 = arith.constant 0 : i32
    %c0_i32_2 = arith.constant 0 : i32
    return %c0_i32, %c0_i32_0, %c0_i32_1 : i32, i32, i32
  }
  func.func @transform_3(%arg0: i32) -> (i32, i32) {
    %c0_i32 = arith.constant 0 : i32
    %c0_i32_0 = arith.constant 0 : i32
    %c0_i32_1 = arith.constant 0 : i32
    return %c0_i32, %c0_i32_0 : i32, i32
  }
  func.func @transform_4(%arg0: i32) -> (i32, i32) {
    %c0_i32 = arith.constant 0 : i32
    %c0_i32_0 = arith.constant 0 : i32
    %c0_i32_1 = arith.constant 0 : i32
    return %c0_i32, %c0_i32_0 : i32, i32
  }
  func.func @transform_5(%arg0: i32) -> (i32, i32) {
    %c0_i32 = arith.constant 0 : i32
    %c0_i32_0 = arith.constant 0 : i32
    %c0_i32_1 = arith.constant 0 : i32
    return %c0_i32, %c0_i32_0 : i32, i32
  }
  func.func @transform_6(%arg0: i32) -> (i32, i32) {
    %c0_i32 = arith.constant 0 : i32
    %c0_i32_0 = arith.constant 0 : i32
    %c0_i32_1 = arith.constant 0 : i32
    return %c0_i32, %c0_i32_0 : i32, i32
  }
  func.func @transform_7(%arg0: i32) -> (i32, i32, i32, i32) {
    %c0_i32 = arith.constant 0 : i32
    %c0_i32_0 = arith.constant 0 : i32
    %c0_i32_1 = arith.constant 0 : i32
    %c0_i32_2 = arith.constant 0 : i32
    return %arg0, %c0_i32, %c0_i32_0, %c0_i32_1 : i32, i32, i32, i32
  }
}

</mosaic_0001>

<llo_original>
// kernel: bottleneck_forward.1
$region0: #{bottleneck_forward.1}
  #allocation0 [shape = 'u32[]', space=smem, size = 0x4, offset = 0x4, fixed_abs, tag = 'smem constant byte address 0x4 - core index']
  #allocation1 [shape = 'u32[144,128]{1,0:T(1,128)}', space=vmem, size = 0x12000, scoped, tag = 'internal scratch']
  #allocation2 [shape = 'f32[320,32]{1,0:T(8,128)}', space=vmem, size = 0x28000, scoped, tag = 'scratch operand']
  %s0 = inlined_call_operand.vmem [shape: bf16[2,16,16,128], index: 0, kind: input, shape index: {}]
  %s1 = inlined_call_operand.vmem [shape: bf16[128,32], index: 1, kind: input, shape index: {}]
  %s2 = inlined_call_operand.vmem [shape: bf16[3,96,32], index: 2, kind: input, shape index: {}]
  %s3 = inlined_call_operand.vmem [shape: bf16[32,128], index: 3, kind: input, shape index: {}]
  %s4 = inlined_call_operand.vmem [shape: f32[1,32], index: 4, kind: input, shape index: {}]
  %s5 = inlined_call_operand.vmem [shape: f32[1,32], index: 5, kind: input, shape index: {}]
  %s6 = inlined_call_operand.vmem [shape: f32[1,128], index: 6, kind: input, shape index: {}]
  %s7 = inlined_call_operand.hbm [shape: bf16[2,16,16,128], index: 7, kind: output, shape index: {}]
  %s8 = sld [smem:[#allocation0]]
  $region61: #{bottleneck_forward.1} parent=0
    _
  %s10 = ssub.s32 1, %s8
  %s11 = scalar_select 0, %s10, %s8
  $region1: #{bottleneck_forward.1} parent=0
    #allocation3 [shape = 'u8[131072]{0}', space=vmem, size = 0x20000, scoped, tag = 'output window, operand 0']
    #allocation4 [shape = 's32[2]{0}', space=sflag, size = 0x8, scoped, tag = 'scoped memory for bottleneck_forward.1']
    %12 = vsyncpa [#allocation4], 0
    %s13 = scalar_lea.sflag [#allocation4], 1
    %14 = vsyncpa %s13, 0
    loop: start=0, step=1, limit=4
    $region2: #{bottleneck_forward.1} parent=1 // loop_pre_header
      _
    $region3: #{bottleneck_forward.1} parent=1 // loop_header
      %s16 = sphi 0, %s20
      %p17 = scmp.ge.s32.totalorder %s16, 4
      %s26 = sphi 0, %s28
      %s29 = sphi 0, %s26
      %s30 = sphi 0, %s29
      %s46 = sphi 0, %s30
      %s50 = sphi 0, %s50
      %s52 = sphi 0, %s50
      %s53 = sphi 0, %s52
      %s67 = sphi 0, %s53
      %s71 = sphi 0, %s71
      %s73 = sphi 0, %s71
      %s74 = sphi 0, %s73
      %s88 = sphi 0, %s74
      %s92 = sphi 0, %s92
      %s94 = sphi 0, %s92
      %s95 = sphi 0, %s94
      %s109 = sphi 0, %s95
      %s113 = sphi 0, %s113
      %s115 = sphi 0, %s113
      %s116 = sphi 0, %s115
      %s130 = sphi 0, %s116
      %s134 = sphi 0, %s134
      %s136 = sphi 0, %s134
      %s137 = sphi 0, %s136
      %s151 = sphi 0, %s137
      %s155 = sphi 0, %s155
      %s157 = sphi 0, %s155
      %s158 = sphi 0, %s157
      %s172 = sphi 0, %s158
      %s178 = sphi 0, %s180
      %s181 = sphi 0, %s178
      %s182 = sphi 0, %s181
      %s198 = sphi 0, %s182
    $region4: #{bottleneck_forward.1} parent=1 // loop_header_branch
      %19 = sbr.rel (%p17) target = $region8
    $region5: #{bottleneck_forward.1} parent=1 // loop_body
      %s21 = ssub.s32 %s16, 1
      %s22 = ssub.s32 %s16, 2
      %s23 = sadd.s32 %s16, 1
      %s24 = ssub.s32 %s16, %s23
      %p25 = scmp.eq.s32.totalorder %s24, 0
      %s27 = sadd.s32 %s26, 1
      %s28 = scalar_select %p25, %s26, %s27
      %p31 = pneg %p25
      %p32 = scmp.eq.s32.totalorder %s16, 1
      %p33 = por %p31, %p32
      %p34 = scmp.ne.s32.totalorder %s26, %s29
      %p35 = scmp.eq.s32.totalorder %s16, 0
      %p36 = por %p34, %p35
      %p37 = scmp.ne.s32.totalorder %s26, %s29
      %p38 = scmp.eq.s32.totalorder %s21, 1
      %p39 = por %p37, %p38
      %p40 = scmp.ne.s32.totalorder %s29, %s30
      %p41 = scmp.eq.s32.totalorder %s21, 0
      %p42 = por %p40, %p41
      %p43 = scmp.ne.s32.totalorder %s29, %s30
      %p44 = scmp.eq.s32.totalorder %s22, 1
      %p45 = por %p43, %p44
      %p47 = scmp.ne.s32.totalorder %s30, %s46
      %p48 = scmp.eq.s32.totalorder %s22, 0
      %p49 = por %p47, %p48
      %s51 = sadd.s32 %s50, 1
      %p54 = scmp.eq.s32.totalorder %s16, 1
      %p55 = scmp.ne.s32.totalorder %s50, %s52
      %p56 = scmp.eq.s32.totalorder %s16, 0
      %p57 = por %p55, %p56
      %p58 = scmp.ne.s32.totalorder %s50, %s52
      %p59 = scmp.eq.s32.totalorder %s21, 1
      %p60 = por %p58, %p59
      %p61 = scmp.ne.s32.totalorder %s52, %s53
      %p62 = scmp.eq.s32.totalorder %s21, 0
      %p63 = por %p61, %p62
      %p64 = scmp.ne.s32.totalorder %s52, %s53
      %p65 = scmp.eq.s32.totalorder %s22, 1
      %p66 = por %p64, %p65
      %p68 = scmp.ne.s32.totalorder %s53, %s67
      %p69 = scmp.eq.s32.totalorder %s22, 0
      %p70 = por %p68, %p69
      %s72 = sadd.s32 %s71, 1
      %p75 = scmp.eq.s32.totalorder %s16, 1
      %p76 = scmp.ne.s32.totalorder %s71, %s73
      %p77 = scmp.eq.s32.totalorder %s16, 0
      %p78 = por %p76, %p77
      %p79 = scmp.ne.s32.totalorder %s71, %s73
      %p80 = scmp.eq.s32.totalorder %s21, 1
      %p81 = por %p79, %p80
      %p82 = scmp.ne.s32.totalorder %s73, %s74
      %p83 = scmp.eq.s32.totalorder %s21, 0
      %p84 = por %p82, %p83
      %p85 = scmp.ne.s32.totalorder %s73, %s74
      %p86 = scmp.eq.s32.totalorder %s22, 1
      %p87 = por %p85, %p86
      %p89 = scmp.ne.s32.totalorder %s74, %s88
      %p90 = scmp.eq.s32.totalorder %s22, 0
      %p91 = por %p89, %p90
      %s93 = sadd.s32 %s92, 1
      %p96 = scmp.eq.s32.totalorder %s16, 1
      %p97 = scmp.ne.s32.totalorder %s92, %s94
      %p98 = scmp.eq.s32.totalorder %s16, 0
      %p99 = por %p97, %p98
      %p100 = scmp.ne.s32.totalorder %s92, %s94
      %p101 = scmp.eq.s32.totalorder %s21, 1
      %p102 = por %p100, %p101
      %p103 = scmp.ne.s32.totalorder %s94, %s95
      %p104 = scmp.eq.s32.totalorder %s21, 0
      %p105 = por %p103, %p104
      %p106 = scmp.ne.s32.totalorder %s94, %s95
      %p107 = scmp.eq.s32.totalorder %s22, 1
      %p108 = por %p106, %p107
      %p110 = scmp.ne.s32.totalorder %s95, %s109
      %p111 = scmp.eq.s32.totalorder %s22, 0
      %p112 = por %p110, %p111
      %s114 = sadd.s32 %s113, 1
      %p117 = scmp.eq.s32.totalorder %s16, 1
      %p118 = scmp.ne.s32.totalorder %s113, %s115
      %p119 = scmp.eq.s32.totalorder %s16, 0
      %p120 = por %p118, %p119
      %p121 = scmp.ne.s32.totalorder %s113, %s115
      %p122 = scmp.eq.s32.totalorder %s21, 1
      %p123 = por %p121, %p122
      %p124 = scmp.ne.s32.totalorder %s115, %s116
      %p125 = scmp.eq.s32.totalorder %s21, 0
      %p126 = por %p124, %p125
      %p127 = scmp.ne.s32.totalorder %s115, %s116
      %p128 = scmp.eq.s32.totalorder %s22, 1
      %p129 = por %p127, %p128
      %p131 = scmp.ne.s32.totalorder %s116, %s130
      %p132 = scmp.eq.s32.totalorder %s22, 0
      %p133 = por %p131, %p132
      %s135 = sadd.s32 %s134, 1
      %p138 = scmp.eq.s32.totalorder %s16, 1
      %p139 = scmp.ne.s32.totalorder %s134, %s136
      %p140 = scmp.eq.s32.totalorder %s16, 0
      %p141 = por %p139, %p140
      %p142 = scmp.ne.s32.totalorder %s134, %s136
      %p143 = scmp.eq.s32.totalorder %s21, 1
      %p144 = por %p142, %p143
      %p145 = scmp.ne.s32.totalorder %s136, %s137
      %p146 = scmp.eq.s32.totalorder %s21, 0
      %p147 = por %p145, %p146
      %p148 = scmp.ne.s32.totalorder %s136, %s137
      %p149 = scmp.eq.s32.totalorder %s22, 1
      %p150 = por %p148, %p149
      %p152 = scmp.ne.s32.totalorder %s137, %s151
      %p153 = scmp.eq.s32.totalorder %s22, 0
      %p154 = por %p152, %p153
      %s156 = sadd.s32 %s155, 1
      %p159 = scmp.eq.s32.totalorder %s16, 1
      %p160 = scmp.ne.s32.totalorder %s155, %s157
      %p161 = scmp.eq.s32.totalorder %s16, 0
      %p162 = por %p160, %p161
      %p163 = scmp.ne.s32.totalorder %s155, %s157
      %p164 = scmp.eq.s32.totalorder %s21, 1
      %p165 = por %p163, %p164
      %p166 = scmp.ne.s32.totalorder %s157, %s158
      %p167 = scmp.eq.s32.totalorder %s21, 0
      %p168 = por %p166, %p167
      %p169 = scmp.ne.s32.totalorder %s157, %s158
      %p170 = scmp.eq.s32.totalorder %s22, 1
      %p171 = por %p169, %p170
      %p173 = scmp.ne.s32.totalorder %s158, %s172
      %p174 = scmp.eq.s32.totalorder %s22, 0
      %p175 = por %p173, %p174
      %s176 = ssub.s32 %s16, %s23
      %p177 = scmp.eq.s32.totalorder %s176, 0
      %s179 = sadd.s32 %s178, 1
      %s180 = scalar_select %p177, %s178, %s179
      %p183 = pneg %p177
      %p184 = scmp.eq.s32.totalorder %s16, 1
      %p185 = por %p183, %p184
      %p186 = scmp.ne.s32.totalorder %s178, %s181
      %p187 = scmp.eq.s32.totalorder %s16, 0
      %p188 = por %p186, %p187
      %p189 = scmp.ne.s32.totalorder %s178, %s181
      %p190 = scmp.eq.s32.totalorder %s21, 1
      %p191 = por %p189, %p190
      %p192 = scmp.ne.s32.totalorder %s181, %s182
      %p193 = scmp.eq.s32.totalorder %s21, 0
      %p194 = por %p192, %p193
      %p195 = scmp.ne.s32.totalorder %s181, %s182
      %p196 = scmp.eq.s32.totalorder %s22, 1
      %p197 = por %p195, %p196
      %p199 = scmp.ne.s32.totalorder %s182, %s198
      %p200 = scmp.eq.s32.totalorder %s22, 0
      %p201 = por %p199, %p200
      %p202 = scmp.le.s32.totalorder 1, %s16
      %p203 = scmp.lt.s32.totalorder %s16, 3
      %p204 = pnand %p202, %p203
      %p205 = pneg %p204
      // Predicated region
      $region9: #{bottleneck_forward.1} parent=5 // pred_check
        _
      $region10: #{bottleneck_forward.1} parent=5 // pred_check_branch
        %207 = sbr.rel (%p204) target = $region12
      $region11: #{bottleneck_forward.1} parent=5 // pred_region
        %s208 = ssub.s32 %s16, 1
        // Predicated region
        $region13: #{bottleneck_forward.1} parent=11 // pred_check
          %p209 = pneg %p63
        $region14: #{bottleneck_forward.1} parent=11 // pred_check_branch
          %211 = sbr.rel (%p209) target = $region16
        $region15: #{bottleneck_forward.1} parent=11 // pred_region
          _
        $region16: #{bottleneck_forward.1} parent=11 // pred_fallthru
          _
        // Predicated region
        $region17: #{bottleneck_forward.1} parent=11 // pred_check
          %p212 = pneg %p84
        $region18: #{bottleneck_forward.1} parent=11 // pred_check_branch
          %214 = sbr.rel (%p212) target = $region20
        $region19: #{bottleneck_forward.1} parent=11 // pred_region
          _
        $region20: #{bottleneck_forward.1} parent=11 // pred_fallthru
          _
        // Predicated region
        $region21: #{bottleneck_forward.1} parent=11 // pred_check
          %p215 = pneg %p105
        $region22: #{bottleneck_forward.1} parent=11 // pred_check_branch
          %217 = sbr.rel (%p215) target = $region24
        $region23: #{bottleneck_forward.1} parent=11 // pred_region
          _
        $region24: #{bottleneck_forward.1} parent=11 // pred_fallthru
          _
        // Predicated region
        $region25: #{bottleneck_forward.1} parent=11 // pred_check
          %p218 = pneg %p126
        $region26: #{bottleneck_forward.1} parent=11 // pred_check_branch
          %220 = sbr.rel (%p218) target = $region28
        $region27: #{bottleneck_forward.1} parent=11 // pred_region
          _
        $region28: #{bottleneck_forward.1} parent=11 // pred_fallthru
          _
        // Predicated region
        $region29: #{bottleneck_forward.1} parent=11 // pred_check
          %p221 = pneg %p147
        $region30: #{bottleneck_forward.1} parent=11 // pred_check_branch
          %223 = sbr.rel (%p221) target = $region32
        $region31: #{bottleneck_forward.1} parent=11 // pred_region
          _
        $region32: #{bottleneck_forward.1} parent=11 // pred_fallthru
          _
        // Predicated region
        $region33: #{bottleneck_forward.1} parent=11 // pred_check
          %p224 = pneg %p168
        $region34: #{bottleneck_forward.1} parent=11 // pred_check_branch
          %226 = sbr.rel (%p224) target = $region36
        $region35: #{bottleneck_forward.1} parent=11 // pred_region
          _
        $region36: #{bottleneck_forward.1} parent=11 // pred_fallthru
          _
      $region12: #{bottleneck_forward.1} parent=5 // pred_fallthru
        _
      %p227 = scmp.lt.s32.totalorder %s16, 2
      // Predicated region
      $region37: #{bottleneck_forward.1} parent=5 // pred_check
        %p228 = pneg %p227
      $region38: #{bottleneck_forward.1} parent=5 // pred_check_branch
        %230 = sbr.rel (%p228) target = $region40
      $region39: #{bottleneck_forward.1} parent=5 // pred_region
        // Predicated region
        $region41: #{bottleneck_forward.1} parent=39 // pred_check
          %p231 = pneg %p36
        $region42: #{bottleneck_forward.1} parent=39 // pred_check_branch
          %233 = sbr.rel (%p231) target = $region44
        $region43: #{bottleneck_forward.1} parent=39 // pred_region
          %p234 = scmp.lt.s32.totalorder %s16, 1
          %s235 = scalar_select %p234, %s16, 1
          %s236 = smul.addr %s235, 32
          %s237 = smul.addr %s236, 4
          %s238 = scalar_lea.vmem %s0, %s237
        $region44: #{bottleneck_forward.1} parent=39 // pred_fallthru
          _
      $region40: #{bottleneck_forward.1} parent=5 // pred_fallthru
        _
      %p239 = scmp.le.s32.totalorder 1, %s16
      %p240 = scmp.lt.s32.totalorder %s16, 3
      %p241 = pnand %p239, %p240
      %p242 = pneg %p241
      // Predicated region
      $region45: #{bottleneck_forward.1} parent=5 // pred_check
        _
      $region46: #{bottleneck_forward.1} parent=5 // pred_check_branch
        %244 = sbr.rel (%p241) target = $region48
      $region47: #{bottleneck_forward.1} parent=5 // pred_region
        %s245 = ssub.s32 %s16, 1
        %p246 = scmp.lt.s32.totalorder %s21, 1
        %s247 = scalar_select %p246, %s21, 1
        %s248 = smul.addr %s247, 32
        %s249 = smul.addr %s248, 4
        %s250 = scalar_lea.vmem %s0, %s249
        %p251 = pneg %p42
        %p252 = pneg %p39
        %p253 = pneg %p63
        %p254 = pneg %p60
        %p255 = pneg %p84
        %p256 = pneg %p81
        %p257 = pneg %p105
        %p258 = pneg %p102
        %p259 = pneg %p126
        %p260 = pneg %p123
        %p261 = pneg %p147
        %p262 = pneg %p144
        %p263 = pneg %p168
        %p264 = pneg %p165
        %p265 = pneg %p194
        %p266 = pneg %p191
        %s267 = sand.u32 %s181, 1
        %s268 = scalar_lea.sflag [#allocation4], %s267
        %s269 = sand.u32 %s181, 1
        %s270 = smul.addr %s269, 128
        %s271 = scalar_lea.vmem [#allocation3], %s270
        %p272 = scmp.lt.s32.totalorder %s21, 1
        %s273 = scalar_select %p272, %s21, 1
        %s274 = smul.addr %s273, 32
        %s275 = smul.addr %s274, 4
        %s276 = scalar_lea.vmem %s0, %s275
        %v278 = vld [vmem:[%s276] sm:$0xf]
        %v279 = vld [vmem:[%s276 + $0x4] sm:$0xf]
        %v280 = vld [vmem:[%s276 + $0x8] sm:$0xf]
        %v281 = vld [vmem:[%s276 + $0xc] sm:$0xf]
        %v282 = vld [vmem:[%s276 + $0x10] sm:$0xf]
        %v283 = vld [vmem:[%s276 + $0x14] sm:$0xf]
        %v284 = vld [vmem:[%s276 + $0x18] sm:$0xf]
        %v285 = vld [vmem:[%s276 + $0x1c] sm:$0xf]
        %v286 = vld [vmem:[%s276 + $0x20] sm:$0xf]
        %v287 = vld [vmem:[%s276 + $0x24] sm:$0xf]
        %v288 = vld [vmem:[%s276 + $0x28] sm:$0xf]
        %v289 = vld [vmem:[%s276 + $0x2c] sm:$0xf]
        %v290 = vld [vmem:[%s276 + $0x30] sm:$0xf]
        %v291 = vld [vmem:[%s276 + $0x34] sm:$0xf]
        %v292 = vld [vmem:[%s276 + $0x38] sm:$0xf]
        %v293 = vld [vmem:[%s276 + $0x3c] sm:$0xf]
        %v294 = vld [vmem:[%s276 + $0x40] sm:$0xf]
        %v295 = vld [vmem:[%s276 + $0x44] sm:$0xf]
        %v296 = vld [vmem:[%s276 + $0x48] sm:$0xf]
        %v297 = vld [vmem:[%s276 + $0x4c] sm:$0xf]
        %v298 = vld [vmem:[%s276 + $0x50] sm:$0xf]
        %v299 = vld [vmem:[%s276 + $0x54] sm:$0xf]
        %v300 = vld [vmem:[%s276 + $0x58] sm:$0xf]
        %v301 = vld [vmem:[%s276 + $0x5c] sm:$0xf]
        %v302 = vld [vmem:[%s276 + $0x60] sm:$0xf]
        %v303 = vld [vmem:[%s276 + $0x64] sm:$0xf]
        %v304 = vld [vmem:[%s276 + $0x68] sm:$0xf]
        %v305 = vld [vmem:[%s276 + $0x6c] sm:$0xf]
        %v306 = vld [vmem:[%s276 + $0x70] sm:$0xf]
        %v307 = vld [vmem:[%s276 + $0x74] sm:$0xf]
        %v308 = vld [vmem:[%s276 + $0x78] sm:$0xf]
        %v309 = vld [vmem:[%s276 + $0x7c] sm:$0xf]
        %v310 = vld [vmem:[%s1] sm:$0xf]
        %v311 = vld [vmem:[%s1 + $0x4] sm:$0xf]
        %v312 = vld [vmem:[%s1 + $0x8] sm:$0xf]
        %v313 = vld [vmem:[%s1 + $0xc] sm:$0xf]
        %v314 = vld [vmem:[%s1 + $0x10] sm:$0xf]
        %v315 = vld [vmem:[%s1 + $0x14] sm:$0xf]
        %v316 = vld [vmem:[%s1 + $0x18] sm:$0xf]
        %v317 = vld [vmem:[%s1 + $0x1c] sm:$0xf]
        %v318 = vld [vmem:[%s1 + $0x20] sm:$0xf]
        %v319 = vld [vmem:[%s1 + $0x24] sm:$0xf]
        %v320 = vld [vmem:[%s1 + $0x28] sm:$0xf]
        %v321 = vld [vmem:[%s1 + $0x2c] sm:$0xf]
        %v322 = vld [vmem:[%s1 + $0x30] sm:$0xf]
        %v323 = vld [vmem:[%s1 + $0x34] sm:$0xf]
        %v324 = vld [vmem:[%s1 + $0x38] sm:$0xf]
        %v325 = vld [vmem:[%s1 + $0x3c] sm:$0xf]
        %v326 = vld [vmem:[%s4] sm:$0x1]
        %v328 = vlaneseq
        %v329 = vshrl.u32 %v328, 7
        %v330 = vsub.s32 0, %v329
        %v331 = vrot.slane %v326, %v330
        %v365 = vunpack.c.l.b16 %v278
        %v366 = vunpack.c.l.b16 %v279
        %v367 = vunpack.c.l.b16 %v280
        %v368 = vunpack.c.l.b16 %v281
        %v369 = vunpack.c.l.b16 %v282
        %v370 = vunpack.c.l.b16 %v283
        %v371 = vunpack.c.l.b16 %v284
        %v372 = vunpack.c.l.b16 %v285
        %v373 = vunpack.c.l.b16 %v286
        %v374 = vunpack.c.l.b16 %v287
        %v375 = vunpack.c.l.b16 %v288
        %v376 = vunpack.c.l.b16 %v289
        %v377 = vunpack.c.l.b16 %v290
        %v378 = vunpack.c.l.b16 %v291
        %v379 = vunpack.c.l.b16 %v292
        %v380 = vunpack.c.l.b16 %v293
        %v381 = vunpack.c.l.b16 %v294
        %v382 = vunpack.c.l.b16 %v295
        %v383 = vunpack.c.l.b16 %v296
        %v384 = vunpack.c.l.b16 %v297
        %v385 = vunpack.c.l.b16 %v298
        %v386 = vunpack.c.l.b16 %v299
        %v387 = vunpack.c.l.b16 %v300
        %v388 = vunpack.c.l.b16 %v301
        %v389 = vunpack.c.l.b16 %v302
        %v390 = vunpack.c.l.b16 %v303
        %v391 = vunpack.c.l.b16 %v304
        %v392 = vunpack.c.l.b16 %v305
        %v393 = vunpack.c.l.b16 %v306
        %v394 = vunpack.c.l.b16 %v307
        %v395 = vunpack.c.l.b16 %v308
        %v396 = vunpack.c.l.b16 %v309
        %v397 = vpack.c.b16 %v366, %v365
        %v398 = vpack.c.b16 %v368, %v367
        %v399 = vpack.c.b16 %v370, %v369
        %v400 = vpack.c.b16 %v372, %v371
        %v401 = vpack.c.b16 %v374, %v373
        %v402 = vpack.c.b16 %v376, %v375
        %v403 = vpack.c.b16 %v378, %v377
        %v404 = vpack.c.b16 %v380, %v379
        %v405 = vpack.c.b16 %v382, %v381
        %v406 = vpack.c.b16 %v384, %v383
        %v407 = vpack.c.b16 %v386, %v385
        %v408 = vpack.c.b16 %v388, %v387
        %v409 = vpack.c.b16 %v390, %v389
        %v410 = vpack.c.b16 %v392, %v391
        %v411 = vpack.c.b16 %v394, %v393
        %v412 = vpack.c.b16 %v396, %v395
        %v445 = vunpack.c.l.b16 %v310
        %v446 = vunpack.c.l.b16 %v311
        %v447 = vunpack.c.l.b16 %v312
        %v448 = vunpack.c.l.b16 %v313
        %v449 = vunpack.c.l.b16 %v314
        %v450 = vunpack.c.l.b16 %v315
        %v451 = vunpack.c.l.b16 %v316
        %v452 = vunpack.c.l.b16 %v317
        %v453 = vunpack.c.l.b16 %v318
        %v454 = vunpack.c.l.b16 %v319
        %v455 = vunpack.c.l.b16 %v320
        %v456 = vunpack.c.l.b16 %v321
        %v457 = vunpack.c.l.b16 %v322
        %v458 = vunpack.c.l.b16 %v323
        %v459 = vunpack.c.l.b16 %v324
        %v460 = vunpack.c.l.b16 %v325
        %v461 = vpack.c.b16 %v446, %v445
        %v462 = vpack.c.b16 %v448, %v447
        %v463 = vpack.c.b16 %v450, %v449
        %v464 = vpack.c.b16 %v452, %v451
        %v465 = vpack.c.b16 %v454, %v453
        %v466 = vpack.c.b16 %v456, %v455
        %v467 = vpack.c.b16 %v458, %v457
        %v468 = vpack.c.b16 %v460, %v459
        %477 = vmatprep.subr.bf16.mxu0 0
        %478 = vmatpush1.bf16.msra.mxu0 %v461
        %479 = vmatprep.subr.bf16.mxu0 0
        %480 = vmatpush1.bf16.msra.mxu0 %v462
        %481 = vmatprep.subr.bf16.mxu0 0
        %482 = vmatpush1.bf16.msra.mxu0 %v463
        %483 = vmatprep.subr.bf16.mxu0 0
        %484 = vmatpush1.bf16.msra.mxu0 %v464
        %485 = vmatprep.subr.bf16.mxu0 0
        %486 = vmatpush1.bf16.msra.mxu0 %v465
        %487 = vmatprep.subr.bf16.mxu0 0
        %488 = vmatpush1.bf16.msra.mxu0 %v466
        %489 = vmatprep.subr.bf16.mxu0 0
        %490 = vmatpush1.bf16.msra.mxu0 %v467
        %491 = vmatprep.subr.bf16.mxu0 0
        %492 = vmatpush1.bf16.msra.mxu0 %v468
        %493 = vmatprep.subr.bf16.mxu0 0
        %494 = vmatpush1.bf16.msra.mxu0 0
        %495 = vmatprep.subr.bf16.mxu0 0
        %496 = vmatpush1.bf16.msra.mxu0 0
        %497 = vmatprep.subr.bf16.mxu0 0
        %498 = vmatpush1.bf16.msra.mxu0 0
        %499 = vmatprep.subr.bf16.mxu0 0
        %500 = vmatpush1.bf16.msra.mxu0 0
        %501 = vmatprep.subr.bf16.mxu0 0
        %502 = vmatpush1.bf16.msra.mxu0 0
        %503 = vmatprep.subr.bf16.mxu0 0
        %504 = vmatpush1.bf16.msra.mxu0 0
        %505 = vmatprep.subr.bf16.mxu0 0
        %506 = vmatpush1.bf16.msra.mxu0 0
        %507 = vmatprep.subr.bf16.mxu0 0
        %508 = vmatpush1.bf16.msra.mxu0 0
        %509 = vmatprep.mubr.bf16.mxu0 0
        %510 = vmatmul.mubr.bf16.gmra.mrb[0].mxu0 %v397
        %v511 = vpop.f32.mrb[0].mxu0
        %v512 = vadd.f32 %v331, %v511
        %v513 = vpop.f32.mrb[0].mxu0
        %v514 = vpop.f32.mrb[0].mxu0
        %v515 = vadd.f32 %v331, %v514
        %v516 = vpop.f32.mrb[0].mxu0
        %517 = vmatprep.mubr.bf16.mxu0 0
        %518 = vmatmul.mubr.bf16.gmra.mrb[0].mxu0 %v398
        %v519 = vpop.f32.mrb[0].mxu0
        %v520 = vadd.f32 %v331, %v519
        %v521 = vpop.f32.mrb[0].mxu0
        %v522 = vpop.f32.mrb[0].mxu0
        %v523 = vadd.f32 %v331, %v522
        %v524 = vpop.f32.mrb[0].mxu0
        %525 = vmatprep.mubr.bf16.mxu0 0
        %526 = vmatmul.mubr.bf16.gmra.mrb[0].mxu0 %v399
        %v527 = vpop.f32.mrb[0].mxu0
        %v528 = vadd.f32 %v331, %v527
        %v529 = vpop.f32.mrb[0].mxu0
        %v530 = vpop.f32.mrb[0].mxu0
        %v531 = vadd.f32 %v331, %v530
        %v532 = vpop.f32.mrb[0].mxu0
        %533 = vmatprep.mubr.bf16.mxu0 0
        %534 = vmatmul.mubr.bf16.gmra.mrb[0].mxu0 %v400
        %v535 = vpop.f32.mrb[0].mxu0
        %v536 = vadd.f32 %v331, %v535
        %v537 = vpop.f32.mrb[0].mxu0
        %v538 = vpop.f32.mrb[0].mxu0
        %v539 = vadd.f32 %v331, %v538
        %v540 = vpop.f32.mrb[0].mxu0
        %541 = vmatprep.mubr.bf16.mxu0 0
        %542 = vmatmul.mubr.bf16.gmra.mrb[0].mxu0 %v401
        %v543 = vpop.f32.mrb[0].mxu0
        %v544 = vadd.f32 %v331, %v543
        %v545 = vpop.f32.mrb[0].mxu0
        %v546 = vpop.f32.mrb[0].mxu0
        %v547 = vadd.f32 %v331, %v546
        %v548 = vpop.f32.mrb[0].mxu0
        %549 = vmatprep.mubr.bf16.mxu0 0
        %550 = vmatmul.mubr.bf16.gmra.mrb[0].mxu0 %v402
        %v551 = vpop.f32.mrb[0].mxu0
        %v552 = vadd.f32 %v331, %v551
        %v553 = vpop.f32.mrb[0].mxu0
        %v554 = vpop.f32.mrb[0].mxu0
        %v555 = vadd.f32 %v331, %v554
        %v556 = vpop.f32.mrb[0].mxu0
        %557 = vmatprep.mubr.bf16.mxu0 0
        %558 = vmatmul.mubr.bf16.gmra.mrb[0].mxu0 %v403
        %v559 = vpop.f32.mrb[0].mxu0
        %v560 = vadd.f32 %v331, %v559
        %v561 = vpop.f32.mrb[0].mxu0
        %v562 = vpop.f32.mrb[0].mxu0
        %v563 = vadd.f32 %v331, %v562
        %v564 = vpop.f32.mrb[0].mxu0
        %565 = vmatprep.mubr.bf16.mxu0 0
        %566 = vmatmul.mubr.bf16.gmra.mrb[0].mxu0 %v404
        %v567 = vpop.f32.mrb[0].mxu0
        %v568 = vadd.f32 %v331, %v567
        %v569 = vpop.f32.mrb[0].mxu0
        %v570 = vpop.f32.mrb[0].mxu0
        %v571 = vadd.f32 %v331, %v570
        %v572 = vpop.f32.mrb[0].mxu0
        %573 = vmatprep.mubr.bf16.mxu0 0
        %574 = vmatmul.mubr.bf16.gmra.mrb[0].mxu0 %v405
        %v575 = vpop.f32.mrb[0].mxu0
        %v576 = vadd.f32 %v331, %v575
        %v577 = vpop.f32.mrb[0].mxu0
        %v578 = vpop.f32.mrb[0].mxu0
        %v579 = vadd.f32 %v331, %v578
        %v580 = vpop.f32.mrb[0].mxu0
        %581 = vmatprep.mubr.bf16.mxu0 0
        %582 = vmatmul.mubr.bf16.gmra.mrb[0].mxu0 %v406
        %v583 = vpop.f32.mrb[0].mxu0
        %v584 = vadd.f32 %v331, %v583
        %v585 = vpop.f32.mrb[0].mxu0
        %v586 = vpop.f32.mrb[0].mxu0
        %v587 = vadd.f32 %v331, %v586
        %v588 = vpop.f32.mrb[0].mxu0
        %589 = vmatprep.mubr.bf16.mxu0 0
        %590 = vmatmul.mubr.bf16.gmra.mrb[0].mxu0 %v407
        %v591 = vpop.f32.mrb[0].mxu0
        %v592 = vadd.f32 %v331, %v591
        %v593 = vpop.f32.mrb[0].mxu0
        %v594 = vpop.f32.mrb[0].mxu0
        %v595 = vadd.f32 %v331, %v594
        %v596 = vpop.f32.mrb[0].mxu0
        %597 = vmatprep.mubr.bf16.mxu0 0
        %598 = vmatmul.mubr.bf16.gmra.mrb[0].mxu0 %v408
        %v599 = vpop.f32.mrb[0].mxu0
        %v600 = vadd.f32 %v331, %v599
        %v601 = vpop.f32.mrb[0].mxu0
        %v602 = vpop.f32.mrb[0].mxu0
        %v603 = vadd.f32 %v331, %v602
        %v604 = vpop.f32.mrb[0].mxu0
        %605 = vmatprep.mubr.bf16.mxu0 0
        %606 = vmatmul.mubr.bf16.gmra.mrb[0].mxu0 %v409
        %v607 = vpop.f32.mrb[0].mxu0
        %v608 = vadd.f32 %v331, %v607
        %v609 = vpop.f32.mrb[0].mxu0
        %v610 = vpop.f32.mrb[0].mxu0
        %v611 = vadd.f32 %v331, %v610
        %v612 = vpop.f32.mrb[0].mxu0
        %613 = vmatprep.mubr.bf16.mxu0 0
        %614 = vmatmul.mubr.bf16.gmra.mrb[0].mxu0 %v410
        %v615 = vpop.f32.mrb[0].mxu0
        %v616 = vadd.f32 %v331, %v615
        %v617 = vpop.f32.mrb[0].mxu0
        %v618 = vpop.f32.mrb[0].mxu0
        %v619 = vadd.f32 %v331, %v618
        %v620 = vpop.f32.mrb[0].mxu0
        %621 = vmatprep.mubr.bf16.mxu0 0
        %622 = vmatmul.mubr.bf16.gmra.mrb[0].mxu0 %v411
        %v623 = vpop.f32.mrb[0].mxu0
        %v624 = vadd.f32 %v331, %v623
        %v625 = vpop.f32.mrb[0].mxu0
        %v626 = vpop.f32.mrb[0].mxu0
        %v627 = vadd.f32 %v331, %v626
        %v628 = vpop.f32.mrb[0].mxu0
        %629 = vmatprep.mubr.bf16.mxu0 0
        %630 = vmatmul.mubr.bf16.gmra.mrb[0].mxu0 %v412
        %v631 = vpop.f32.mrb[0].mxu0
        %v632 = vadd.f32 %v331, %v631
        %v633 = vpop.f32.mrb[0].mxu0
        %v634 = vpop.f32.mrb[0].mxu0
        %v635 = vadd.f32 %v331, %v634
        %v636 = vpop.f32.mrb[0].mxu0
        %637 = vdwg.mxu0
        %v638 = vmax.f32 %v512, 0.0
        %v639 = vmax.f32 %v515, 0.0
        %v640 = vmax.f32 %v520, 0.0
        %v641 = vmax.f32 %v523, 0.0
        %v642 = vmax.f32 %v528, 0.0
        %v643 = vmax.f32 %v531, 0.0
        %v644 = vmax.f32 %v536, 0.0
        %v645 = vmax.f32 %v539, 0.0
        %v646 = vmax.f32 %v544, 0.0
        %v647 = vmax.f32 %v547, 0.0
        %v648 = vmax.f32 %v552, 0.0
        %v649 = vmax.f32 %v555, 0.0
        %v650 = vmax.f32 %v560, 0.0
        %v651 = vmax.f32 %v563, 0.0
        %v652 = vmax.f32 %v568, 0.0
        %v653 = vmax.f32 %v571, 0.0
        %v654 = vmax.f32 %v576, 0.0
        %v655 = vmax.f32 %v579, 0.0
        %v656 = vmax.f32 %v584, 0.0
        %v657 = vmax.f32 %v587, 0.0
        %v658 = vmax.f32 %v592, 0.0
        %v659 = vmax.f32 %v595, 0.0
        %v660 = vmax.f32 %v600, 0.0
        %v661 = vmax.f32 %v603, 0.0
        %v662 = vmax.f32 %v608, 0.0
        %v663 = vmax.f32 %v611, 0.0
        %v664 = vmax.f32 %v616, 0.0
        %v665 = vmax.f32 %v619, 0.0
        %v666 = vmax.f32 %v624, 0.0
        %v667 = vmax.f32 %v627, 0.0
        %v668 = vmax.f32 %v632, 0.0
        %v669 = vmax.f32 %v635, 0.0
        %vm670 = vcmask 261120
        %671 = vst.msk [vmem:[#allocation2] sm:$0xff] %vm670, 0.0
        %672 = vst.msk [vmem:[#allocation2 + $0x8] sm:$0xff] %vm670, 0.0
        %673 = vst.msk [vmem:[#allocation2 + $0x10] sm:$0xff] %vm670, 0.0
        %674 = vst.msk [vmem:[#allocation2 + $0x18] sm:$0xff] %vm670, 0.0
        %675 = vst.msk [vmem:[#allocation2 + $0x120] sm:$0xff] %vm670, 0.0
        %676 = vst.msk [vmem:[#allocation2 + $0x128] sm:$0xff] %vm670, 0.0
        %677 = vst.msk [vmem:[#allocation2 + $0x130] sm:$0xff] %vm670, 0.0
        %678 = vst.msk [vmem:[#allocation2 + $0x138] sm:$0xff] %vm670, 0.0
        %679 = vst.msk [vmem:[#allocation2 + $0x20] sm:$0xff] %vm670, %v638
        %680 = vst.msk [vmem:[#allocation2 + $0x28] sm:$0xff] %vm670, %v639
        %681 = vst.msk [vmem:[#allocation2 + $0x30] sm:$0xff] %vm670, %v640
        %682 = vst.msk [vmem:[#allocation2 + $0x38] sm:$0xff] %vm670, %v641
        %683 = vst.msk [vmem:[#allocation2 + $0x40] sm:$0xff] %vm670, %v642
        %684 = vst.msk [vmem:[#allocation2 + $0x48] sm:$0xff] %vm670, %v643
        %685 = vst.msk [vmem:[#allocation2 + $0x50] sm:$0xff] %vm670, %v644
        %686 = vst.msk [vmem:[#allocation2 + $0x58] sm:$0xff] %vm670, %v645
        %687 = vst.msk [vmem:[#allocation2 + $0x60] sm:$0xff] %vm670, %v646
        %688 = vst.msk [vmem:[#allocation2 + $0x68] sm:$0xff] %vm670, %v647
        %689 = vst.msk [vmem:[#allocation2 + $0x70] sm:$0xff] %vm670, %v648
        %690 = vst.msk [vmem:[#allocation2 + $0x78] sm:$0xff] %vm670, %v649
        %691 = vst.msk [vmem:[#allocation2 + $0x80] sm:$0xff] %vm670, %v650
        %692 = vst.msk [vmem:[#allocation2 + $0x88] sm:$0xff] %vm670, %v651
        %693 = vst.msk [vmem:[#allocation2 + $0x90] sm:$0xff] %vm670, %v652
        %694 = vst.msk [vmem:[#allocation2 + $0x98] sm:$0xff] %vm670, %v653
        %695 = vst.msk [vmem:[#allocation2 + $0xa0] sm:$0xff] %vm670, %v654
        %696 = vst.msk [vmem:[#allocation2 + $0xa8] sm:$0xff] %vm670, %v655
        %697 = vst.msk [vmem:[#allocation2 + $0xb0] sm:$0xff] %vm670, %v656
        %698 = vst.msk [vmem:[#allocation2 + $0xb8] sm:$0xff] %vm670, %v657
        %699 = vst.msk [vmem:[#allocation2 + $0xc0] sm:$0xff] %vm670, %v658
        %700 = vst.msk [vmem:[#allocation2 + $0xc8] sm:$0xff] %vm670, %v659
        %701 = vst.msk [vmem:[#allocation2 + $0xd0] sm:$0xff] %vm670, %v660
        %702 = vst.msk [vmem:[#allocation2 + $0xd8] sm:$0xff] %vm670, %v661
        %703 = vst.msk [vmem:[#allocation2 + $0xe0] sm:$0xff] %vm670, %v662
        %704 = vst.msk [vmem:[#allocation2 + $0xe8] sm:$0xff] %vm670, %v663
        %705 = vst.msk [vmem:[#allocation2 + $0xf0] sm:$0xff] %vm670, %v664
        %706 = vst.msk [vmem:[#allocation2 + $0xf8] sm:$0xff] %vm670, %v665
        %707 = vst.msk [vmem:[#allocation2 + $0x100] sm:$0xff] %vm670, %v666
        %708 = vst.msk [vmem:[#allocation2 + $0x108] sm:$0xff] %vm670, %v667
        %709 = vst.msk [vmem:[#allocation2 + $0x110] sm:$0xff] %vm670, %v668
        %710 = vst.msk [vmem:[#allocation2 + $0x118] sm:$0xff] %vm670, %v669
        %v711 = vld [vmem:[#allocation2 + $0x10] sm:$0xff]
        %v712 = vld [vmem:[#allocation2 + $0x18] sm:$0xff]
        %v713 = vld [vmem:[#allocation2 + $0x20] sm:$0xff]
        %v714 = vld [vmem:[#allocation2 + $0x28] sm:$0xff]
        %v715 = vld [vmem:[#allocation2 + $0x30] sm:$0xff]
        %v716 = vld [vmem:[#allocation2 + $0x38] sm:$0xff]
        %v717 = vld [vmem:[#allocation2 + $0x40] sm:$0xff]
        %v718 = vld [vmem:[#allocation2 + $0x48] sm:$0xff]
        %v719 = vld [vmem:[#allocation2 + $0x50] sm:$0xff]
        %v720 = vld [vmem:[#allocation2 + $0x58] sm:$0xff]
        %v721 = vld [vmem:[#allocation2 + $0x60] sm:$0xff]
        %v722 = vld [vmem:[#allocation2 + $0x68] sm:$0xff]
        %v723 = vld [vmem:[#allocation2 + $0x70] sm:$0xff]
        %v724 = vld [vmem:[#allocation2 + $0x78] sm:$0xff]
        %v725 = vld [vmem:[#allocation2 + $0x80] sm:$0xff]
        %v726 = vld [vmem:[#allocation2 + $0x88] sm:$0xff]
        %v727 = vld [vmem:[#allocation2 + $0x90] sm:$0xff]
        %v728 = vld [vmem:[#allocation2 + $0x98] sm:$0xff]
        %v729 = vld [vmem:[#allocation2 + $0xa0] sm:$0xff]
        %v730 = vld [vmem:[#allocation2 + $0xa8] sm:$0xff]
        %v731 = vld [vmem:[#allocation2 + $0xb0] sm:$0xff]
        %v732 = vld [vmem:[#allocation2 + $0xb8] sm:$0xff]
        %v733 = vld [vmem:[#allocation2 + $0xc0] sm:$0xff]
        %v734 = vld [vmem:[#allocation2 + $0xc8] sm:$0xff]
        %v735 = vld [vmem:[#allocation2 + $0xd0] sm:$0xff]
        %v736 = vld [vmem:[#allocation2 + $0xd8] sm:$0xff]
        %v737 = vld [vmem:[#allocation2 + $0xe0] sm:$0xff]
        %v738 = vld [vmem:[#allocation2 + $0xe8] sm:$0xff]
        %v739 = vld [vmem:[#allocation2 + $0xf0] sm:$0xff]
        %v740 = vld [vmem:[#allocation2 + $0xf8] sm:$0xff]
        %v741 = vld [vmem:[#allocation2 + $0x100] sm:$0xff]
        %v742 = vld [vmem:[#allocation2 + $0x108] sm:$0xff]
        %v743 = vld [vmem:[#allocation2 + $0x110] sm:$0xff]
        %v744 = vld [vmem:[#allocation2 + $0x118] sm:$0xff]
        %v745 = vld [vmem:[#allocation2 + $0x120] sm:$0xff]
        %v746 = vld [vmem:[#allocation2 + $0x128] sm:$0xff]
        %v747 = vld [vmem:[#allocation2 + $0xf] sm:$0xff]
        %v748 = vld [vmem:[#allocation2 + $0x17] sm:$0xff]
        %v749 = vld [vmem:[#allocation2 + $0x1f] sm:$0xff]
        %v750 = vld [vmem:[#allocation2 + $0x27] sm:$0xff]
        %v751 = vld [vmem:[#allocation2 + $0x2f] sm:$0xff]
        %v752 = vld [vmem:[#allocation2 + $0x37] sm:$0xff]
        %v753 = vld [vmem:[#allocation2 + $0x3f] sm:$0xff]
        %v754 = vld [vmem:[#allocation2 + $0x47] sm:$0xff]
        %v755 = vld [vmem:[#allocation2 + $0x4f] sm:$0xff]
        %v756 = vld [vmem:[#allocation2 + $0x57] sm:$0xff]
        %v757 = vld [vmem:[#allocation2 + $0x5f] sm:$0xff]
        %v758 = vld [vmem:[#allocation2 + $0x67] sm:$0xff]
        %v759 = vld [vmem:[#allocation2 + $0x6f] sm:$0xff]
        %v760 = vld [vmem:[#allocation2 + $0x77] sm:$0xff]
        %v761 = vld [vmem:[#allocation2 + $0x7f] sm:$0xff]
        %v762 = vld [vmem:[#allocation2 + $0x87] sm:$0xff]
        %v763 = vld [vmem:[#allocation2 + $0x8f] sm:$0xff]
        %v764 = vld [vmem:[#allocation2 + $0x97] sm:$0xff]
        %v765 = vld [vmem:[#allocation2 + $0x9f] sm:$0xff]
        %v766 = vld [vmem:[#allocation2 + $0xa7] sm:$0xff]
        %v767 = vld [vmem:[#allocation2 + $0xaf] sm:$0xff]
        %v768 = vld [vmem:[#allocation2 + $0xb7] sm:$0xff]
        %v769 = vld [vmem:[#allocation2 + $0xbf] sm:$0xff]
        %v770 = vld [vmem:[#allocation2 + $0xc7] sm:$0xff]
        %v771 = vld [vmem:[#allocation2 + $0xcf] sm:$0xff]
        %v772 = vld [vmem:[#allocation2 + $0xd7] sm:$0xff]
        %v773 = vld [vmem:[#allocation2 + $0xdf] sm:$0xff]
        %v774 = vld [vmem:[#allocation2 + $0xe7] sm:$0xff]
        %v775 = vld [vmem:[#allocation2 + $0xef] sm:$0xff]
        %v776 = vld [vmem:[#allocation2 + $0xf7] sm:$0xff]
        %v777 = vld [vmem:[#allocation2 + $0xff] sm:$0xff]
        %v778 = vld [vmem:[#allocation2 + $0x107] sm:$0xff]
        %v779 = vld [vmem:[#allocation2 + $0x10f] sm:$0xff]
        %v780 = vld [vmem:[#allocation2 + $0x117] sm:$0xff]
        %v781 = vld [vmem:[#allocation2 + $0x11f] sm:$0xff]
        %v782 = vld [vmem:[#allocation2 + $0x127] sm:$0xff]
        %v783 = vld [vmem:[#allocation2 + $0x11] sm:$0xff]
        %v784 = vld [vmem:[#allocation2 + $0x19] sm:$0xff]
        %v785 = vld [vmem:[#allocation2 + $0x21] sm:$0xff]
        %v786 = vld [vmem:[#allocation2 + $0x29] sm:$0xff]
        %v787 = vld [vmem:[#allocation2 + $0x31] sm:$0xff]
        %v788 = vld [vmem:[#allocation2 + $0x39] sm:$0xff]
        %v789 = vld [vmem:[#allocation2 + $0x41] sm:$0xff]
        %v790 = vld [vmem:[#allocation2 + $0x49] sm:$0xff]
        %v791 = vld [vmem:[#allocation2 + $0x51] sm:$0xff]
        %v792 = vld [vmem:[#allocation2 + $0x59] sm:$0xff]
        %v793 = vld [vmem:[#allocation2 + $0x61] sm:$0xff]
        %v794 = vld [vmem:[#allocation2 + $0x69] sm:$0xff]
        %v795 = vld [vmem:[#allocation2 + $0x71] sm:$0xff]
        %v796 = vld [vmem:[#allocation2 + $0x79] sm:$0xff]
        %v797 = vld [vmem:[#allocation2 + $0x81] sm:$0xff]
        %v798 = vld [vmem:[#allocation2 + $0x89] sm:$0xff]
        %v799 = vld [vmem:[#allocation2 + $0x91] sm:$0xff]
        %v800 = vld [vmem:[#allocation2 + $0x99] sm:$0xff]
        %v801 = vld [vmem:[#allocation2 + $0xa1] sm:$0xff]
        %v802 = vld [vmem:[#allocation2 + $0xa9] sm:$0xff]
        %v803 = vld [vmem:[#allocation2 + $0xb1] sm:$0xff]
        %v804 = vld [vmem:[#allocation2 + $0xb9] sm:$0xff]
        %v805 = vld [vmem:[#allocation2 + $0xc1] sm:$0xff]
        %v806 = vld [vmem:[#allocation2 + $0xc9] sm:$0xff]
        %v807 = vld [vmem:[#allocation2 + $0xd1] sm:$0xff]
        %v808 = vld [vmem:[#allocation2 + $0xd9] sm:$0xff]
        %v809 = vld [vmem:[#allocation2 + $0xe1] sm:$0xff]
        %v810 = vld [vmem:[#allocation2 + $0xe9] sm:$0xff]
        %v811 = vld [vmem:[#allocation2 + $0xf1] sm:$0xff]
        %v812 = vld [vmem:[#allocation2 + $0xf9] sm:$0xff]
        %v813 = vld [vmem:[#allocation2 + $0x101] sm:$0xff]
        %v814 = vld [vmem:[#allocation2 + $0x109] sm:$0xff]
        %v815 = vld [vmem:[#allocation2 + $0x111] sm:$0xff]
        %v816 = vld [vmem:[#allocation2 + $0x119] sm:$0xff]
        %v817 = vld [vmem:[#allocation2 + $0x121] sm:$0xff]
        %v818 = vld [vmem:[#allocation2 + $0x129] sm:$0xff]
        %v819 = vlaneseq
        %v820 = vshrl.u32 %v819, 7
        %v821 = vadd.s32 %v820, 8
        %v822 = vadd.s32 %v820, 16
        %v823 = vadd.s32 %v820, 24
        %v824 = vadd.s32 %v820, 32
        %v825 = vadd.s32 %v820, 40
        %v826 = vadd.s32 %v820, 48
        %v827 = vadd.s32 %v820, 56
        %v828 = vadd.s32 %v820, 64
        %v829 = vadd.s32 %v820, 72
        %v830 = vadd.s32 %v820, 80
        %v831 = vadd.s32 %v820, 88
        %v832 = vadd.s32 %v820, 96
        %v833 = vadd.s32 %v820, 104
        %v834 = vadd.s32 %v820, 112
        %v835 = vadd.s32 %v820, 120
        %v836 = vadd.s32 %v820, 128
        %v837 = vadd.s32 %v820, 136
        %v838 = vadd.s32 %v820, 144
        %v839 = vadd.s32 %v820, 152
        %v840 = vadd.s32 %v820, 160
        %v841 = vadd.s32 %v820, 168
        %v842 = vadd.s32 %v820, 176
        %v843 = vadd.s32 %v820, 184
        %v844 = vadd.s32 %v820, 192
        %v845 = vadd.s32 %v820, 200
        %v846 = vadd.s32 %v820, 208
        %v847 = vadd.s32 %v820, 216
        %v848 = vadd.s32 %v820, 224
        %v849 = vadd.s32 %v820, 232
        %v850 = vadd.s32 %v820, 240
        %v851 = vadd.s32 %v820, 248
        %v852 = vadd.s32 %v820, 256
        %v853 = vadd.s32 %v820, 264
        %v854 = vadd.s32 %v820, 272
        %v855 = vadd.s32 %v820, 280
        %vm856 = vcmp.lt.s32.totalorder %v820, 0
        %v857 = vsub.s32 0, %v820
        %v858 = vsel %vm856, %v857, %v820
        %v859 = vshrl.u32 %v858, 4
        %v860 = vand.u32 %v858, 15
        %v861 = vsub.s32 0, %v860
        %v862 = vsel %vm856, %v861, %v860
        %vm863 = vcmp.lt.s32.totalorder %v821, 0
        %v864 = vsub.s32 0, %v821
        %v865 = vsel %vm863, %v864, %v821
        %v866 = vshrl.u32 %v865, 4
        %v867 = vand.u32 %v865, 15
        %v868 = vsub.s32 0, %v867
        %v869 = vsel %vm863, %v868, %v867
        %vm870 = vcmp.lt.s32.totalorder %v822, 0
        %v871 = vsub.s32 0, %v822
        %v872 = vsel %vm870, %v871, %v822
        %v873 = vshrl.u32 %v872, 4
        %v874 = vand.u32 %v872, 15
        %v875 = vsub.s32 0, %v874
        %v876 = vsel %vm870, %v875, %v874
        %vm877 = vcmp.lt.s32.totalorder %v823, 0
        %v878 = vsub.s32 0, %v823
        %v879 = vsel %vm877, %v878, %v823
        %v880 = vshrl.u32 %v879, 4
        %v881 = vand.u32 %v879, 15
        %v882 = vsub.s32 0, %v881
        %v883 = vsel %vm877, %v882, %v881
        %vm884 = vcmp.lt.s32.totalorder %v824, 0
        %v885 = vsub.s32 0, %v824
        %v886 = vsel %vm884, %v885, %v824
        %v887 = vshrl.u32 %v886, 4
        %v888 = vand.u32 %v886, 15
        %v889 = vsub.s32 0, %v888
        %v890 = vsel %vm884, %v889, %v888
        %vm891 = vcmp.lt.s32.totalorder %v825, 0
        %v892 = vsub.s32 0, %v825
        %v893 = vsel %vm891, %v892, %v825
        %v894 = vshrl.u32 %v893, 4
        %v895 = vand.u32 %v893, 15
        %v896 = vsub.s32 0, %v895
        %v897 = vsel %vm891, %v896, %v895
        %vm898 = vcmp.lt.s32.totalorder %v826, 0
        %v899 = vsub.s32 0, %v826
        %v900 = vsel %vm898, %v899, %v826
        %v901 = vshrl.u32 %v900, 4
        %v902 = vand.u32 %v900, 15
        %v903 = vsub.s32 0, %v902
        %v904 = vsel %vm898, %v903, %v902
        %vm905 = vcmp.lt.s32.totalorder %v827, 0
        %v906 = vsub.s32 0, %v827
        %v907 = vsel %vm905, %v906, %v827
        %v908 = vshrl.u32 %v907, 4
        %v909 = vand.u32 %v907, 15
        %v910 = vsub.s32 0, %v909
        %v911 = vsel %vm905, %v910, %v909
        %vm912 = vcmp.lt.s32.totalorder %v828, 0
        %v913 = vsub.s32 0, %v828
        %v914 = vsel %vm912, %v913, %v828
        %v915 = vshrl.u32 %v914, 4
        %v916 = vand.u32 %v914, 15
        %v917 = vsub.s32 0, %v916
        %v918 = vsel %vm912, %v917, %v916
        %vm919 = vcmp.lt.s32.totalorder %v829, 0
        %v920 = vsub.s32 0, %v829
        %v921 = vsel %vm919, %v920, %v829
        %v922 = vshrl.u32 %v921, 4
        %v923 = vand.u32 %v921, 15
        %v924 = vsub.s32 0, %v923
        %v925 = vsel %vm919, %v924, %v923
        %vm926 = vcmp.lt.s32.totalorder %v830, 0
        %v927 = vsub.s32 0, %v830
        %v928 = vsel %vm926, %v927, %v830
        %v929 = vshrl.u32 %v928, 4
        %v930 = vand.u32 %v928, 15
        %v931 = vsub.s32 0, %v930
        %v932 = vsel %vm926, %v931, %v930
        %vm933 = vcmp.lt.s32.totalorder %v831, 0
        %v934 = vsub.s32 0, %v831
        %v935 = vsel %vm933, %v934, %v831
        %v936 = vshrl.u32 %v935, 4
        %v937 = vand.u32 %v935, 15
        %v938 = vsub.s32 0, %v937
        %v939 = vsel %vm933, %v938, %v937
        %vm940 = vcmp.lt.s32.totalorder %v832, 0
        %v941 = vsub.s32 0, %v832
        %v942 = vsel %vm940, %v941, %v832
        %v943 = vshrl.u32 %v942, 4
        %v944 = vand.u32 %v942, 15
        %v945 = vsub.s32 0, %v944
        %v946 = vsel %vm940, %v945, %v944
        %vm947 = vcmp.lt.s32.totalorder %v833, 0
        %v948 = vsub.s32 0, %v833
        %v949 = vsel %vm947, %v948, %v833
        %v950 = vshrl.u32 %v949, 4
        %v951 = vand.u32 %v949, 15
        %v952 = vsub.s32 0, %v951
        %v953 = vsel %vm947, %v952, %v951
        %vm954 = vcmp.lt.s32.totalorder %v834, 0
        %v955 = vsub.s32 0, %v834
        %v956 = vsel %vm954, %v955, %v834
        %v957 = vshrl.u32 %v956, 4
        %v958 = vand.u32 %v956, 15
        %v959 = vsub.s32 0, %v958
        %v960 = vsel %vm954, %v959, %v958
        %vm961 = vcmp.lt.s32.totalorder %v835, 0
        %v962 = vsub.s32 0, %v835
        %v963 = vsel %vm961, %v962, %v835
        %v964 = vshrl.u32 %v963, 4
        %v965 = vand.u32 %v963, 15
        %v966 = vsub.s32 0, %v965
        %v967 = vsel %vm961, %v966, %v965
        %vm968 = vcmp.lt.s32.totalorder %v836, 0
        %v969 = vsub.s32 0, %v836
        %v970 = vsel %vm968, %v969, %v836
        %v971 = vshrl.u32 %v970, 4
        %v972 = vand.u32 %v970, 15
        %v973 = vsub.s32 0, %v972
        %v974 = vsel %vm968, %v973, %v972
        %vm975 = vcmp.lt.s32.totalorder %v837, 0
        %v976 = vsub.s32 0, %v837
        %v977 = vsel %vm975, %v976, %v837
        %v978 = vshrl.u32 %v977, 4
        %v979 = vand.u32 %v977, 15
        %v980 = vsub.s32 0, %v979
        %v981 = vsel %vm975, %v980, %v979
        %vm982 = vcmp.lt.s32.totalorder %v838, 0
        %v983 = vsub.s32 0, %v838
        %v984 = vsel %vm982, %v983, %v838
        %v985 = vshrl.u32 %v984, 4
        %v986 = vand.u32 %v984, 15
        %v987 = vsub.s32 0, %v986
        %v988 = vsel %vm982, %v987, %v986
        %vm989 = vcmp.lt.s32.totalorder %v839, 0
        %v990 = vsub.s32 0, %v839
        %v991 = vsel %vm989, %v990, %v839
        %v992 = vshrl.u32 %v991, 4
        %v993 = vand.u32 %v991, 15
        %v994 = vsub.s32 0, %v993
        %v995 = vsel %vm989, %v994, %v993
        %vm996 = vcmp.lt.s32.totalorder %v840, 0
        %v997 = vsub.s32 0, %v840
        %v998 = vsel %vm996, %v997, %v840
        %v999 = vshrl.u32 %v998, 4
        %v1000 = vand.u32 %v998, 15
        %v1001 = vsub.s32 0, %v1000
        %v1002 = vsel %vm996, %v1001, %v1000
        %vm1003 = vcmp.lt.s32.totalorder %v841, 0
        %v1004 = vsub.s32 0, %v841
        %v1005 = vsel %vm1003, %v1004, %v841
        %v1006 = vshrl.u32 %v1005, 4
        %v1007 = vand.u32 %v1005, 15
        %v1008 = vsub.s32 0, %v1007
        %v1009 = vsel %vm1003, %v1008, %v1007
        %vm1010 = vcmp.lt.s32.totalorder %v842, 0
        %v1011 = vsub.s32 0, %v842
        %v1012 = vsel %vm1010, %v1011, %v842
        %v1013 = vshrl.u32 %v1012, 4
        %v1014 = vand.u32 %v1012, 15
        %v1015 = vsub.s32 0, %v1014
        %v1016 = vsel %vm1010, %v1015, %v1014
        %vm1017 = vcmp.lt.s32.totalorder %v843, 0
        %v1018 = vsub.s32 0, %v843
        %v1019 = vsel %vm1017, %v1018, %v843
        %v1020 = vshrl.u32 %v1019, 4
        %v1021 = vand.u32 %v1019, 15
        %v1022 = vsub.s32 0, %v1021
        %v1023 = vsel %vm1017, %v1022, %v1021
        %vm1024 = vcmp.lt.s32.totalorder %v844, 0
        %v1025 = vsub.s32 0, %v844
        %v1026 = vsel %vm1024, %v1025, %v844
        %v1027 = vshrl.u32 %v1026, 4
        %v1028 = vand.u32 %v1026, 15
        %v1029 = vsub.s32 0, %v1028
        %v1030 = vsel %vm1024, %v1029, %v1028
        %vm1031 = vcmp.lt.s32.totalorder %v845, 0
        %v1032 = vsub.s32 0, %v845
        %v1033 = vsel %vm1031, %v1032, %v845
        %v1034 = vshrl.u32 %v1033, 4
        %v1035 = vand.u32 %v1033, 15
        %v1036 = vsub.s32 0, %v1035
        %v1037 = vsel %vm1031, %v1036, %v1035
        %vm1038 = vcmp.lt.s32.totalorder %v846, 0
        %v1039 = vsub.s32 0, %v846
        %v1040 = vsel %vm1038, %v1039, %v846
        %v1041 = vshrl.u32 %v1040, 4
        %v1042 = vand.u32 %v1040, 15
        %v1043 = vsub.s32 0, %v1042
        %v1044 = vsel %vm1038, %v1043, %v1042
        %vm1045 = vcmp.lt.s32.totalorder %v847, 0
        %v1046 = vsub.s32 0, %v847
        %v1047 = vsel %vm1045, %v1046, %v847
        %v1048 = vshrl.u32 %v1047, 4
        %v1049 = vand.u32 %v1047, 15
        %v1050 = vsub.s32 0, %v1049
        %v1051 = vsel %vm1045, %v1050, %v1049
        %vm1052 = vcmp.lt.s32.totalorder %v848, 0
        %v1053 = vsub.s32 0, %v848
        %v1054 = vsel %vm1052, %v1053, %v848
        %v1055 = vshrl.u32 %v1054, 4
        %v1056 = vand.u32 %v1054, 15
        %v1057 = vsub.s32 0, %v1056
        %v1058 = vsel %vm1052, %v1057, %v1056
        %vm1059 = vcmp.lt.s32.totalorder %v849, 0
        %v1060 = vsub.s32 0, %v849
        %v1061 = vsel %vm1059, %v1060, %v849
        %v1062 = vshrl.u32 %v1061, 4
        %v1063 = vand.u32 %v1061, 15
        %v1064 = vsub.s32 0, %v1063
        %v1065 = vsel %vm1059, %v1064, %v1063
        %vm1066 = vcmp.lt.s32.totalorder %v850, 0
        %v1067 = vsub.s32 0, %v850
        %v1068 = vsel %vm1066, %v1067, %v850
        %v1069 = vshrl.u32 %v1068, 4
        %v1070 = vand.u32 %v1068, 15
        %v1071 = vsub.s32 0, %v1070
        %v1072 = vsel %vm1066, %v1071, %v1070
        %vm1073 = vcmp.lt.s32.totalorder %v851, 0
        %v1074 = vsub.s32 0, %v851
        %v1075 = vsel %vm1073, %v1074, %v851
        %v1076 = vshrl.u32 %v1075, 4
        %v1077 = vand.u32 %v1075, 15
        %v1078 = vsub.s32 0, %v1077
        %v1079 = vsel %vm1073, %v1078, %v1077
        %vm1080 = vcmp.lt.s32.totalorder %v852, 0
        %v1081 = vsub.s32 0, %v852
        %v1082 = vsel %vm1080, %v1081, %v852
        %v1083 = vshrl.u32 %v1082, 4
        %v1084 = vand.u32 %v1082, 15
        %v1085 = vsub.s32 0, %v1084
        %v1086 = vsel %vm1080, %v1085, %v1084
        %vm1087 = vcmp.lt.s32.totalorder %v853, 0
        %v1088 = vsub.s32 0, %v853
        %v1089 = vsel %vm1087, %v1088, %v853
        %v1090 = vshrl.u32 %v1089, 4
        %v1091 = vand.u32 %v1089, 15
        %v1092 = vsub.s32 0, %v1091
        %v1093 = vsel %vm1087, %v1092, %v1091
        %vm1094 = vcmp.lt.s32.totalorder %v854, 0
        %v1095 = vsub.s32 0, %v854
        %v1096 = vsel %vm1094, %v1095, %v854
        %v1097 = vshrl.u32 %v1096, 4
        %v1098 = vand.u32 %v1096, 15
        %v1099 = vsub.s32 0, %v1098
        %v1100 = vsel %vm1094, %v1099, %v1098
        %vm1101 = vcmp.lt.s32.totalorder %v855, 0
        %v1102 = vsub.s32 0, %v855
        %v1103 = vsel %vm1101, %v1102, %v855
        %v1104 = vshrl.u32 %v1103, 4
        %v1105 = vand.u32 %v1103, 15
        %v1106 = vsub.s32 0, %v1105
        %v1107 = vsel %vm1101, %v1106, %v1105
        %vm1108 = vcmp.ne.s32.totalorder %v862, 0
        %vm1109 = vcmp.ne.s32.totalorder %v869, 0
        %vm1110 = vcmp.ne.s32.totalorder %v876, 0
        %vm1111 = vcmp.ne.s32.totalorder %v883, 0
        %vm1112 = vcmp.ne.s32.totalorder %v890, 0
        %vm1113 = vcmp.ne.s32.totalorder %v897, 0
        %vm1114 = vcmp.ne.s32.totalorder %v904, 0
        %vm1115 = vcmp.ne.s32.totalorder %v911, 0
        %vm1116 = vcmp.ne.s32.totalorder %v918, 0
        %vm1117 = vcmp.ne.s32.totalorder %v925, 0
        %vm1118 = vcmp.ne.s32.totalorder %v932, 0
        %vm1119 = vcmp.ne.s32.totalorder %v939, 0
        %vm1120 = vcmp.ne.s32.totalorder %v946, 0
        %vm1121 = vcmp.ne.s32.totalorder %v953, 0
        %vm1122 = vcmp.ne.s32.totalorder %v960, 0
        %vm1123 = vcmp.ne.s32.totalorder %v967, 0
        %vm1124 = vcmp.ne.s32.totalorder %v974, 0
        %vm1125 = vcmp.ne.s32.totalorder %v981, 0
        %vm1126 = vcmp.ne.s32.totalorder %v988, 0
        %vm1127 = vcmp.ne.s32.totalorder %v995, 0
        %vm1128 = vcmp.ne.s32.totalorder %v1002, 0
        %vm1129 = vcmp.ne.s32.totalorder %v1009, 0
        %vm1130 = vcmp.ne.s32.totalorder %v1016, 0
        %vm1131 = vcmp.ne.s32.totalorder %v1023, 0
        %vm1132 = vcmp.ne.s32.totalorder %v1030, 0
        %vm1133 = vcmp.ne.s32.totalorder %v1037, 0
        %vm1134 = vcmp.ne.s32.totalorder %v1044, 0
        %vm1135 = vcmp.ne.s32.totalorder %v1051, 0
        %vm1136 = vcmp.ne.s32.totalorder %v1058, 0
        %vm1137 = vcmp.ne.s32.totalorder %v1065, 0
        %vm1138 = vcmp.ne.s32.totalorder %v1072, 0
        %vm1139 = vcmp.ne.s32.totalorder %v1079, 0
        %vm1140 = vcmp.ne.s32.totalorder %v1086, 0
        %vm1141 = vcmp.ne.s32.totalorder %v1093, 0
        %vm1142 = vcmp.ne.s32.totalorder %v1100, 0
        %vm1143 = vcmp.ne.s32.totalorder %v1107, 0
        %vm1144 = vcmp.lt.s32.totalorder %v862, 0
        %vm1145 = vcmp.lt.s32.totalorder %v869, 0
        %vm1146 = vcmp.lt.s32.totalorder %v876, 0
        %vm1147 = vcmp.lt.s32.totalorder %v883, 0
        %vm1148 = vcmp.lt.s32.totalorder %v890, 0
        %vm1149 = vcmp.lt.s32.totalorder %v897, 0
        %vm1150 = vcmp.lt.s32.totalorder %v904, 0
        %vm1151 = vcmp.lt.s32.totalorder %v911, 0
        %vm1152 = vcmp.lt.s32.totalorder %v918, 0
        %vm1153 = vcmp.lt.s32.totalorder %v925, 0
        %vm1154 = vcmp.lt.s32.totalorder %v932, 0
        %vm1155 = vcmp.lt.s32.totalorder %v939, 0
        %vm1156 = vcmp.lt.s32.totalorder %v946, 0
        %vm1157 = vcmp.lt.s32.totalorder %v953, 0
        %vm1158 = vcmp.lt.s32.totalorder %v960, 0
        %vm1159 = vcmp.lt.s32.totalorder %v967, 0
        %vm1160 = vcmp.lt.s32.totalorder %v974, 0
        %vm1161 = vcmp.lt.s32.totalorder %v981, 0
        %vm1162 = vcmp.lt.s32.totalorder %v988, 0
        %vm1163 = vcmp.lt.s32.totalorder %v995, 0
        %vm1164 = vcmp.lt.s32.totalorder %v1002, 0
        %vm1165 = vcmp.lt.s32.totalorder %v1009, 0
        %vm1166 = vcmp.lt.s32.totalorder %v1016, 0
        %vm1167 = vcmp.lt.s32.totalorder %v1023, 0
        %vm1168 = vcmp.lt.s32.totalorder %v1030, 0
        %vm1169 = vcmp.lt.s32.totalorder %v1037, 0
        %vm1170 = vcmp.lt.s32.totalorder %v1044, 0
        %vm1171 = vcmp.lt.s32.totalorder %v1051, 0
        %vm1172 = vcmp.lt.s32.totalorder %v1058, 0
        %vm1173 = vcmp.lt.s32.totalorder %v1065, 0
        %vm1174 = vcmp.lt.s32.totalorder %v1072, 0
        %vm1175 = vcmp.lt.s32.totalorder %v1079, 0
        %vm1176 = vcmp.lt.s32.totalorder %v1086, 0
        %vm1177 = vcmp.lt.s32.totalorder %v1093, 0
        %vm1178 = vcmp.lt.s32.totalorder %v1100, 0
        %vm1179 = vcmp.lt.s32.totalorder %v1107, 0
        %vm1180 = vmand %vm1144, %vm1108
        %vm1181 = vmand %vm1145, %vm1109
        %vm1182 = vmand %vm1146, %vm1110
        %vm1183 = vmand %vm1147, %vm1111
        %vm1184 = vmand %vm1148, %vm1112
        %vm1185 = vmand %vm1149, %vm1113
        %vm1186 = vmand %vm1150, %vm1114
        %vm1187 = vmand %vm1151, %vm1115
        %vm1188 = vmand %vm1152, %vm1116
        %vm1189 = vmand %vm1153, %vm1117
        %vm1190 = vmand %vm1154, %vm1118
        %vm1191 = vmand %vm1155, %vm1119
        %vm1192 = vmand %vm1156, %vm1120
        %vm1193 = vmand %vm1157, %vm1121
        %vm1194 = vmand %vm1158, %vm1122
        %vm1195 = vmand %vm1159, %vm1123
        %vm1196 = vmand %vm1160, %vm1124
        %vm1197 = vmand %vm1161, %vm1125
        %vm1198 = vmand %vm1162, %vm1126
        %vm1199 = vmand %vm1163, %vm1127
        %vm1200 = vmand %vm1164, %vm1128
        %vm1201 = vmand %vm1165, %vm1129
        %vm1202 = vmand %vm1166, %vm1130
        %vm1203 = vmand %vm1167, %vm1131
        %vm1204 = vmand %vm1168, %vm1132
        %vm1205 = vmand %vm1169, %vm1133
        %vm1206 = vmand %vm1170, %vm1134
        %vm1207 = vmand %vm1171, %vm1135
        %vm1208 = vmand %vm1172, %vm1136
        %vm1209 = vmand %vm1173, %vm1137
        %vm1210 = vmand %vm1174, %vm1138
        %vm1211 = vmand %vm1175, %vm1139
        %vm1212 = vmand %vm1176, %vm1140
        %vm1213 = vmand %vm1177, %vm1141
        %vm1214 = vmand %vm1178, %vm1142
        %vm1215 = vmand %vm1179, %vm1143
        %v1216 = vadd.s32 %v862, 16
        %v1217 = vadd.s32 %v869, 16
        %v1218 = vadd.s32 %v876, 16
        %v1219 = vadd.s32 %v883, 16
        %v1220 = vadd.s32 %v890, 16
        %v1221 = vadd.s32 %v897, 16
        %v1222 = vadd.s32 %v904, 16
        %v1223 = vadd.s32 %v911, 16
        %v1224 = vadd.s32 %v918, 16
        %v1225 = vadd.s32 %v925, 16
        %v1226 = vadd.s32 %v932, 16
        %v1227 = vadd.s32 %v939, 16
        %v1228 = vadd.s32 %v946, 16
        %v1229 = vadd.s32 %v953, 16
        %v1230 = vadd.s32 %v960, 16
        %v1231 = vadd.s32 %v967, 16
        %v1232 = vadd.s32 %v974, 16
        %v1233 = vadd.s32 %v981, 16
        %v1234 = vadd.s32 %v988, 16
        %v1235 = vadd.s32 %v995, 16
        %v1236 = vadd.s32 %v1002, 16
        %v1237 = vadd.s32 %v1009, 16
        %v1238 = vadd.s32 %v1016, 16
        %v1239 = vadd.s32 %v1023, 16
        %v1240 = vadd.s32 %v1030, 16
        %v1241 = vadd.s32 %v1037, 16
        %v1242 = vadd.s32 %v1044, 16
        %v1243 = vadd.s32 %v1051, 16
        %v1244 = vadd.s32 %v1058, 16
        %v1245 = vadd.s32 %v1065, 16
        %v1246 = vadd.s32 %v1072, 16
        %v1247 = vadd.s32 %v1079, 16
        %v1248 = vadd.s32 %v1086, 16
        %v1249 = vadd.s32 %v1093, 16
        %v1250 = vadd.s32 %v1100, 16
        %v1251 = vadd.s32 %v1107, 16
        %v1252 = vsel %vm1180, %v1216, %v862
        %v1253 = vsel %vm1181, %v1217, %v869
        %v1254 = vsel %vm1182, %v1218, %v876
        %v1255 = vsel %vm1183, %v1219, %v883
        %v1256 = vsel %vm1184, %v1220, %v890
        %v1257 = vsel %vm1185, %v1221, %v897
        %v1258 = vsel %vm1186, %v1222, %v904
        %v1259 = vsel %vm1187, %v1223, %v911
        %v1260 = vsel %vm1188, %v1224, %v918
        %v1261 = vsel %vm1189, %v1225, %v925
        %v1262 = vsel %vm1190, %v1226, %v932
        %v1263 = vsel %vm1191, %v1227, %v939
        %v1264 = vsel %vm1192, %v1228, %v946
        %v1265 = vsel %vm1193, %v1229, %v953
        %v1266 = vsel %vm1194, %v1230, %v960
        %v1267 = vsel %vm1195, %v1231, %v967
        %v1268 = vsel %vm1196, %v1232, %v974
        %v1269 = vsel %vm1197, %v1233, %v981
        %v1270 = vsel %vm1198, %v1234, %v988
        %v1271 = vsel %vm1199, %v1235, %v995
        %v1272 = vsel %vm1200, %v1236, %v1002
        %v1273 = vsel %vm1201, %v1237, %v1009
        %v1274 = vsel %vm1202, %v1238, %v1016
        %v1275 = vsel %vm1203, %v1239, %v1023
        %v1276 = vsel %vm1204, %v1240, %v1030
        %v1277 = vsel %vm1205, %v1241, %v1037
        %v1278 = vsel %vm1206, %v1242, %v1044
        %v1279 = vsel %vm1207, %v1243, %v1051
        %v1280 = vsel %vm1208, %v1244, %v1058
        %v1281 = vsel %vm1209, %v1245, %v1065
        %v1282 = vsel %vm1210, %v1246, %v1072
        %v1283 = vsel %vm1211, %v1247, %v1079
        %v1284 = vsel %vm1212, %v1248, %v1086
        %v1285 = vsel %vm1213, %v1249, %v1093
        %v1286 = vsel %vm1214, %v1250, %v1100
        %v1287 = vsel %vm1215, %v1251, %v1107
        %vm1288 = vcmp.eq.s32.totalorder %v1252, 0
        %vm1289 = vcmp.eq.s32.totalorder %v1253, 0
        %vm1290 = vcmp.eq.s32.totalorder %v1254, 0
        %vm1291 = vcmp.eq.s32.totalorder %v1255, 0
        %vm1292 = vcmp.eq.s32.totalorder %v1256, 0
        %vm1293 = vcmp.eq.s32.totalorder %v1257, 0
        %vm1294 = vcmp.eq.s32.totalorder %v1258, 0
        %vm1295 = vcmp.eq.s32.totalorder %v1259, 0
        %vm1296 = vcmp.eq.s32.totalorder %v1260, 0
        %vm1297 = vcmp.eq.s32.totalorder %v1261, 0
        %vm1298 = vcmp.eq.s32.totalorder %v1262, 0
        %vm1299 = vcmp.eq.s32.totalorder %v1263, 0
        %vm1300 = vcmp.eq.s32.totalorder %v1264, 0
        %vm1301 = vcmp.eq.s32.totalorder %v1265, 0
        %vm1302 = vcmp.eq.s32.totalorder %v1266, 0
        %vm1303 = vcmp.eq.s32.totalorder %v1267, 0
        %vm1304 = vcmp.eq.s32.totalorder %v1268, 0
        %vm1305 = vcmp.eq.s32.totalorder %v1269, 0
        %vm1306 = vcmp.eq.s32.totalorder %v1270, 0
        %vm1307 = vcmp.eq.s32.totalorder %v1271, 0
        %vm1308 = vcmp.eq.s32.totalorder %v1272, 0
        %vm1309 = vcmp.eq.s32.totalorder %v1273, 0
        %vm1310 = vcmp.eq.s32.totalorder %v1274, 0
        %vm1311 = vcmp.eq.s32.totalorder %v1275, 0
        %vm1312 = vcmp.eq.s32.totalorder %v1276, 0
        %vm1313 = vcmp.eq.s32.totalorder %v1277, 0
        %vm1314 = vcmp.eq.s32.totalorder %v1278, 0
        %vm1315 = vcmp.eq.s32.totalorder %v1279, 0
        %vm1316 = vcmp.eq.s32.totalorder %v1280, 0
        %vm1317 = vcmp.eq.s32.totalorder %v1281, 0
        %vm1318 = vcmp.eq.s32.totalorder %v1282, 0
        %vm1319 = vcmp.eq.s32.totalorder %v1283, 0
        %vm1320 = vcmp.eq.s32.totalorder %v1284, 0
        %vm1321 = vcmp.eq.s32.totalorder %v1285, 0
        %vm1322 = vcmp.eq.s32.totalorder %v1286, 0
        %vm1323 = vcmp.eq.s32.totalorder %v1287, 0
        %v1324 = vsel %vm1288, 1, 0
        %v1325 = vsel %vm1289, 1, 0
        %v1326 = vsel %vm1290, 1, 0
        %v1327 = vsel %vm1291, 1, 0
        %v1328 = vsel %vm1292, 1, 0
        %v1329 = vsel %vm1293, 1, 0
        %v1330 = vsel %vm1294, 1, 0
        %v1331 = vsel %vm1295, 1, 0
        %v1332 = vsel %vm1296, 1, 0
        %v1333 = vsel %vm1297, 1, 0
        %v1334 = vsel %vm1298, 1, 0
        %v1335 = vsel %vm1299, 1, 0
        %v1336 = vsel %vm1300, 1, 0
        %v1337 = vsel %vm1301, 1, 0
        %v1338 = vsel %vm1302, 1, 0
        %v1339 = vsel %vm1303, 1, 0
        %v1340 = vsel %vm1304, 1, 0
        %v1341 = vsel %vm1305, 1, 0
        %v1342 = vsel %vm1306, 1, 0
        %v1343 = vsel %vm1307, 1, 0
        %v1344 = vsel %vm1308, 1, 0
        %v1345 = vsel %vm1309, 1, 0
        %v1346 = vsel %vm1310, 1, 0
        %v1347 = vsel %vm1311, 1, 0
        %v1348 = vsel %vm1312, 1, 0
        %v1349 = vsel %vm1313, 1, 0
        %v1350 = vsel %vm1314, 1, 0
        %v1351 = vsel %vm1315, 1, 0
        %v1352 = vsel %vm1316, 1, 0
        %v1353 = vsel %vm1317, 1, 0
        %v1354 = vsel %vm1318, 1, 0
        %v1355 = vsel %vm1319, 1, 0
        %v1356 = vsel %vm1320, 1, 0
        %v1357 = vsel %vm1321, 1, 0
        %v1358 = vsel %vm1322, 1, 0
        %v1359 = vsel %vm1323, 1, 0
        %vm1360 = vcmp.eq.s32.totalorder %v1324, 1
        %vm1361 = vcmp.eq.s32.totalorder %v1325, 1
        %vm1362 = vcmp.eq.s32.totalorder %v1326, 1
        %vm1363 = vcmp.eq.s32.totalorder %v1327, 1
        %vm1364 = vcmp.eq.s32.totalorder %v1328, 1
        %vm1365 = vcmp.eq.s32.totalorder %v1329, 1
        %vm1366 = vcmp.eq.s32.totalorder %v1330, 1
        %vm1367 = vcmp.eq.s32.totalorder %v1331, 1
        %vm1368 = vcmp.eq.s32.totalorder %v1332, 1
        %vm1369 = vcmp.eq.s32.totalorder %v1333, 1
        %vm1370 = vcmp.eq.s32.totalorder %v1334, 1
        %vm1371 = vcmp.eq.s32.totalorder %v1335, 1
        %vm1372 = vcmp.eq.s32.totalorder %v1336, 1
        %vm1373 = vcmp.eq.s32.totalorder %v1337, 1
        %vm1374 = vcmp.eq.s32.totalorder %v1338, 1
        %vm1375 = vcmp.eq.s32.totalorder %v1339, 1
        %vm1376 = vcmp.eq.s32.totalorder %v1340, 1
        %vm1377 = vcmp.eq.s32.totalorder %v1341, 1
        %vm1378 = vcmp.eq.s32.totalorder %v1342, 1
        %vm1379 = vcmp.eq.s32.totalorder %v1343, 1
        %vm1380 = vcmp.eq.s32.totalorder %v1344, 1
        %vm1381 = vcmp.eq.s32.totalorder %v1345, 1
        %vm1382 = vcmp.eq.s32.totalorder %v1346, 1
        %vm1383 = vcmp.eq.s32.totalorder %v1347, 1
        %vm1384 = vcmp.eq.s32.totalorder %v1348, 1
        %vm1385 = vcmp.eq.s32.totalorder %v1349, 1
        %vm1386 = vcmp.eq.s32.totalorder %v1350, 1
        %vm1387 = vcmp.eq.s32.totalorder %v1351, 1
        %vm1388 = vcmp.eq.s32.totalorder %v1352, 1
        %vm1389 = vcmp.eq.s32.totalorder %v1353, 1
        %vm1390 = vcmp.eq.s32.totalorder %v1354, 1
        %vm1391 = vcmp.eq.s32.totalorder %v1355, 1
        %vm1392 = vcmp.eq.s32.totalorder %v1356, 1
        %vm1393 = vcmp.eq.s32.totalorder %v1357, 1
        %vm1394 = vcmp.eq.s32.totalorder %v1358, 1
        %vm1395 = vcmp.eq.s32.totalorder %v1359, 1
        %v1396 = vsel %vm1360, 0.0, %v747
        %v1397 = vsel %vm1361, 0.0, %v748
        %v1398 = vsel %vm1362, 0.0, %v749
        %v1399 = vsel %vm1363, 0.0, %v750
        %v1400 = vsel %vm1364, 0.0, %v751
        %v1401 = vsel %vm1365, 0.0, %v752
        %v1402 = vsel %vm1366, 0.0, %v753
        %v1403 = vsel %vm1367, 0.0, %v754
        %v1404 = vsel %vm1368, 0.0, %v755
        %v1405 = vsel %vm1369, 0.0, %v756
        %v1406 = vsel %vm1370, 0.0, %v757
        %v1407 = vsel %vm1371, 0.0, %v758
        %v1408 = vsel %vm1372, 0.0, %v759
        %v1409 = vsel %vm1373, 0.0, %v760
        %v1410 = vsel %vm1374, 0.0, %v761
        %v1411 = vsel %vm1375, 0.0, %v762
        %v1412 = vsel %vm1376, 0.0, %v763
        %v1413 = vsel %vm1377, 0.0, %v764
        %v1414 = vsel %vm1378, 0.0, %v765
        %v1415 = vsel %vm1379, 0.0, %v766
        %v1416 = vsel %vm1380, 0.0, %v767
        %v1417 = vsel %vm1381, 0.0, %v768
        %v1418 = vsel %vm1382, 0.0, %v769
        %v1419 = vsel %vm1383, 0.0, %v770
        %v1420 = vsel %vm1384, 0.0, %v771
        %v1421 = vsel %vm1385, 0.0, %v772
        %v1422 = vsel %vm1386, 0.0, %v773
        %v1423 = vsel %vm1387, 0.0, %v774
        %v1424 = vsel %vm1388, 0.0, %v775
        %v1425 = vsel %vm1389, 0.0, %v776
        %v1426 = vsel %vm1390, 0.0, %v777
        %v1427 = vsel %vm1391, 0.0, %v778
        %v1428 = vsel %vm1392, 0.0, %v779
        %v1429 = vsel %vm1393, 0.0, %v780
        %v1430 = vsel %vm1394, 0.0, %v781
        %v1431 = vsel %vm1395, 0.0, %v782
        %vm1432 = vcmp.eq.s32.totalorder %v1252, 15
        %vm1433 = vcmp.eq.s32.totalorder %v1253, 15
        %vm1434 = vcmp.eq.s32.totalorder %v1254, 15
        %vm1435 = vcmp.eq.s32.totalorder %v1255, 15
        %vm1436 = vcmp.eq.s32.totalorder %v1256, 15
        %vm1437 = vcmp.eq.s32.totalorder %v1257, 15
        %vm1438 = vcmp.eq.s32.totalorder %v1258, 15
        %vm1439 = vcmp.eq.s32.totalorder %v1259, 15
        %vm1440 = vcmp.eq.s32.totalorder %v1260, 15
        %vm1441 = vcmp.eq.s32.totalorder %v1261, 15
        %vm1442 = vcmp.eq.s32.totalorder %v1262, 15
        %vm1443 = vcmp.eq.s32.totalorder %v1263, 15
        %vm1444 = vcmp.eq.s32.totalorder %v1264, 15
        %vm1445 = vcmp.eq.s32.totalorder %v1265, 15
        %vm1446 = vcmp.eq.s32.totalorder %v1266, 15
        %vm1447 = vcmp.eq.s32.totalorder %v1267, 15
        %vm1448 = vcmp.eq.s32.totalorder %v1268, 15
        %vm1449 = vcmp.eq.s32.totalorder %v1269, 15
        %vm1450 = vcmp.eq.s32.totalorder %v1270, 15
        %vm1451 = vcmp.eq.s32.totalorder %v1271, 15
        %vm1452 = vcmp.eq.s32.totalorder %v1272, 15
        %vm1453 = vcmp.eq.s32.totalorder %v1273, 15
        %vm1454 = vcmp.eq.s32.totalorder %v1274, 15
        %vm1455 = vcmp.eq.s32.totalorder %v1275, 15
        %vm1456 = vcmp.eq.s32.totalorder %v1276, 15
        %vm1457 = vcmp.eq.s32.totalorder %v1277, 15
        %vm1458 = vcmp.eq.s32.totalorder %v1278, 15
        %vm1459 = vcmp.eq.s32.totalorder %v1279, 15
        %vm1460 = vcmp.eq.s32.totalorder %v1280, 15
        %vm1461 = vcmp.eq.s32.totalorder %v1281, 15
        %vm1462 = vcmp.eq.s32.totalorder %v1282, 15
        %vm1463 = vcmp.eq.s32.totalorder %v1283, 15
        %vm1464 = vcmp.eq.s32.totalorder %v1284, 15
        %vm1465 = vcmp.eq.s32.totalorder %v1285, 15
        %vm1466 = vcmp.eq.s32.totalorder %v1286, 15
        %vm1467 = vcmp.eq.s32.totalorder %v1287, 15
        %v1468 = vsel %vm1432, 1, 0
        %v1469 = vsel %vm1433, 1, 0
        %v1470 = vsel %vm1434, 1, 0
        %v1471 = vsel %vm1435, 1, 0
        %v1472 = vsel %vm1436, 1, 0
        %v1473 = vsel %vm1437, 1, 0
        %v1474 = vsel %vm1438, 1, 0
        %v1475 = vsel %vm1439, 1, 0
        %v1476 = vsel %vm1440, 1, 0
        %v1477 = vsel %vm1441, 1, 0
        %v1478 = vsel %vm1442, 1, 0
        %v1479 = vsel %vm1443, 1, 0
        %v1480 = vsel %vm1444, 1, 0
        %v1481 = vsel %vm1445, 1, 0
        %v1482 = vsel %vm1446, 1, 0
        %v1483 = vsel %vm1447, 1, 0
        %v1484 = vsel %vm1448, 1, 0
        %v1485 = vsel %vm1449, 1, 0
        %v1486 = vsel %vm1450, 1, 0
        %v1487 = vsel %vm1451, 1, 0
        %v1488 = vsel %vm1452, 1, 0
        %v1489 = vsel %vm1453, 1, 0
        %v1490 = vsel %vm1454, 1, 0
        %v1491 = vsel %vm1455, 1, 0
        %v1492 = vsel %vm1456, 1, 0
        %v1493 = vsel %vm1457, 1, 0
        %v1494 = vsel %vm1458, 1, 0
        %v1495 = vsel %vm1459, 1, 0
        %v1496 = vsel %vm1460, 1, 0
        %v1497 = vsel %vm1461, 1, 0
        %v1498 = vsel %vm1462, 1, 0
        %v1499 = vsel %vm1463, 1, 0
        %v1500 = vsel %vm1464, 1, 0
        %v1501 = vsel %vm1465, 1, 0
        %v1502 = vsel %vm1466, 1, 0
        %v1503 = vsel %vm1467, 1, 0
        %vm1504 = vcmp.eq.s32.totalorder %v1468, 1
        %vm1505 = vcmp.eq.s32.totalorder %v1469, 1
        %vm1506 = vcmp.eq.s32.totalorder %v1470, 1
        %vm1507 = vcmp.eq.s32.totalorder %v1471, 1
        %vm1508 = vcmp.eq.s32.totalorder %v1472, 1
        %vm1509 = vcmp.eq.s32.totalorder %v1473, 1
        %vm1510 = vcmp.eq.s32.totalorder %v1474, 1
        %vm1511 = vcmp.eq.s32.totalorder %v1475, 1
        %vm1512 = vcmp.eq.s32.totalorder %v1476, 1
        %vm1513 = vcmp.eq.s32.totalorder %v1477, 1
        %vm1514 = vcmp.eq.s32.totalorder %v1478, 1
        %vm1515 = vcmp.eq.s32.totalorder %v1479, 1
        %vm1516 = vcmp.eq.s32.totalorder %v1480, 1
        %vm1517 = vcmp.eq.s32.totalorder %v1481, 1
        %vm1518 = vcmp.eq.s32.totalorder %v1482, 1
        %vm1519 = vcmp.eq.s32.totalorder %v1483, 1
        %vm1520 = vcmp.eq.s32.totalorder %v1484, 1
        %vm1521 = vcmp.eq.s32.totalorder %v1485, 1
        %vm1522 = vcmp.eq.s32.totalorder %v1486, 1
        %vm1523 = vcmp.eq.s32.totalorder %v1487, 1
        %vm1524 = vcmp.eq.s32.totalorder %v1488, 1
        %vm1525 = vcmp.eq.s32.totalorder %v1489, 1
        %vm1526 = vcmp.eq.s32.totalorder %v1490, 1
        %vm1527 = vcmp.eq.s32.totalorder %v1491, 1
        %vm1528 = vcmp.eq.s32.totalorder %v1492, 1
        %vm1529 = vcmp.eq.s32.totalorder %v1493, 1
        %vm1530 = vcmp.eq.s32.totalorder %v1494, 1
        %vm1531 = vcmp.eq.s32.totalorder %v1495, 1
        %vm1532 = vcmp.eq.s32.totalorder %v1496, 1
        %vm1533 = vcmp.eq.s32.totalorder %v1497, 1
        %vm1534 = vcmp.eq.s32.totalorder %v1498, 1
        %vm1535 = vcmp.eq.s32.totalorder %v1499, 1
        %vm1536 = vcmp.eq.s32.totalorder %v1500, 1
        %vm1537 = vcmp.eq.s32.totalorder %v1501, 1
        %vm1538 = vcmp.eq.s32.totalorder %v1502, 1
        %vm1539 = vcmp.eq.s32.totalorder %v1503, 1
        %v1540 = vsel %vm1504, 0.0, %v783
        %v1541 = vsel %vm1505, 0.0, %v784
        %v1542 = vsel %vm1506, 0.0, %v785
        %v1543 = vsel %vm1507, 0.0, %v786
        %v1544 = vsel %vm1508, 0.0, %v787
        %v1545 = vsel %vm1509, 0.0, %v788
        %v1546 = vsel %vm1510, 0.0, %v789
        %v1547 = vsel %vm1511, 0.0, %v790
        %v1548 = vsel %vm1512, 0.0, %v791
        %v1549 = vsel %vm1513, 0.0, %v792
        %v1550 = vsel %vm1514, 0.0, %v793
        %v1551 = vsel %vm1515, 0.0, %v794
        %v1552 = vsel %vm1516, 0.0, %v795
        %v1553 = vsel %vm1517, 0.0, %v796
        %v1554 = vsel %vm1518, 0.0, %v797
        %v1555 = vsel %vm1519, 0.0, %v798
        %v1556 = vsel %vm1520, 0.0, %v799
        %v1557 = vsel %vm1521, 0.0, %v800
        %v1558 = vsel %vm1522, 0.0, %v801
        %v1559 = vsel %vm1523, 0.0, %v802
        %v1560 = vsel %vm1524, 0.0, %v803
        %v1561 = vsel %vm1525, 0.0, %v804
        %v1562 = vsel %vm1526, 0.0, %v805
        %v1563 = vsel %vm1527, 0.0, %v806
        %v1564 = vsel %vm1528, 0.0, %v807
        %v1565 = vsel %vm1529, 0.0, %v808
        %v1566 = vsel %vm1530, 0.0, %v809
        %v1567 = vsel %vm1531, 0.0, %v810
        %v1568 = vsel %vm1532, 0.0, %v811
        %v1569 = vsel %vm1533, 0.0, %v812
        %v1570 = vsel %vm1534, 0.0, %v813
        %v1571 = vsel %vm1535, 0.0, %v814
        %v1572 = vsel %vm1536, 0.0, %v815
        %v1573 = vsel %vm1537, 0.0, %v816
        %v1574 = vsel %vm1538, 0.0, %v817
        %v1575 = vsel %vm1539, 0.0, %v818
        %v1576 = vpack.c.bf16 %v1397, %v1396
        %v1577 = vpack.c.bf16 %v1399, %v1398
        %v1578 = vpack.c.bf16 %v1401, %v1400
        %v1579 = vpack.c.bf16 %v1403, %v1402
        %v1580 = vpack.c.bf16 %v1405, %v1404
        %v1581 = vpack.c.bf16 %v1407, %v1406
        %v1582 = vpack.c.bf16 %v1409, %v1408
        %v1583 = vpack.c.bf16 %v1411, %v1410
        %v1584 = vpack.c.bf16 %v1413, %v1412
        %v1585 = vpack.c.bf16 %v1415, %v1414
        %v1586 = vpack.c.bf16 %v1417, %v1416
        %v1587 = vpack.c.bf16 %v1419, %v1418
        %v1588 = vpack.c.bf16 %v1421, %v1420
        %v1589 = vpack.c.bf16 %v1423, %v1422
        %v1590 = vpack.c.bf16 %v1425, %v1424
        %v1591 = vpack.c.bf16 %v1427, %v1426
        %v1592 = vpack.c.bf16 %v1429, %v1428
        %v1593 = vpack.c.bf16 %v1431, %v1430
        %v1594 = vpack.c.bf16 %v712, %v711
        %v1595 = vpack.c.bf16 %v714, %v713
        %v1596 = vpack.c.bf16 %v716, %v715
        %v1597 = vpack.c.bf16 %v718, %v717
        %v1598 = vpack.c.bf16 %v720, %v719
        %v1599 = vpack.c.bf16 %v722, %v721
        %v1600 = vpack.c.bf16 %v724, %v723
        %v1601 = vpack.c.bf16 %v726, %v725
        %v1602 = vpack.c.bf16 %v728, %v727
        %v1603 = vpack.c.bf16 %v730, %v729
        %v1604 = vpack.c.bf16 %v732, %v731
        %v1605 = vpack.c.bf16 %v734, %v733
        %v1606 = vpack.c.bf16 %v736, %v735
        %v1607 = vpack.c.bf16 %v738, %v737
        %v1608 = vpack.c.bf16 %v740, %v739
        %v1609 = vpack.c.bf16 %v742, %v741
        %v1610 = vpack.c.bf16 %v744, %v743
        %v1611 = vpack.c.bf16 %v746, %v745
        %v1612 = vpack.c.bf16 %v1541, %v1540
        %v1613 = vpack.c.bf16 %v1543, %v1542
        %v1614 = vpack.c.bf16 %v1545, %v1544
        %v1615 = vpack.c.bf16 %v1547, %v1546
        %v1616 = vpack.c.bf16 %v1549, %v1548
        %v1617 = vpack.c.bf16 %v1551, %v1550
        %v1618 = vpack.c.bf16 %v1553, %v1552
        %v1619 = vpack.c.bf16 %v1555, %v1554
        %v1620 = vpack.c.bf16 %v1557, %v1556
        %v1621 = vpack.c.bf16 %v1559, %v1558
        %v1622 = vpack.c.bf16 %v1561, %v1560
        %v1623 = vpack.c.bf16 %v1563, %v1562
        %v1624 = vpack.c.bf16 %v1565, %v1564
        %v1625 = vpack.c.bf16 %v1567, %v1566
        %v1626 = vpack.c.bf16 %v1569, %v1568
        %v1627 = vpack.c.bf16 %v1571, %v1570
        %v1628 = vpack.c.bf16 %v1573, %v1572
        %v1629 = vpack.c.bf16 %v1575, %v1574
        %1648 = vrot.lane.b32.xlu0 %v1594, 32
        %v1649 = vpop.permute.xlu0 %1648
        %1650 = vrot.lane.b32.xlu0 %v1595, 32
        %v1651 = vpop.permute.xlu0 %1650
        %1652 = vrot.lane.b32.xlu0 %v1596, 32
        %v1653 = vpop.permute.xlu0 %1652
        %1654 = vrot.lane.b32.xlu0 %v1597, 32
        %v1655 = vpop.permute.xlu0 %1654
        %1656 = vrot.lane.b32.xlu0 %v1598, 32
        %v1657 = vpop.permute.xlu0 %1656
        %1658 = vrot.lane.b32.xlu0 %v1599, 32
        %v1659 = vpop.permute.xlu0 %1658
        %1660 = vrot.lane.b32.xlu0 %v1600, 32
        %v1661 = vpop.permute.xlu0 %1660
        %1662 = vrot.lane.b32.xlu0 %v1601, 32
        %v1663 = vpop.permute.xlu0 %1662
        %1664 = vrot.lane.b32.xlu0 %v1602, 32
        %v1665 = vpop.permute.xlu0 %1664
        %1666 = vrot.lane.b32.xlu0 %v1603, 32
        %v1667 = vpop.permute.xlu0 %1666
        %1668 = vrot.lane.b32.xlu0 %v1604, 32
        %v1669 = vpop.permute.xlu0 %1668
        %1670 = vrot.lane.b32.xlu0 %v1605, 32
        %v1671 = vpop.permute.xlu0 %1670
        %1672 = vrot.lane.b32.xlu0 %v1606, 32
        %v1673 = vpop.permute.xlu0 %1672
        %1674 = vrot.lane.b32.xlu0 %v1607, 32
        %v1675 = vpop.permute.xlu0 %1674
        %1676 = vrot.lane.b32.xlu0 %v1608, 32
        %v1677 = vpop.permute.xlu0 %1676
        %1678 = vrot.lane.b32.xlu0 %v1609, 32
        %v1679 = vpop.permute.xlu0 %1678
        %1680 = vrot.lane.b32.xlu0 %v1610, 32
        %v1681 = vpop.permute.xlu0 %1680
        %1682 = vrot.lane.b32.xlu0 %v1611, 32
        %v1683 = vpop.permute.xlu0 %1682
        %1702 = vrot.lane.b32.xlu0 %v1612, 64
        %v1703 = vpop.permute.xlu0 %1702
        %1704 = vrot.lane.b32.xlu0 %v1613, 64
        %v1705 = vpop.permute.xlu0 %1704
        %1706 = vrot.lane.b32.xlu0 %v1614, 64
        %v1707 = vpop.permute.xlu0 %1706
        %1708 = vrot.lane.b32.xlu0 %v1615, 64
        %v1709 = vpop.permute.xlu0 %1708
        %1710 = vrot.lane.b32.xlu0 %v1616, 64
        %v1711 = vpop.permute.xlu0 %1710
        %1712 = vrot.lane.b32.xlu0 %v1617, 64
        %v1713 = vpop.permute.xlu0 %1712
        %1714 = vrot.lane.b32.xlu0 %v1618, 64
        %v1715 = vpop.permute.xlu0 %1714
        %1716 = vrot.lane.b32.xlu0 %v1619, 64
        %v1717 = vpop.permute.xlu0 %1716
        %1718 = vrot.lane.b32.xlu0 %v1620, 64
        %v1719 = vpop.permute.xlu0 %1718
        %1720 = vrot.lane.b32.xlu0 %v1621, 64
        %v1721 = vpop.permute.xlu0 %1720
        %1722 = vrot.lane.b32.xlu0 %v1622, 64
        %v1723 = vpop.permute.xlu0 %1722
        %1724 = vrot.lane.b32.xlu0 %v1623, 64
        %v1725 = vpop.permute.xlu0 %1724
        %1726 = vrot.lane.b32.xlu0 %v1624, 64
        %v1727 = vpop.permute.xlu0 %1726
        %1728 = vrot.lane.b32.xlu0 %v1625, 64
        %v1729 = vpop.permute.xlu0 %1728
        %1730 = vrot.lane.b32.xlu0 %v1626, 64
        %v1731 = vpop.permute.xlu0 %1730
        %1732 = vrot.lane.b32.xlu0 %v1627, 64
        %v1733 = vpop.permute.xlu0 %1732
        %1734 = vrot.lane.b32.xlu0 %v1628, 64
        %v1735 = vpop.permute.xlu0 %1734
        %1736 = vrot.lane.b32.xlu0 %v1629, 64
        %v1737 = vpop.permute.xlu0 %1736
        %v1740 = vsel %vm670, %v1576, %v1649
        %v1743 = vsel %vm670, %v1577, %v1651
        %v1746 = vsel %vm670, %v1578, %v1653
        %v1749 = vsel %vm670, %v1579, %v1655
        %v1752 = vsel %vm670, %v1580, %v1657
        %v1755 = vsel %vm670, %v1581, %v1659
        %v1758 = vsel %vm670, %v1582, %v1661
        %v1761 = vsel %vm670, %v1583, %v1663
        %v1764 = vsel %vm670, %v1584, %v1665
        %v1767 = vsel %vm670, %v1585, %v1667
        %v1770 = vsel %vm670, %v1586, %v1669
        %v1773 = vsel %vm670, %v1587, %v1671
        %v1776 = vsel %vm670, %v1588, %v1673
        %v1779 = vsel %vm670, %v1589, %v1675
        %v1782 = vsel %vm670, %v1590, %v1677
        %v1785 = vsel %vm670, %v1591, %v1679
        %v1788 = vsel %vm670, %v1592, %v1681
        %v1791 = vsel %vm670, %v1593, %v1683
        %vm1792 = vcmask 523264
        %v1794 = vsel %vm1792, %v1740, %v1703
        %v1796 = vsel %vm1792, %v1743, %v1705
        %v1798 = vsel %vm1792, %v1746, %v1707
        %v1800 = vsel %vm1792, %v1749, %v1709
        %v1802 = vsel %vm1792, %v1752, %v1711
        %v1804 = vsel %vm1792, %v1755, %v1713
        %v1806 = vsel %vm1792, %v1758, %v1715
        %v1808 = vsel %vm1792, %v1761, %v1717
        %v1810 = vsel %vm1792, %v1764, %v1719
        %v1812 = vsel %vm1792, %v1767, %v1721
        %v1814 = vsel %vm1792, %v1770, %v1723
        %v1816 = vsel %vm1792, %v1773, %v1725
        %v1818 = vsel %vm1792, %v1776, %v1727
        %v1820 = vsel %vm1792, %v1779, %v1729
        %v1822 = vsel %vm1792, %v1782, %v1731
        %v1824 = vsel %vm1792, %v1785, %v1733
        %v1826 = vsel %vm1792, %v1788, %v1735
        %v1828 = vsel %vm1792, %v1791, %v1737
        %v1829 = vld [vmem:[%s2] sm:$0xf]
        %v1830 = vld [vmem:[%s2 + $0x4] sm:$0xf]
        %v1831 = vld [vmem:[%s2 + $0x8] sm:$0xf]
        %v1832 = vld [vmem:[%s2 + $0xc] sm:$0xf]
        %v1833 = vld [vmem:[%s2 + $0x10] sm:$0xf]
        %v1834 = vld [vmem:[%s2 + $0x14] sm:$0xf]
        %v1835 = vld [vmem:[%s2 + $0x18] sm:$0xf]
        %v1836 = vld [vmem:[%s2 + $0x1c] sm:$0xf]
        %v1837 = vld [vmem:[%s2 + $0x20] sm:$0xf]
        %v1838 = vld [vmem:[%s2 + $0x24] sm:$0xf]
        %v1839 = vld [vmem:[%s2 + $0x28] sm:$0xf]
        %v1840 = vld [vmem:[%s2 + $0x2c] sm:$0xf]
        %s1841 = scalar_lea.vmem %s2, 48
        %v1842 = vld [vmem:[%s1841] sm:$0xf]
        %v1843 = vld [vmem:[%s1841 + $0x4] sm:$0xf]
        %v1844 = vld [vmem:[%s1841 + $0x8] sm:$0xf]
        %v1845 = vld [vmem:[%s1841 + $0xc] sm:$0xf]
        %v1846 = vld [vmem:[%s1841 + $0x10] sm:$0xf]
        %v1847 = vld [vmem:[%s1841 + $0x14] sm:$0xf]
        %v1848 = vld [vmem:[%s1841 + $0x18] sm:$0xf]
        %v1849 = vld [vmem:[%s1841 + $0x1c] sm:$0xf]
        %v1850 = vld [vmem:[%s1841 + $0x20] sm:$0xf]
        %v1851 = vld [vmem:[%s1841 + $0x24] sm:$0xf]
        %v1852 = vld [vmem:[%s1841 + $0x28] sm:$0xf]
        %v1853 = vld [vmem:[%s1841 + $0x2c] sm:$0xf]
        %v1866 = vunpack.c.l.b16 %v1842
        %v1867 = vunpack.c.l.b16 %v1843
        %v1868 = vunpack.c.l.b16 %v1844
        %v1869 = vunpack.c.l.b16 %v1845
        %v1870 = vunpack.c.l.b16 %v1846
        %v1871 = vunpack.c.l.b16 %v1847
        %v1872 = vunpack.c.l.b16 %v1848
        %v1873 = vunpack.c.l.b16 %v1849
        %v1874 = vunpack.c.l.b16 %v1850
        %v1875 = vunpack.c.l.b16 %v1851
        %v1876 = vunpack.c.l.b16 %v1852
        %v1877 = vunpack.c.l.b16 %v1853
        %v1878 = vpack.c.b16 %v1867, %v1866
        %v1879 = vpack.c.b16 %v1869, %v1868
        %v1880 = vpack.c.b16 %v1871, %v1870
        %v1881 = vpack.c.b16 %v1873, %v1872
        %v1882 = vpack.c.b16 %v1875, %v1874
        %v1883 = vpack.c.b16 %v1877, %v1876
        %vm1890 = vcmask 785408
        %v1891 = vsel %vm1890, %v1796, 0
        %v1893 = vsel %vm1890, %v1798, 0
        %v1895 = vsel %vm1890, %v1800, 0
        %v1897 = vsel %vm1890, %v1802, 0
        %v1899 = vsel %vm1890, %v1804, 0
        %v1901 = vsel %vm1890, %v1806, 0
        %v1903 = vsel %vm1890, %v1808, 0
        %v1905 = vsel %vm1890, %v1810, 0
        %v1907 = vsel %vm1890, %v1812, 0
        %v1909 = vsel %vm1890, %v1814, 0
        %v1911 = vsel %vm1890, %v1816, 0
        %v1913 = vsel %vm1890, %v1818, 0
        %v1915 = vsel %vm1890, %v1820, 0
        %v1917 = vsel %vm1890, %v1822, 0
        %v1919 = vsel %vm1890, %v1824, 0
        %v1921 = vsel %vm1890, %v1826, 0
        %1923 = vmatprep.subr.bf16.mxu0 0
        %1924 = vmatpush1.bf16.msra.mxu0 %v1878
        %1925 = vmatprep.subr.bf16.mxu0 0
        %1926 = vmatpush1.bf16.msra.mxu0 %v1879
        %1927 = vmatprep.subr.bf16.mxu0 0
        %1928 = vmatpush1.bf16.msra.mxu0 %v1880
        %1929 = vmatprep.subr.bf16.mxu0 0
        %1930 = vmatpush1.bf16.msra.mxu0 %v1881
        %1931 = vmatprep.subr.bf16.mxu0 0
        %1932 = vmatpush1.bf16.msra.mxu0 %v1882
        %1933 = vmatprep.subr.bf16.mxu0 0
        %1934 = vmatpush1.bf16.msra.mxu0 %v1883
        %1935 = vmatprep.subr.bf16.mxu0 0
        %1936 = vmatpush1.bf16.msra.mxu0 0
        %1937 = vmatprep.subr.bf16.mxu0 0
        %1938 = vmatpush1.bf16.msra.mxu0 0
        %1939 = vmatprep.subr.bf16.mxu0 0
        %1940 = vmatpush1.bf16.msra.mxu0 0
        %1941 = vmatprep.subr.bf16.mxu0 0
        %1942 = vmatpush1.bf16.msra.mxu0 0
        %1943 = vmatprep.subr.bf16.mxu0 0
        %1944 = vmatpush1.bf16.msra.mxu0 0
        %1945 = vmatprep.subr.bf16.mxu0 0
        %1946 = vmatpush1.bf16.msra.mxu0 0
        %1947 = vmatprep.subr.bf16.mxu0 0
        %1948 = vmatpush1.bf16.msra.mxu0 0
        %1949 = vmatprep.subr.bf16.mxu0 0
        %1950 = vmatpush1.bf16.msra.mxu0 0
        %1951 = vmatprep.subr.bf16.mxu0 0
        %1952 = vmatpush1.bf16.msra.mxu0 0
        %1953 = vmatprep.subr.bf16.mxu0 0
        %1954 = vmatpush1.bf16.msra.mxu0 0
        %1955 = vmatprep.mubr.bf16.mxu0 0
        %1956 = vmatmul.mubr.bf16.gmra.mrb[0].mxu0 %v1891
        %v1957 = vpop.f32.mrb[0].mxu0
        %v1958 = vadd.f32 0.0, %v1957
        %v1959 = vpop.f32.mrb[0].mxu0
        %v1960 = vpop.f32.mrb[0].mxu0
        %v1961 = vadd.f32 0.0, %v1960
        %v1962 = vpop.f32.mrb[0].mxu0
        %1963 = vmatprep.mubr.bf16.mxu0 0
        %1964 = vmatmul.mubr.bf16.gmra.mrb[0].mxu0 %v1893
        %v1965 = vpop.f32.mrb[0].mxu0
        %v1966 = vadd.f32 0.0, %v1965
        %v1967 = vpop.f32.mrb[0].mxu0
        %v1968 = vpop.f32.mrb[0].mxu0
        %v1969 = vadd.f32 0.0, %v1968
        %v1970 = vpop.f32.mrb[0].mxu0
        %1971 = vmatprep.mubr.bf16.mxu0 0
        %1972 = vmatmul.mubr.bf16.gmra.mrb[0].mxu0 %v1895
        %v1973 = vpop.f32.mrb[0].mxu0
        %v1974 = vadd.f32 0.0, %v1973
        %v1975 = vpop.f32.mrb[0].mxu0
        %v1976 = vpop.f32.mrb[0].mxu0
        %v1977 = vadd.f32 0.0, %v1976
        %v1978 = vpop.f32.mrb[0].mxu0
        %1979 = vmatprep.mubr.bf16.mxu0 0
        %1980 = vmatmul.mubr.bf16.gmra.mrb[0].mxu0 %v1897
        %v1981 = vpop.f32.mrb[0].mxu0
        %v1982 = vadd.f32 0.0, %v1981
        %v1983 = vpop.f32.mrb[0].mxu0
        %v1984 = vpop.f32.mrb[0].mxu0
        %v1985 = vadd.f32 0.0, %v1984
        %v1986 = vpop.f32.mrb[0].mxu0
        %1987 = vmatprep.mubr.bf16.mxu0 0
        %1988 = vmatmul.mubr.bf16.gmra.mrb[0].mxu0 %v1899
        %v1989 = vpop.f32.mrb[0].mxu0
        %v1990 = vadd.f32 0.0, %v1989
        %v1991 = vpop.f32.mrb[0].mxu0
        %v1992 = vpop.f32.mrb[0].mxu0
        %v1993 = vadd.f32 0.0, %v1992
        %v1994 = vpop.f32.mrb[0].mxu0
        %1995 = vmatprep.mubr.bf16.mxu0 0
        %1996 = vmatmul.mubr.bf16.gmra.mrb[0].mxu0 %v1901
        %v1997 = vpop.f32.mrb[0].mxu0
        %v1998 = vadd.f32 0.0, %v1997
        %v1999 = vpop.f32.mrb[0].mxu0
        %v2000 = vpop.f32.mrb[0].mxu0
        %v2001 = vadd.f32 0.0, %v2000
        %v2002 = vpop.f32.mrb[0].mxu0
        %2003 = vmatprep.mubr.bf16.mxu0 0
        %2004 = vmatmul.mubr.bf16.gmra.mrb[0].mxu0 %v1903
        %v2005 = vpop.f32.mrb[0].mxu0
        %v2006 = vadd.f32 0.0, %v2005
        %v2007 = vpop.f32.mrb[0].mxu0
        %v2008 = vpop.f32.mrb[0].mxu0
        %v2009 = vadd.f32 0.0, %v2008
        %v2010 = vpop.f32.mrb[0].mxu0
        %2011 = vmatprep.mubr.bf16.mxu0 0
        %2012 = vmatmul.mubr.bf16.gmra.mrb[0].mxu0 %v1905
        %v2013 = vpop.f32.mrb[0].mxu0
        %v2014 = vadd.f32 0.0, %v2013
        %v2015 = vpop.f32.mrb[0].mxu0
        %v2016 = vpop.f32.mrb[0].mxu0
        %v2017 = vadd.f32 0.0, %v2016
        %v2018 = vpop.f32.mrb[0].mxu0
        %2019 = vmatprep.mubr.bf16.mxu0 0
        %2020 = vmatmul.mubr.bf16.gmra.mrb[0].mxu0 %v1907
        %v2021 = vpop.f32.mrb[0].mxu0
        %v2022 = vadd.f32 0.0, %v2021
        %v2023 = vpop.f32.mrb[0].mxu0
        %v2024 = vpop.f32.mrb[0].mxu0
        %v2025 = vadd.f32 0.0, %v2024
        %v2026 = vpop.f32.mrb[0].mxu0
        %2027 = vmatprep.mubr.bf16.mxu0 0
        %2028 = vmatmul.mubr.bf16.gmra.mrb[0].mxu0 %v1909
        %v2029 = vpop.f32.mrb[0].mxu0
        %v2030 = vadd.f32 0.0, %v2029
        %v2031 = vpop.f32.mrb[0].mxu0
        %v2032 = vpop.f32.mrb[0].mxu0
        %v2033 = vadd.f32 0.0, %v2032
        %v2034 = vpop.f32.mrb[0].mxu0
        %2035 = vmatprep.mubr.bf16.mxu0 0
        %2036 = vmatmul.mubr.bf16.gmra.mrb[0].mxu0 %v1911
        %v2037 = vpop.f32.mrb[0].mxu0
        %v2038 = vadd.f32 0.0, %v2037
        %v2039 = vpop.f32.mrb[0].mxu0
        %v2040 = vpop.f32.mrb[0].mxu0
        %v2041 = vadd.f32 0.0, %v2040
        %v2042 = vpop.f32.mrb[0].mxu0
        %2043 = vmatprep.mubr.bf16.mxu0 0
        %2044 = vmatmul.mubr.bf16.gmra.mrb[0].mxu0 %v1913
        %v2045 = vpop.f32.mrb[0].mxu0
        %v2046 = vadd.f32 0.0, %v2045
        %v2047 = vpop.f32.mrb[0].mxu0
        %v2048 = vpop.f32.mrb[0].mxu0
        %v2049 = vadd.f32 0.0, %v2048
        %v2050 = vpop.f32.mrb[0].mxu0
        %2051 = vmatprep.mubr.bf16.mxu0 0
        %2052 = vmatmul.mubr.bf16.gmra.mrb[0].mxu0 %v1915
        %v2053 = vpop.f32.mrb[0].mxu0
        %v2054 = vadd.f32 0.0, %v2053
        %v2055 = vpop.f32.mrb[0].mxu0
        %v2056 = vpop.f32.mrb[0].mxu0
        %v2057 = vadd.f32 0.0, %v2056
        %v2058 = vpop.f32.mrb[0].mxu0
        %2059 = vmatprep.mubr.bf16.mxu0 0
        %2060 = vmatmul.mubr.bf16.gmra.mrb[0].mxu0 %v1917
        %v2061 = vpop.f32.mrb[0].mxu0
        %v2062 = vadd.f32 0.0, %v2061
        %v2063 = vpop.f32.mrb[0].mxu0
        %v2064 = vpop.f32.mrb[0].mxu0
        %v2065 = vadd.f32 0.0, %v2064
        %v2066 = vpop.f32.mrb[0].mxu0
        %2067 = vmatprep.mubr.bf16.mxu0 0
        %2068 = vmatmul.mubr.bf16.gmra.mrb[0].mxu0 %v1919
        %v2069 = vpop.f32.mrb[0].mxu0
        %v2070 = vadd.f32 0.0, %v2069
        %v2071 = vpop.f32.mrb[0].mxu0
        %v2072 = vpop.f32.mrb[0].mxu0
        %v2073 = vadd.f32 0.0, %v2072
        %v2074 = vpop.f32.mrb[0].mxu0
        %2075 = vmatprep.mubr.bf16.mxu0 0
        %2076 = vmatmul.mubr.bf16.gmra.mrb[0].mxu0 %v1921
        %v2077 = vpop.f32.mrb[0].mxu0
        %v2078 = vadd.f32 0.0, %v2077
        %v2079 = vpop.f32.mrb[0].mxu0
        %v2080 = vpop.f32.mrb[0].mxu0
        %v2081 = vadd.f32 0.0, %v2080
        %v2082 = vpop.f32.mrb[0].mxu0
        %2083 = vdwg.mxu0
        %v2096 = vunpack.c.l.b16 %v1829
        %v2097 = vunpack.c.l.b16 %v1830
        %v2098 = vunpack.c.l.b16 %v1831
        %v2099 = vunpack.c.l.b16 %v1832
        %v2100 = vunpack.c.l.b16 %v1833
        %v2101 = vunpack.c.l.b16 %v1834
        %v2102 = vunpack.c.l.b16 %v1835
        %v2103 = vunpack.c.l.b16 %v1836
        %v2104 = vunpack.c.l.b16 %v1837
        %v2105 = vunpack.c.l.b16 %v1838
        %v2106 = vunpack.c.l.b16 %v1839
        %v2107 = vunpack.c.l.b16 %v1840
        %v2108 = vpack.c.b16 %v2097, %v2096
        %v2109 = vpack.c.b16 %v2099, %v2098
        %v2110 = vpack.c.b16 %v2101, %v2100
        %v2111 = vpack.c.b16 %v2103, %v2102
        %v2112 = vpack.c.b16 %v2105, %v2104
        %v2113 = vpack.c.b16 %v2107, %v2106
        %v2120 = vsel %vm1890, %v1794, 0
        %2122 = vmatprep.subr.bf16.mxu0 0
        %2123 = vmatpush1.bf16.msra.mxu0 %v2108
        %2124 = vmatprep.subr.bf16.mxu0 0
        %2125 = vmatpush1.bf16.msra.mxu0 %v2109
        %2126 = vmatprep.subr.bf16.mxu0 0
        %2127 = vmatpush1.bf16.msra.mxu0 %v2110
        %2128 = vmatprep.subr.bf16.mxu0 0
        %2129 = vmatpush1.bf16.msra.mxu0 %v2111
        %2130 = vmatprep.subr.bf16.mxu0 0
        %2131 = vmatpush1.bf16.msra.mxu0 %v2112
        %2132 = vmatprep.subr.bf16.mxu0 0
        %2133 = vmatpush1.bf16.msra.mxu0 %v2113
        %2134 = vmatprep.subr.bf16.mxu0 0
        %2135 = vmatpush1.bf16.msra.mxu0 0
        %2136 = vmatprep.subr.bf16.mxu0 0
        %2137 = vmatpush1.bf16.msra.mxu0 0
        %2138 = vmatprep.subr.bf16.mxu0 0
        %2139 = vmatpush1.bf16.msra.mxu0 0
        %2140 = vmatprep.subr.bf16.mxu0 0
        %2141 = vmatpush1.bf16.msra.mxu0 0
        %2142 = vmatprep.subr.bf16.mxu0 0
        %2143 = vmatpush1.bf16.msra.mxu0 0
        %2144 = vmatprep.subr.bf16.mxu0 0
        %2145 = vmatpush1.bf16.msra.mxu0 0
        %2146 = vmatprep.subr.bf16.mxu0 0
        %2147 = vmatpush1.bf16.msra.mxu0 0
        %2148 = vmatprep.subr.bf16.mxu0 0
        %2149 = vmatpush1.bf16.msra.mxu0 0
        %2150 = vmatprep.subr.bf16.mxu0 0
        %2151 = vmatpush1.bf16.msra.mxu0 0
        %2152 = vmatprep.subr.bf16.mxu0 0
        %2153 = vmatpush1.bf16.msra.mxu0 0
        %2154 = vmatprep.mubr.bf16.mxu0 0
        %2155 = vmatmul.mubr.bf16.gmra.mrb[0].mxu0 %v2120
        %v2156 = vpop.f32.mrb[0].mxu0
        %v2157 = vadd.f32 %v1958, %v2156
        %v2158 = vpop.f32.mrb[0].mxu0
        %v2159 = vpop.f32.mrb[0].mxu0
        %v2160 = vadd.f32 %v1961, %v2159
        %v2161 = vpop.f32.mrb[0].mxu0
        %2162 = vmatprep.mubr.bf16.mxu0 0
        %2163 = vmatmul.mubr.bf16.gmra.mrb[0].mxu0 %v1891
        %v2164 = vpop.f32.mrb[0].mxu0
        %v2165 = vadd.f32 %v1966, %v2164
        %v2166 = vpop.f32.mrb[0].mxu0
        %v2167 = vpop.f32.mrb[0].mxu0
        %v2168 = vadd.f32 %v1969, %v2167
        %v2169 = vpop.f32.mrb[0].mxu0
        %2170 = vmatprep.mubr.bf16.mxu0 0
        %2171 = vmatmul.mubr.bf16.gmra.mrb[0].mxu0 %v1893
        %v2172 = vpop.f32.mrb[0].mxu0
        %v2173 = vadd.f32 %v1974, %v2172
        %v2174 = vpop.f32.mrb[0].mxu0
        %v2175 = vpop.f32.mrb[0].mxu0
        %v2176 = vadd.f32 %v1977, %v2175
        %v2177 = vpop.f32.mrb[0].mxu0
        %2178 = vmatprep.mubr.bf16.mxu0 0
        %2179 = vmatmul.mubr.bf16.gmra.mrb[0].mxu0 %v1895
        %v2180 = vpop.f32.mrb[0].mxu0
        %v2181 = vadd.f32 %v1982, %v2180
        %v2182 = vpop.f32.mrb[0].mxu0
        %v2183 = vpop.f32.mrb[0].mxu0
        %v2184 = vadd.f32 %v1985, %v2183
        %v2185 = vpop.f32.mrb[0].mxu0
        %2186 = vmatprep.mubr.bf16.mxu0 0
        %2187 = vmatmul.mubr.bf16.gmra.mrb[0].mxu0 %v1897
        %v2188 = vpop.f32.mrb[0].mxu0
        %v2189 = vadd.f32 %v1990, %v2188
        %v2190 = vpop.f32.mrb[0].mxu0
        %v2191 = vpop.f32.mrb[0].mxu0
        %v2192 = vadd.f32 %v1993, %v2191
        %v2193 = vpop.f32.mrb[0].mxu0
        %2194 = vmatprep.mubr.bf16.mxu0 0
        %2195 = vmatmul.mubr.bf16.gmra.mrb[0].mxu0 %v1899
        %v2196 = vpop.f32.mrb[0].mxu0
        %v2197 = vadd.f32 %v1998, %v2196
        %v2198 = vpop.f32.mrb[0].mxu0
        %v2199 = vpop.f32.mrb[0].mxu0
        %v2200 = vadd.f32 %v2001, %v2199
        %v2201 = vpop.f32.mrb[0].mxu0
        %2202 = vmatprep.mubr.bf16.mxu0 0
        %2203 = vmatmul.mubr.bf16.gmra.mrb[0].mxu0 %v1901
        %v2204 = vpop.f32.mrb[0].mxu0
        %v2205 = vadd.f32 %v2006, %v2204
        %v2206 = vpop.f32.mrb[0].mxu0
        %v2207 = vpop.f32.mrb[0].mxu0
        %v2208 = vadd.f32 %v2009, %v2207
        %v2209 = vpop.f32.mrb[0].mxu0
        %2210 = vmatprep.mubr.bf16.mxu0 0
        %2211 = vmatmul.mubr.bf16.gmra.mrb[0].mxu0 %v1903
        %v2212 = vpop.f32.mrb[0].mxu0
        %v2213 = vadd.f32 %v2014, %v2212
        %v2214 = vpop.f32.mrb[0].mxu0
        %v2215 = vpop.f32.mrb[0].mxu0
        %v2216 = vadd.f32 %v2017, %v2215
        %v2217 = vpop.f32.mrb[0].mxu0
        %2218 = vmatprep.mubr.bf16.mxu0 0
        %2219 = vmatmul.mubr.bf16.gmra.mrb[0].mxu0 %v1905
        %v2220 = vpop.f32.mrb[0].mxu0
        %v2221 = vadd.f32 %v2022, %v2220
        %v2222 = vpop.f32.mrb[0].mxu0
        %v2223 = vpop.f32.mrb[0].mxu0
        %v2224 = vadd.f32 %v2025, %v2223
        %v2225 = vpop.f32.mrb[0].mxu0
        %2226 = vmatprep.mubr.bf16.mxu0 0
        %2227 = vmatmul.mubr.bf16.gmra.mrb[0].mxu0 %v1907
        %v2228 = vpop.f32.mrb[0].mxu0
        %v2229 = vadd.f32 %v2030, %v2228
        %v2230 = vpop.f32.mrb[0].mxu0
        %v2231 = vpop.f32.mrb[0].mxu0
        %v2232 = vadd.f32 %v2033, %v2231
        %v2233 = vpop.f32.mrb[0].mxu0
        %2234 = vmatprep.mubr.bf16.mxu0 0
        %2235 = vmatmul.mubr.bf16.gmra.mrb[0].mxu0 %v1909
        %v2236 = vpop.f32.mrb[0].mxu0
        %v2237 = vadd.f32 %v2038, %v2236
        %v2238 = vpop.f32.mrb[0].mxu0
        %v2239 = vpop.f32.mrb[0].mxu0
        %v2240 = vadd.f32 %v2041, %v2239
        %v2241 = vpop.f32.mrb[0].mxu0
        %2242 = vmatprep.mubr.bf16.mxu0 0
        %2243 = vmatmul.mubr.bf16.gmra.mrb[0].mxu0 %v1911
        %v2244 = vpop.f32.mrb[0].mxu0
        %v2245 = vadd.f32 %v2046, %v2244
        %v2246 = vpop.f32.mrb[0].mxu0
        %v2247 = vpop.f32.mrb[0].mxu0
        %v2248 = vadd.f32 %v2049, %v2247
        %v2249 = vpop.f32.mrb[0].mxu0
        %2250 = vmatprep.mubr.bf16.mxu0 0
        %2251 = vmatmul.mubr.bf16.gmra.mrb[0].mxu0 %v1913
        %v2252 = vpop.f32.mrb[0].mxu0
        %v2253 = vadd.f32 %v2054, %v2252
        %v2254 = vpop.f32.mrb[0].mxu0
        %v2255 = vpop.f32.mrb[0].mxu0
        %v2256 = vadd.f32 %v2057, %v2255
        %v2257 = vpop.f32.mrb[0].mxu0
        %2258 = vmatprep.mubr.bf16.mxu0 0
        %2259 = vmatmul.mubr.bf16.gmra.mrb[0].mxu0 %v1915
        %v2260 = vpop.f32.mrb[0].mxu0
        %v2261 = vadd.f32 %v2062, %v2260
        %v2262 = vpop.f32.mrb[0].mxu0
        %v2263 = vpop.f32.mrb[0].mxu0
        %v2264 = vadd.f32 %v2065, %v2263
        %v2265 = vpop.f32.mrb[0].mxu0
        %2266 = vmatprep.mubr.bf16.mxu0 0
        %2267 = vmatmul.mubr.bf16.gmra.mrb[0].mxu0 %v1917
        %v2268 = vpop.f32.mrb[0].mxu0
        %v2269 = vadd.f32 %v2070, %v2268
        %v2270 = vpop.f32.mrb[0].mxu0
        %v2271 = vpop.f32.mrb[0].mxu0
        %v2272 = vadd.f32 %v2073, %v2271
        %v2273 = vpop.f32.mrb[0].mxu0
        %2274 = vmatprep.mubr.bf16.mxu0 0
        %2275 = vmatmul.mubr.bf16.gmra.mrb[0].mxu0 %v1919
        %v2276 = vpop.f32.mrb[0].mxu0
        %v2277 = vadd.f32 %v2078, %v2276
        %v2278 = vpop.f32.mrb[0].mxu0
        %v2279 = vpop.f32.mrb[0].mxu0
        %v2280 = vadd.f32 %v2081, %v2279
        %v2281 = vpop.f32.mrb[0].mxu0
        %2282 = vdwg.mxu0
        %s2283 = scalar_lea.vmem %s2, 96
        %v2284 = vld [vmem:[%s2283] sm:$0xf]
        %v2285 = vld [vmem:[%s2283 + $0x4] sm:$0xf]
        %v2286 = vld [vmem:[%s2283 + $0x8] sm:$0xf]
        %v2287 = vld [vmem:[%s2283 + $0xc] sm:$0xf]
        %v2288 = vld [vmem:[%s2283 + $0x10] sm:$0xf]
        %v2289 = vld [vmem:[%s2283 + $0x14] sm:$0xf]
        %v2290 = vld [vmem:[%s2283 + $0x18] sm:$0xf]
        %v2291 = vld [vmem:[%s2283 + $0x1c] sm:$0xf]
        %v2292 = vld [vmem:[%s2283 + $0x20] sm:$0xf]
        %v2293 = vld [vmem:[%s2283 + $0x24] sm:$0xf]
        %v2294 = vld [vmem:[%s2283 + $0x28] sm:$0xf]
        %v2295 = vld [vmem:[%s2283 + $0x2c] sm:$0xf]
        %v2308 = vunpack.c.l.b16 %v2284
        %v2309 = vunpack.c.l.b16 %v2285
        %v2310 = vunpack.c.l.b16 %v2286
        %v2311 = vunpack.c.l.b16 %v2287
        %v2312 = vunpack.c.l.b16 %v2288
        %v2313 = vunpack.c.l.b16 %v2289
        %v2314 = vunpack.c.l.b16 %v2290
        %v2315 = vunpack.c.l.b16 %v2291
        %v2316 = vunpack.c.l.b16 %v2292
        %v2317 = vunpack.c.l.b16 %v2293
        %v2318 = vunpack.c.l.b16 %v2294
        %v2319 = vunpack.c.l.b16 %v2295
        %v2320 = vpack.c.b16 %v2309, %v2308
        %v2321 = vpack.c.b16 %v2311, %v2310
        %v2322 = vpack.c.b16 %v2313, %v2312
        %v2323 = vpack.c.b16 %v2315, %v2314
        %v2324 = vpack.c.b16 %v2317, %v2316
        %v2325 = vpack.c.b16 %v2319, %v2318
        %v2332 = vsel %vm1890, %v1828, 0
        %2334 = vmatprep.subr.bf16.mxu0 0
        %2335 = vmatpush1.bf16.msra.mxu0 %v2320
        %2336 = vmatprep.subr.bf16.mxu0 0
        %2337 = vmatpush1.bf16.msra.mxu0 %v2321
        %2338 = vmatprep.subr.bf16.mxu0 0
        %2339 = vmatpush1.bf16.msra.mxu0 %v2322
        %2340 = vmatprep.subr.bf16.mxu0 0
        %2341 = vmatpush1.bf16.msra.mxu0 %v2323
        %2342 = vmatprep.subr.bf16.mxu0 0
        %2343 = vmatpush1.bf16.msra.mxu0 %v2324
        %2344 = vmatprep.subr.bf16.mxu0 0
        %2345 = vmatpush1.bf16.msra.mxu0 %v2325
        %2346 = vmatprep.subr.bf16.mxu0 0
        %2347 = vmatpush1.bf16.msra.mxu0 0
        %2348 = vmatprep.subr.bf16.mxu0 0
        %2349 = vmatpush1.bf16.msra.mxu0 0
        %2350 = vmatprep.subr.bf16.mxu0 0
        %2351 = vmatpush1.bf16.msra.mxu0 0
        %2352 = vmatprep.subr.bf16.mxu0 0
        %2353 = vmatpush1.bf16.msra.mxu0 0
        %2354 = vmatprep.subr.bf16.mxu0 0
        %2355 = vmatpush1.bf16.msra.mxu0 0
        %2356 = vmatprep.subr.bf16.mxu0 0
        %2357 = vmatpush1.bf16.msra.mxu0 0
        %2358 = vmatprep.subr.bf16.mxu0 0
        %2359 = vmatpush1.bf16.msra.mxu0 0
        %2360 = vmatprep.subr.bf16.mxu0 0
        %2361 = vmatpush1.bf16.msra.mxu0 0
        %2362 = vmatprep.subr.bf16.mxu0 0
        %2363 = vmatpush1.bf16.msra.mxu0 0
        %2364 = vmatprep.subr.bf16.mxu0 0
        %2365 = vmatpush1.bf16.msra.mxu0 0
        %2366 = vmatprep.mubr.bf16.mxu0 0
        %2367 = vmatmul.mubr.bf16.gmra.mrb[0].mxu0 %v1893
        %v2368 = vpop.f32.mrb[0].mxu0
        %v2369 = vadd.f32 0.0, %v2368
        %v2370 = vpop.f32.mrb[0].mxu0
        %v2371 = vpop.f32.mrb[0].mxu0
        %v2372 = vadd.f32 0.0, %v2371
        %v2373 = vpop.f32.mrb[0].mxu0
        %2374 = vmatprep.mubr.bf16.mxu0 0
        %2375 = vmatmul.mubr.bf16.gmra.mrb[0].mxu0 %v1895
        %v2376 = vpop.f32.mrb[0].mxu0
        %v2377 = vadd.f32 0.0, %v2376
        %v2378 = vpop.f32.mrb[0].mxu0
        %v2379 = vpop.f32.mrb[0].mxu0
        %v2380 = vadd.f32 0.0, %v2379
        %v2381 = vpop.f32.mrb[0].mxu0
        %2382 = vmatprep.mubr.bf16.mxu0 0
        %2383 = vmatmul.mubr.bf16.gmra.mrb[0].mxu0 %v1897
        %v2384 = vpop.f32.mrb[0].mxu0
        %v2385 = vadd.f32 0.0, %v2384
        %v2386 = vpop.f32.mrb[0].mxu0
        %v2387 = vpop.f32.mrb[0].mxu0
        %v2388 = vadd.f32 0.0, %v2387
        %v2389 = vpop.f32.mrb[0].mxu0
        %2390 = vmatprep.mubr.bf16.mxu0 0
        %2391 = vmatmul.mubr.bf16.gmra.mrb[0].mxu0 %v1899
        %v2392 = vpop.f32.mrb[0].mxu0
        %v2393 = vadd.f32 0.0, %v2392
        %v2394 = vpop.f32.mrb[0].mxu0
        %v2395 = vpop.f32.mrb[0].mxu0
        %v2396 = vadd.f32 0.0, %v2395
        %v2397 = vpop.f32.mrb[0].mxu0
        %2398 = vmatprep.mubr.bf16.mxu0 0
        %2399 = vmatmul.mubr.bf16.gmra.mrb[0].mxu0 %v1901
        %v2400 = vpop.f32.mrb[0].mxu0
        %v2401 = vadd.f32 0.0, %v2400
        %v2402 = vpop.f32.mrb[0].mxu0
        %v2403 = vpop.f32.mrb[0].mxu0
        %v2404 = vadd.f32 0.0, %v2403
        %v2405 = vpop.f32.mrb[0].mxu0
        %2406 = vmatprep.mubr.bf16.mxu0 0
        %2407 = vmatmul.mubr.bf16.gmra.mrb[0].mxu0 %v1903
        %v2408 = vpop.f32.mrb[0].mxu0
        %v2409 = vadd.f32 0.0, %v2408
        %v2410 = vpop.f32.mrb[0].mxu0
        %v2411 = vpop.f32.mrb[0].mxu0
        %v2412 = vadd.f32 0.0, %v2411
        %v2413 = vpop.f32.mrb[0].mxu0
        %2414 = vmatprep.mubr.bf16.mxu0 0
        %2415 = vmatmul.mubr.bf16.gmra.mrb[0].mxu0 %v1905
        %v2416 = vpop.f32.mrb[0].mxu0
        %v2417 = vadd.f32 0.0, %v2416
        %v2418 = vpop.f32.mrb[0].mxu0
        %v2419 = vpop.f32.mrb[0].mxu0
        %v2420 = vadd.f32 0.0, %v2419
        %v2421 = vpop.f32.mrb[0].mxu0
        %2422 = vmatprep.mubr.bf16.mxu0 0
        %2423 = vmatmul.mubr.bf16.gmra.mrb[0].mxu0 %v1907
        %v2424 = vpop.f32.mrb[0].mxu0
        %v2425 = vadd.f32 0.0, %v2424
        %v2426 = vpop.f32.mrb[0].mxu0
        %v2427 = vpop.f32.mrb[0].mxu0
        %v2428 = vadd.f32 0.0, %v2427
        %v2429 = vpop.f32.mrb[0].mxu0
        %2430 = vmatprep.mubr.bf16.mxu0 0
        %2431 = vmatmul.mubr.bf16.gmra.mrb[0].mxu0 %v1909
        %v2432 = vpop.f32.mrb[0].mxu0
        %v2433 = vadd.f32 0.0, %v2432
        %v2434 = vpop.f32.mrb[0].mxu0
        %v2435 = vpop.f32.mrb[0].mxu0
        %v2436 = vadd.f32 0.0, %v2435
        %v2437 = vpop.f32.mrb[0].mxu0
        %2438 = vmatprep.mubr.bf16.mxu0 0
        %2439 = vmatmul.mubr.bf16.gmra.mrb[0].mxu0 %v1911
        %v2440 = vpop.f32.mrb[0].mxu0
        %v2441 = vadd.f32 0.0, %v2440
        %v2442 = vpop.f32.mrb[0].mxu0
        %v2443 = vpop.f32.mrb[0].mxu0
        %v2444 = vadd.f32 0.0, %v2443
        %v2445 = vpop.f32.mrb[0].mxu0
        %2446 = vmatprep.mubr.bf16.mxu0 0
        %2447 = vmatmul.mubr.bf16.gmra.mrb[0].mxu0 %v1913
        %v2448 = vpop.f32.mrb[0].mxu0
        %v2449 = vadd.f32 0.0, %v2448
        %v2450 = vpop.f32.mrb[0].mxu0
        %v2451 = vpop.f32.mrb[0].mxu0
        %v2452 = vadd.f32 0.0, %v2451
        %v2453 = vpop.f32.mrb[0].mxu0
        %2454 = vmatprep.mubr.bf16.mxu0 0
        %2455 = vmatmul.mubr.bf16.gmra.mrb[0].mxu0 %v1915
        %v2456 = vpop.f32.mrb[0].mxu0
        %v2457 = vadd.f32 0.0, %v2456
        %v2458 = vpop.f32.mrb[0].mxu0
        %v2459 = vpop.f32.mrb[0].mxu0
        %v2460 = vadd.f32 0.0, %v2459
        %v2461 = vpop.f32.mrb[0].mxu0
        %2462 = vmatprep.mubr.bf16.mxu0 0
        %2463 = vmatmul.mubr.bf16.gmra.mrb[0].mxu0 %v1917
        %v2464 = vpop.f32.mrb[0].mxu0
        %v2465 = vadd.f32 0.0, %v2464
        %v2466 = vpop.f32.mrb[0].mxu0
        %v2467 = vpop.f32.mrb[0].mxu0
        %v2468 = vadd.f32 0.0, %v2467
        %v2469 = vpop.f32.mrb[0].mxu0
        %2470 = vmatprep.mubr.bf16.mxu0 0
        %2471 = vmatmul.mubr.bf16.gmra.mrb[0].mxu0 %v1919
        %v2472 = vpop.f32.mrb[0].mxu0
        %v2473 = vadd.f32 0.0, %v2472
        %v2474 = vpop.f32.mrb[0].mxu0
        %v2475 = vpop.f32.mrb[0].mxu0
        %v2476 = vadd.f32 0.0, %v2475
        %v2477 = vpop.f32.mrb[0].mxu0
        %2478 = vmatprep.mubr.bf16.mxu0 0
        %2479 = vmatmul.mubr.bf16.gmra.mrb[0].mxu0 %v1921
        %v2480 = vpop.f32.mrb[0].mxu0
        %v2481 = vadd.f32 0.0, %v2480
        %v2482 = vpop.f32.mrb[0].mxu0
        %v2483 = vpop.f32.mrb[0].mxu0
        %v2484 = vadd.f32 0.0, %v2483
        %v2485 = vpop.f32.mrb[0].mxu0
        %2486 = vmatprep.mubr.bf16.mxu0 0
        %2487 = vmatmul.mubr.bf16.gmra.mrb[0].mxu0 %v2332
        %v2488 = vpop.f32.mrb[0].mxu0
        %v2489 = vadd.f32 0.0, %v2488
        %v2490 = vpop.f32.mrb[0].mxu0
        %v2491 = vpop.f32.mrb[0].mxu0
        %v2492 = vadd.f32 0.0, %v2491
        %v2493 = vpop.f32.mrb[0].mxu0
        %2494 = vdwg.mxu0
        %v2495 = vadd.f32 %v2157, %v2369
        %v2496 = vadd.f32 %v2160, %v2372
        %v2497 = vadd.f32 %v2165, %v2377
        %v2498 = vadd.f32 %v2168, %v2380
        %v2499 = vadd.f32 %v2173, %v2385
        %v2500 = vadd.f32 %v2176, %v2388
        %v2501 = vadd.f32 %v2181, %v2393
        %v2502 = vadd.f32 %v2184, %v2396
        %v2503 = vadd.f32 %v2189, %v2401
        %v2504 = vadd.f32 %v2192, %v2404
        %v2505 = vadd.f32 %v2197, %v2409
        %v2506 = vadd.f32 %v2200, %v2412
        %v2507 = vadd.f32 %v2205, %v2417
        %v2508 = vadd.f32 %v2208, %v2420
        %v2509 = vadd.f32 %v2213, %v2425
        %v2510 = vadd.f32 %v2216, %v2428
        %v2511 = vadd.f32 %v2221, %v2433
        %v2512 = vadd.f32 %v2224, %v2436
        %v2513 = vadd.f32 %v2229, %v2441
        %v2514 = vadd.f32 %v2232, %v2444
        %v2515 = vadd.f32 %v2237, %v2449
        %v2516 = vadd.f32 %v2240, %v2452
        %v2517 = vadd.f32 %v2245, %v2457
        %v2518 = vadd.f32 %v2248, %v2460
        %v2519 = vadd.f32 %v2253, %v2465
        %v2520 = vadd.f32 %v2256, %v2468
        %v2521 = vadd.f32 %v2261, %v2473
        %v2522 = vadd.f32 %v2264, %v2476
        %v2523 = vadd.f32 %v2269, %v2481
        %v2524 = vadd.f32 %v2272, %v2484
        %v2525 = vadd.f32 %v2277, %v2489
        %v2526 = vadd.f32 %v2280, %v2492
        %v2527 = vld [vmem:[%s5] sm:$0x1]
        %v2529 = vlaneseq
        %v2530 = vshrl.u32 %v2529, 7
        %v2531 = vsub.s32 0, %v2530
        %v2532 = vrot.slane %v2527, %v2531
        %v2534 = vadd.f32 %v2495, %v2532
        %v2535 = vadd.f32 %v2496, %v2532
        %v2536 = vadd.f32 %v2497, %v2532
        %v2537 = vadd.f32 %v2498, %v2532
        %v2538 = vadd.f32 %v2499, %v2532
        %v2539 = vadd.f32 %v2500, %v2532
        %v2540 = vadd.f32 %v2501, %v2532
        %v2541 = vadd.f32 %v2502, %v2532
        %v2542 = vadd.f32 %v2503, %v2532
        %v2543 = vadd.f32 %v2504, %v2532
        %v2544 = vadd.f32 %v2505, %v2532
        %v2545 = vadd.f32 %v2506, %v2532
        %v2546 = vadd.f32 %v2507, %v2532
        %v2547 = vadd.f32 %v2508, %v2532
        %v2548 = vadd.f32 %v2509, %v2532
        %v2549 = vadd.f32 %v2510, %v2532
        %v2550 = vadd.f32 %v2511, %v2532
        %v2551 = vadd.f32 %v2512, %v2532
        %v2552 = vadd.f32 %v2513, %v2532
        %v2553 = vadd.f32 %v2514, %v2532
        %v2554 = vadd.f32 %v2515, %v2532
        %v2555 = vadd.f32 %v2516, %v2532
        %v2556 = vadd.f32 %v2517, %v2532
        %v2557 = vadd.f32 %v2518, %v2532
        %v2558 = vadd.f32 %v2519, %v2532
        %v2559 = vadd.f32 %v2520, %v2532
        %v2560 = vadd.f32 %v2521, %v2532
        %v2561 = vadd.f32 %v2522, %v2532
        %v2562 = vadd.f32 %v2523, %v2532
        %v2563 = vadd.f32 %v2524, %v2532
        %v2564 = vadd.f32 %v2525, %v2532
        %v2565 = vadd.f32 %v2526, %v2532
        %v2566 = vmax.f32 %v2534, 0.0
        %v2567 = vmax.f32 %v2535, 0.0
        %v2568 = vmax.f32 %v2536, 0.0
        %v2569 = vmax.f32 %v2537, 0.0
        %v2570 = vmax.f32 %v2538, 0.0
        %v2571 = vmax.f32 %v2539, 0.0
        %v2572 = vmax.f32 %v2540, 0.0
        %v2573 = vmax.f32 %v2541, 0.0
        %v2574 = vmax.f32 %v2542, 0.0
        %v2575 = vmax.f32 %v2543, 0.0
        %v2576 = vmax.f32 %v2544, 0.0
        %v2577 = vmax.f32 %v2545, 0.0
        %v2578 = vmax.f32 %v2546, 0.0
        %v2579 = vmax.f32 %v2547, 0.0
        %v2580 = vmax.f32 %v2548, 0.0
        %v2581 = vmax.f32 %v2549, 0.0
        %v2582 = vmax.f32 %v2550, 0.0
        %v2583 = vmax.f32 %v2551, 0.0
        %v2584 = vmax.f32 %v2552, 0.0
        %v2585 = vmax.f32 %v2553, 0.0
        %v2586 = vmax.f32 %v2554, 0.0
        %v2587 = vmax.f32 %v2555, 0.0
        %v2588 = vmax.f32 %v2556, 0.0
        %v2589 = vmax.f32 %v2557, 0.0
        %v2590 = vmax.f32 %v2558, 0.0
        %v2591 = vmax.f32 %v2559, 0.0
        %v2592 = vmax.f32 %v2560, 0.0
        %v2593 = vmax.f32 %v2561, 0.0
        %v2594 = vmax.f32 %v2562, 0.0
        %v2595 = vmax.f32 %v2563, 0.0
        %v2596 = vmax.f32 %v2564, 0.0
        %v2597 = vmax.f32 %v2565, 0.0
        %v2598 = vpack.c.bf16 %v2567, %v2566
        %v2599 = vpack.c.bf16 %v2569, %v2568
        %v2600 = vpack.c.bf16 %v2571, %v2570
        %v2601 = vpack.c.bf16 %v2573, %v2572
        %v2602 = vpack.c.bf16 %v2575, %v2574
        %v2603 = vpack.c.bf16 %v2577, %v2576
        %v2604 = vpack.c.bf16 %v2579, %v2578
        %v2605 = vpack.c.bf16 %v2581, %v2580
        %v2606 = vpack.c.bf16 %v2583, %v2582
        %v2607 = vpack.c.bf16 %v2585, %v2584
        %v2608 = vpack.c.bf16 %v2587, %v2586
        %v2609 = vpack.c.bf16 %v2589, %v2588
        %v2610 = vpack.c.bf16 %v2591, %v2590
        %v2611 = vpack.c.bf16 %v2593, %v2592
        %v2612 = vpack.c.bf16 %v2595, %v2594
        %v2613 = vpack.c.bf16 %v2597, %v2596
        %v2614 = vld [vmem:[%s3] sm:$0xf]
        %v2615 = vld [vmem:[%s3 + $0x4] sm:$0xf]
        %v2616 = vld [vmem:[%s3 + $0x8] sm:$0xf]
        %v2617 = vld [vmem:[%s3 + $0xc] sm:$0xf]
        %v2618 = vld [vmem:[%s6] sm:$0x1]
        %v2620 = vlaneseq
        %v2621 = vshrl.u32 %v2620, 7
        %v2622 = vsub.s32 0, %v2621
        %v2623 = vrot.slane %v2618, %v2622
        %v2629 = vunpack.c.l.b16 %v2614
        %v2630 = vunpack.c.l.b16 %v2615
        %v2631 = vunpack.c.l.b16 %v2616
        %v2632 = vunpack.c.l.b16 %v2617
        %v2633 = vpack.c.b16 %v2630, %v2629
        %v2634 = vpack.c.b16 %v2632, %v2631
        %v2638 = vsel %vm670, %v2598, 0
        %v2641 = vsel %vm670, %v2599, 0
        %v2644 = vsel %vm670, %v2600, 0
        %v2647 = vsel %vm670, %v2601, 0
        %v2650 = vsel %vm670, %v2602, 0
        %v2653 = vsel %vm670, %v2603, 0
        %v2656 = vsel %vm670, %v2604, 0
        %v2659 = vsel %vm670, %v2605, 0
        %v2662 = vsel %vm670, %v2606, 0
        %v2665 = vsel %vm670, %v2607, 0
        %v2668 = vsel %vm670, %v2608, 0
        %v2671 = vsel %vm670, %v2609, 0
        %v2674 = vsel %vm670, %v2610, 0
        %v2677 = vsel %vm670, %v2611, 0
        %v2680 = vsel %vm670, %v2612, 0
        %v2683 = vsel %vm670, %v2613, 0
        %2685 = vmatprep.subr.bf16.mxu0 0
        %2686 = vmatpush1.bf16.msra.mxu0 %v2633
        %2687 = vmatprep.subr.bf16.mxu0 0
        %2688 = vmatpush1.bf16.msra.mxu0 %v2634
        %2689 = vmatprep.subr.bf16.mxu0 0
        %2690 = vmatpush1.bf16.msra.mxu0 0
        %2691 = vmatprep.subr.bf16.mxu0 0
        %2692 = vmatpush1.bf16.msra.mxu0 0
        %2693 = vmatprep.subr.bf16.mxu0 0
        %2694 = vmatpush1.bf16.msra.mxu0 0
        %2695 = vmatprep.subr.bf16.mxu0 0
        %2696 = vmatpush1.bf16.msra.mxu0 0
        %2697 = vmatprep.subr.bf16.mxu0 0
        %2698 = vmatpush1.bf16.msra.mxu0 0
        %2699 = vmatprep.subr.bf16.mxu0 0
        %2700 = vmatpush1.bf16.msra.mxu0 0
        %2701 = vmatprep.subr.bf16.mxu0 0
        %2702 = vmatpush1.bf16.msra.mxu0 0
        %2703 = vmatprep.subr.bf16.mxu0 0
        %2704 = vmatpush1.bf16.msra.mxu0 0
        %2705 = vmatprep.subr.bf16.mxu0 0
        %2706 = vmatpush1.bf16.msra.mxu0 0
        %2707 = vmatprep.subr.bf16.mxu0 0
        %2708 = vmatpush1.bf16.msra.mxu0 0
        %2709 = vmatprep.subr.bf16.mxu0 0
        %2710 = vmatpush1.bf16.msra.mxu0 0
        %2711 = vmatprep.subr.bf16.mxu0 0
        %2712 = vmatpush1.bf16.msra.mxu0 0
        %2713 = vmatprep.subr.bf16.mxu0 0
        %2714 = vmatpush1.bf16.msra.mxu0 0
        %2715 = vmatprep.subr.bf16.mxu0 0
        %2716 = vmatpush1.bf16.msra.mxu0 0
        %2717 = vmatprep.mubr.bf16.mxu0 0
        %2718 = vmatmul.mubr.bf16.gmra.mrb[0].mxu0 %v2638
        %v2719 = vpop.f32.mrb[0].mxu0
        %v2720 = vadd.f32 %v2623, %v2719
        %v2721 = vpop.f32.mrb[0].mxu0
        %v2722 = vpop.f32.mrb[0].mxu0
        %v2723 = vadd.f32 %v2623, %v2722
        %v2724 = vpop.f32.mrb[0].mxu0
        %2725 = vmatprep.mubr.bf16.mxu0 0
        %2726 = vmatmul.mubr.bf16.gmra.mrb[0].mxu0 %v2641
        %v2727 = vpop.f32.mrb[0].mxu0
        %v2728 = vadd.f32 %v2623, %v2727
        %v2729 = vpop.f32.mrb[0].mxu0
        %v2730 = vpop.f32.mrb[0].mxu0
        %v2731 = vadd.f32 %v2623, %v2730
        %v2732 = vpop.f32.mrb[0].mxu0
        %2733 = vmatprep.mubr.bf16.mxu0 0
        %2734 = vmatmul.mubr.bf16.gmra.mrb[0].mxu0 %v2644
        %v2735 = vpop.f32.mrb[0].mxu0
        %v2736 = vadd.f32 %v2623, %v2735
        %v2737 = vpop.f32.mrb[0].mxu0
        %v2738 = vpop.f32.mrb[0].mxu0
        %v2739 = vadd.f32 %v2623, %v2738
        %v2740 = vpop.f32.mrb[0].mxu0
        %2741 = vmatprep.mubr.bf16.mxu0 0
        %2742 = vmatmul.mubr.bf16.gmra.mrb[0].mxu0 %v2647
        %v2743 = vpop.f32.mrb[0].mxu0
        %v2744 = vadd.f32 %v2623, %v2743
        %v2745 = vpop.f32.mrb[0].mxu0
        %v2746 = vpop.f32.mrb[0].mxu0
        %v2747 = vadd.f32 %v2623, %v2746
        %v2748 = vpop.f32.mrb[0].mxu0
        %2749 = vmatprep.mubr.bf16.mxu0 0
        %2750 = vmatmul.mubr.bf16.gmra.mrb[0].mxu0 %v2650
        %v2751 = vpop.f32.mrb[0].mxu0
        %v2752 = vadd.f32 %v2623, %v2751
        %v2753 = vpop.f32.mrb[0].mxu0
        %v2754 = vpop.f32.mrb[0].mxu0
        %v2755 = vadd.f32 %v2623, %v2754
        %v2756 = vpop.f32.mrb[0].mxu0
        %2757 = vmatprep.mubr.bf16.mxu0 0
        %2758 = vmatmul.mubr.bf16.gmra.mrb[0].mxu0 %v2653
        %v2759 = vpop.f32.mrb[0].mxu0
        %v2760 = vadd.f32 %v2623, %v2759
        %v2761 = vpop.f32.mrb[0].mxu0
        %v2762 = vpop.f32.mrb[0].mxu0
        %v2763 = vadd.f32 %v2623, %v2762
        %v2764 = vpop.f32.mrb[0].mxu0
        %2765 = vmatprep.mubr.bf16.mxu0 0
        %2766 = vmatmul.mubr.bf16.gmra.mrb[0].mxu0 %v2656
        %v2767 = vpop.f32.mrb[0].mxu0
        %v2768 = vadd.f32 %v2623, %v2767
        %v2769 = vpop.f32.mrb[0].mxu0
        %v2770 = vpop.f32.mrb[0].mxu0
        %v2771 = vadd.f32 %v2623, %v2770
        %v2772 = vpop.f32.mrb[0].mxu0
        %2773 = vmatprep.mubr.bf16.mxu0 0
        %2774 = vmatmul.mubr.bf16.gmra.mrb[0].mxu0 %v2659
        %v2775 = vpop.f32.mrb[0].mxu0
        %v2776 = vadd.f32 %v2623, %v2775
        %v2777 = vpop.f32.mrb[0].mxu0
        %v2778 = vpop.f32.mrb[0].mxu0
        %v2779 = vadd.f32 %v2623, %v2778
        %v2780 = vpop.f32.mrb[0].mxu0
        %2781 = vmatprep.mubr.bf16.mxu0 0
        %2782 = vmatmul.mubr.bf16.gmra.mrb[0].mxu0 %v2662
        %v2783 = vpop.f32.mrb[0].mxu0
        %v2784 = vadd.f32 %v2623, %v2783
        %v2785 = vpop.f32.mrb[0].mxu0
        %v2786 = vpop.f32.mrb[0].mxu0
        %v2787 = vadd.f32 %v2623, %v2786
        %v2788 = vpop.f32.mrb[0].mxu0
        %2789 = vmatprep.mubr.bf16.mxu0 0
        %2790 = vmatmul.mubr.bf16.gmra.mrb[0].mxu0 %v2665
        %v2791 = vpop.f32.mrb[0].mxu0
        %v2792 = vadd.f32 %v2623, %v2791
        %v2793 = vpop.f32.mrb[0].mxu0
        %v2794 = vpop.f32.mrb[0].mxu0
        %v2795 = vadd.f32 %v2623, %v2794
        %v2796 = vpop.f32.mrb[0].mxu0
        %2797 = vmatprep.mubr.bf16.mxu0 0
        %2798 = vmatmul.mubr.bf16.gmra.mrb[0].mxu0 %v2668
        %v2799 = vpop.f32.mrb[0].mxu0
        %v2800 = vadd.f32 %v2623, %v2799
        %v2801 = vpop.f32.mrb[0].mxu0
        %v2802 = vpop.f32.mrb[0].mxu0
        %v2803 = vadd.f32 %v2623, %v2802
        %v2804 = vpop.f32.mrb[0].mxu0
        %2805 = vmatprep.mubr.bf16.mxu0 0
        %2806 = vmatmul.mubr.bf16.gmra.mrb[0].mxu0 %v2671
        %v2807 = vpop.f32.mrb[0].mxu0
        %v2808 = vadd.f32 %v2623, %v2807
        %v2809 = vpop.f32.mrb[0].mxu0
        %v2810 = vpop.f32.mrb[0].mxu0
        %v2811 = vadd.f32 %v2623, %v2810
        %v2812 = vpop.f32.mrb[0].mxu0
        %2813 = vmatprep.mubr.bf16.mxu0 0
        %2814 = vmatmul.mubr.bf16.gmra.mrb[0].mxu0 %v2674
        %v2815 = vpop.f32.mrb[0].mxu0
        %v2816 = vadd.f32 %v2623, %v2815
        %v2817 = vpop.f32.mrb[0].mxu0
        %v2818 = vpop.f32.mrb[0].mxu0
        %v2819 = vadd.f32 %v2623, %v2818
        %v2820 = vpop.f32.mrb[0].mxu0
        %2821 = vmatprep.mubr.bf16.mxu0 0
        %2822 = vmatmul.mubr.bf16.gmra.mrb[0].mxu0 %v2677
        %v2823 = vpop.f32.mrb[0].mxu0
        %v2824 = vadd.f32 %v2623, %v2823
        %v2825 = vpop.f32.mrb[0].mxu0
        %v2826 = vpop.f32.mrb[0].mxu0
        %v2827 = vadd.f32 %v2623, %v2826
        %v2828 = vpop.f32.mrb[0].mxu0
        %2829 = vmatprep.mubr.bf16.mxu0 0
        %2830 = vmatmul.mubr.bf16.gmra.mrb[0].mxu0 %v2680
        %v2831 = vpop.f32.mrb[0].mxu0
        %v2832 = vadd.f32 %v2623, %v2831
        %v2833 = vpop.f32.mrb[0].mxu0
        %v2834 = vpop.f32.mrb[0].mxu0
        %v2835 = vadd.f32 %v2623, %v2834
        %v2836 = vpop.f32.mrb[0].mxu0
        %2837 = vmatprep.mubr.bf16.mxu0 0
        %2838 = vmatmul.mubr.bf16.gmra.mrb[0].mxu0 %v2683
        %v2839 = vpop.f32.mrb[0].mxu0
        %v2840 = vadd.f32 %v2623, %v2839
        %v2841 = vpop.f32.mrb[0].mxu0
        %v2842 = vpop.f32.mrb[0].mxu0
        %v2843 = vadd.f32 %v2623, %v2842
        %v2844 = vpop.f32.mrb[0].mxu0
        %2845 = vdwg.mxu0
        %v2846 = vunpack.c.l.bf16 %v278
        %v2847 = vunpack.c.l.bf16 %v279
        %v2848 = vunpack.c.l.bf16 %v280
        %v2849 = vunpack.c.l.bf16 %v281
        %v2850 = vunpack.c.l.bf16 %v282
        %v2851 = vunpack.c.l.bf16 %v283
        %v2852 = vunpack.c.l.bf16 %v284
        %v2853 = vunpack.c.l.bf16 %v285
        %v2854 = vunpack.c.l.bf16 %v286
        %v2855 = vunpack.c.l.bf16 %v287
        %v2856 = vunpack.c.l.bf16 %v288
        %v2857 = vunpack.c.l.bf16 %v289
        %v2858 = vunpack.c.l.bf16 %v290
        %v2859 = vunpack.c.l.bf16 %v291
        %v2860 = vunpack.c.l.bf16 %v292
        %v2861 = vunpack.c.l.bf16 %v293
        %v2862 = vunpack.c.l.bf16 %v294
        %v2863 = vunpack.c.l.bf16 %v295
        %v2864 = vunpack.c.l.bf16 %v296
        %v2865 = vunpack.c.l.bf16 %v297
        %v2866 = vunpack.c.l.bf16 %v298
        %v2867 = vunpack.c.l.bf16 %v299
        %v2868 = vunpack.c.l.bf16 %v300
        %v2869 = vunpack.c.l.bf16 %v301
        %v2870 = vunpack.c.l.bf16 %v302
        %v2871 = vunpack.c.l.bf16 %v303
        %v2872 = vunpack.c.l.bf16 %v304
        %v2873 = vunpack.c.l.bf16 %v305
        %v2874 = vunpack.c.l.bf16 %v306
        %v2875 = vunpack.c.l.bf16 %v307
        %v2876 = vunpack.c.l.bf16 %v308
        %v2877 = vunpack.c.l.bf16 %v309
        %v2878 = vadd.f32 %v2720, %v2846
        %v2879 = vadd.f32 %v2723, %v2847
        %v2880 = vadd.f32 %v2728, %v2848
        %v2881 = vadd.f32 %v2731, %v2849
        %v2882 = vadd.f32 %v2736, %v2850
        %v2883 = vadd.f32 %v2739, %v2851
        %v2884 = vadd.f32 %v2744, %v2852
        %v2885 = vadd.f32 %v2747, %v2853
        %v2886 = vadd.f32 %v2752, %v2854
        %v2887 = vadd.f32 %v2755, %v2855
        %v2888 = vadd.f32 %v2760, %v2856
        %v2889 = vadd.f32 %v2763, %v2857
        %v2890 = vadd.f32 %v2768, %v2858
        %v2891 = vadd.f32 %v2771, %v2859
        %v2892 = vadd.f32 %v2776, %v2860
        %v2893 = vadd.f32 %v2779, %v2861
        %v2894 = vadd.f32 %v2784, %v2862
        %v2895 = vadd.f32 %v2787, %v2863
        %v2896 = vadd.f32 %v2792, %v2864
        %v2897 = vadd.f32 %v2795, %v2865
        %v2898 = vadd.f32 %v2800, %v2866
        %v2899 = vadd.f32 %v2803, %v2867
        %v2900 = vadd.f32 %v2808, %v2868
        %v2901 = vadd.f32 %v2811, %v2869
        %v2902 = vadd.f32 %v2816, %v2870
        %v2903 = vadd.f32 %v2819, %v2871
        %v2904 = vadd.f32 %v2824, %v2872
        %v2905 = vadd.f32 %v2827, %v2873
        %v2906 = vadd.f32 %v2832, %v2874
        %v2907 = vadd.f32 %v2835, %v2875
        %v2908 = vadd.f32 %v2840, %v2876
        %v2909 = vadd.f32 %v2843, %v2877
        %v2910 = vmax.f32 %v2878, 0.0
        %v2911 = vmax.f32 %v2879, 0.0
        %v2912 = vmax.f32 %v2880, 0.0
        %v2913 = vmax.f32 %v2881, 0.0
        %v2914 = vmax.f32 %v2882, 0.0
        %v2915 = vmax.f32 %v2883, 0.0
        %v2916 = vmax.f32 %v2884, 0.0
        %v2917 = vmax.f32 %v2885, 0.0
        %v2918 = vmax.f32 %v2886, 0.0
        %v2919 = vmax.f32 %v2887, 0.0
        %v2920 = vmax.f32 %v2888, 0.0
        %v2921 = vmax.f32 %v2889, 0.0
        %v2922 = vmax.f32 %v2890, 0.0
        %v2923 = vmax.f32 %v2891, 0.0
        %v2924 = vmax.f32 %v2892, 0.0
        %v2925 = vmax.f32 %v2893, 0.0
        %v2926 = vmax.f32 %v2894, 0.0
        %v2927 = vmax.f32 %v2895, 0.0
        %v2928 = vmax.f32 %v2896, 0.0
        %v2929 = vmax.f32 %v2897, 0.0
        %v2930 = vmax.f32 %v2898, 0.0
        %v2931 = vmax.f32 %v2899, 0.0
        %v2932 = vmax.f32 %v2900, 0.0
        %v2933 = vmax.f32 %v2901, 0.0
        %v2934 = vmax.f32 %v2902, 0.0
        %v2935 = vmax.f32 %v2903, 0.0
        %v2936 = vmax.f32 %v2904, 0.0
        %v2937 = vmax.f32 %v2905, 0.0
        %v2938 = vmax.f32 %v2906, 0.0
        %v2939 = vmax.f32 %v2907, 0.0
        %v2940 = vmax.f32 %v2908, 0.0
        %v2941 = vmax.f32 %v2909, 0.0
        %v2942 = vpack.c.bf16 %v2911, %v2910
        %v2943 = vpack.c.bf16 %v2913, %v2912
        %v2944 = vpack.c.bf16 %v2915, %v2914
        %v2945 = vpack.c.bf16 %v2917, %v2916
        %v2946 = vpack.c.bf16 %v2919, %v2918
        %v2947 = vpack.c.bf16 %v2921, %v2920
        %v2948 = vpack.c.bf16 %v2923, %v2922
        %v2949 = vpack.c.bf16 %v2925, %v2924
        %v2950 = vpack.c.bf16 %v2927, %v2926
        %v2951 = vpack.c.bf16 %v2929, %v2928
        %v2952 = vpack.c.bf16 %v2931, %v2930
        %v2953 = vpack.c.bf16 %v2933, %v2932
        %v2954 = vpack.c.bf16 %v2935, %v2934
        %v2955 = vpack.c.bf16 %v2937, %v2936
        %v2956 = vpack.c.bf16 %v2939, %v2938
        %v2957 = vpack.c.bf16 %v2941, %v2940
        %v2974 = vunpack.c.l.b16 %v2942
        %v2975 = vunpack.c.h.b16 %v2942
        %v2976 = vunpack.c.l.b16 %v2943
        %v2977 = vunpack.c.h.b16 %v2943
        %v2978 = vunpack.c.l.b16 %v2944
        %v2979 = vunpack.c.h.b16 %v2944
        %v2980 = vunpack.c.l.b16 %v2945
        %v2981 = vunpack.c.h.b16 %v2945
        %v2982 = vunpack.c.l.b16 %v2946
        %v2983 = vunpack.c.h.b16 %v2946
        %v2984 = vunpack.c.l.b16 %v2947
        %v2985 = vunpack.c.h.b16 %v2947
        %v2986 = vunpack.c.l.b16 %v2948
        %v2987 = vunpack.c.h.b16 %v2948
        %v2988 = vunpack.c.l.b16 %v2949
        %v2989 = vunpack.c.h.b16 %v2949
        %v2990 = vunpack.c.l.b16 %v2950
        %v2991 = vunpack.c.h.b16 %v2950
        %v2992 = vunpack.c.l.b16 %v2951
        %v2993 = vunpack.c.h.b16 %v2951
        %v2994 = vunpack.c.l.b16 %v2952
        %v2995 = vunpack.c.h.b16 %v2952
        %v2996 = vunpack.c.l.b16 %v2953
        %v2997 = vunpack.c.h.b16 %v2953
        %v2998 = vunpack.c.l.b16 %v2954
        %v2999 = vunpack.c.h.b16 %v2954
        %v3000 = vunpack.c.l.b16 %v2955
        %v3001 = vunpack.c.h.b16 %v2955
        %v3002 = vunpack.c.l.b16 %v2956
        %v3003 = vunpack.c.h.b16 %v2956
        %v3004 = vunpack.c.l.b16 %v2957
        %v3005 = vunpack.c.h.b16 %v2957
        %v3006 = vpack.c.b16 %v2974, %v2974
        %v3007 = vpack.c.b16 %v2975, %v2975
        %v3008 = vpack.c.b16 %v2976, %v2976
        %v3009 = vpack.c.b16 %v2977, %v2977
        %v3010 = vpack.c.b16 %v2978, %v2978
        %v3011 = vpack.c.b16 %v2979, %v2979
        %v3012 = vpack.c.b16 %v2980, %v2980
        %v3013 = vpack.c.b16 %v2981, %v2981
        %v3014 = vpack.c.b16 %v2982, %v2982
        %v3015 = vpack.c.b16 %v2983, %v2983
        %v3016 = vpack.c.b16 %v2984, %v2984
        %v3017 = vpack.c.b16 %v2985, %v2985
        %v3018 = vpack.c.b16 %v2986, %v2986
        %v3019 = vpack.c.b16 %v2987, %v2987
        %v3020 = vpack.c.b16 %v2988, %v2988
        %v3021 = vpack.c.b16 %v2989, %v2989
        %v3022 = vpack.c.b16 %v2990, %v2990
        %v3023 = vpack.c.b16 %v2991, %v2991
        %v3024 = vpack.c.b16 %v2992, %v2992
        %v3025 = vpack.c.b16 %v2993, %v2993
        %v3026 = vpack.c.b16 %v2994, %v2994
        %v3027 = vpack.c.b16 %v2995, %v2995
        %v3028 = vpack.c.b16 %v2996, %v2996
        %v3029 = vpack.c.b16 %v2997, %v2997
        %v3030 = vpack.c.b16 %v2998, %v2998
        %v3031 = vpack.c.b16 %v2999, %v2999
        %v3032 = vpack.c.b16 %v3000, %v3000
        %v3033 = vpack.c.b16 %v3001, %v3001
        %v3034 = vpack.c.b16 %v3002, %v3002
        %v3035 = vpack.c.b16 %v3003, %v3003
        %v3036 = vpack.c.b16 %v3004, %v3004
        %v3037 = vpack.c.b16 %v3005, %v3005
        %3070 = vst [vmem:[%s271] sm:$0xf] %v3006
        %3071 = vst [vmem:[%s271 + $0x4] sm:$0xf] %v3007
        %3072 = vst [vmem:[%s271 + $0x8] sm:$0xf] %v3008
        %3073 = vst [vmem:[%s271 + $0xc] sm:$0xf] %v3009
        %3074 = vst [vmem:[%s271 + $0x10] sm:$0xf] %v3010
        %3075 = vst [vmem:[%s271 + $0x14] sm:$0xf] %v3011
        %3076 = vst [vmem:[%s271 + $0x18] sm:$0xf] %v3012
        %3077 = vst [vmem:[%s271 + $0x1c] sm:$0xf] %v3013
        %3078 = vst [vmem:[%s271 + $0x20] sm:$0xf] %v3014
        %3079 = vst [vmem:[%s271 + $0x24] sm:$0xf] %v3015
        %3080 = vst [vmem:[%s271 + $0x28] sm:$0xf] %v3016
        %3081 = vst [vmem:[%s271 + $0x2c] sm:$0xf] %v3017
        %3082 = vst [vmem:[%s271 + $0x30] sm:$0xf] %v3018
        %3083 = vst [vmem:[%s271 + $0x34] sm:$0xf] %v3019
        %3084 = vst [vmem:[%s271 + $0x38] sm:$0xf] %v3020
        %3085 = vst [vmem:[%s271 + $0x3c] sm:$0xf] %v3021
        %3086 = vst [vmem:[%s271 + $0x40] sm:$0xf] %v3022
        %3087 = vst [vmem:[%s271 + $0x44] sm:$0xf] %v3023
        %3088 = vst [vmem:[%s271 + $0x48] sm:$0xf] %v3024
        %3089 = vst [vmem:[%s271 + $0x4c] sm:$0xf] %v3025
        %3090 = vst [vmem:[%s271 + $0x50] sm:$0xf] %v3026
        %3091 = vst [vmem:[%s271 + $0x54] sm:$0xf] %v3027
        %3092 = vst [vmem:[%s271 + $0x58] sm:$0xf] %v3028
        %3093 = vst [vmem:[%s271 + $0x5c] sm:$0xf] %v3029
        %3094 = vst [vmem:[%s271 + $0x60] sm:$0xf] %v3030
        %3095 = vst [vmem:[%s271 + $0x64] sm:$0xf] %v3031
        %3096 = vst [vmem:[%s271 + $0x68] sm:$0xf] %v3032
        %3097 = vst [vmem:[%s271 + $0x6c] sm:$0xf] %v3033
        %3098 = vst [vmem:[%s271 + $0x70] sm:$0xf] %v3034
        %3099 = vst [vmem:[%s271 + $0x74] sm:$0xf] %v3035
        %3100 = vst [vmem:[%s271 + $0x78] sm:$0xf] %v3036
        %3101 = vst [vmem:[%s271 + $0x7c] sm:$0xf] %v3037
        %s3102 = sand.u32 %s181, 1
        %s3103 = scalar_lea.sflag [#allocation4], %s3102
        %s3104 = sand.u32 %s181, 1
        %s3105 = smul.addr %s3104, 128
        %s3106 = scalar_lea.vmem [#allocation3], %s3105
        // Predicated region
        $region49: #{bottleneck_forward.1} parent=47 // pred_check
          %p3107 = pneg %p191
        $region50: #{bottleneck_forward.1} parent=47 // pred_check_branch
          %3109 = sbr.rel (%p3107) target = $region52
        $region51: #{bottleneck_forward.1} parent=47 // pred_region
          %s3111 = ssub.s32 2048, 2048
          %3112 = vsyncadd %s3103, %s3111
          %s3113 = smul.addr %s21, 32
          %s3114 = smul.addr %s3113, 64
          %s3115 = scalar_lea.hbm %s7, %s3114
          %s3116 = sshll.u32 %s3106, 4
          %s3117 = int_to_ptr.vmem [resolvable:$true] %s3116
          %3122 = dma.vmem_to_hbm [thread:$0]  %s3117, 2048, %s3115, %s3103, 64, 64, 4
        $region52: #{bottleneck_forward.1} parent=47 // pred_fallthru
          _
      $region48: #{bottleneck_forward.1} parent=5 // pred_fallthru
        _
      %p3123 = scmp.le.s32.totalorder 2, %s16
      // Predicated region
      $region53: #{bottleneck_forward.1} parent=5 // pred_check
        %p3124 = pneg %p3123
      $region54: #{bottleneck_forward.1} parent=5 // pred_check_branch
        %3126 = sbr.rel (%p3124) target = $region56
      $region55: #{bottleneck_forward.1} parent=5 // pred_region
        %s3127 = ssub.s32 %s16, 2
        // Predicated region
        $region57: #{bottleneck_forward.1} parent=55 // pred_check
          %p3128 = pneg %p197
        $region58: #{bottleneck_forward.1} parent=55 // pred_check_branch
          %3130 = sbr.rel (%p3128) target = $region60
        $region59: #{bottleneck_forward.1} parent=55 // pred_region
          %s3131 = sand.u32 %s182, 1
          %s3132 = scalar_lea.sflag [#allocation4], %s3131
          %s3133 = sand.u32 %s182, 1
          %s3134 = smul.addr %s3133, 128
          %s3135 = scalar_lea.vmem [#allocation3], %s3134
          %3136 = dma.done %s3132, 2048
        $region60: #{bottleneck_forward.1} parent=55 // pred_fallthru
          _
      $region56: #{bottleneck_forward.1} parent=5 // pred_fallthru
        _
    $region6: #{bottleneck_forward.1} parent=1 // loop_footer
      %s20 = sadd.s32 1, %s16
    $region7: #{bottleneck_forward.1} parent=1 // loop_footer_branch
      %15 = sbr.rel target = $region3
    $region8: #{bottleneck_forward.1} parent=1 // loop_exit
      _
    %3137 = vsyncpa [#allocation4], 1
    %s3138 = scalar_lea.sflag [#allocation4], 1
    %3139 = vsyncpa %s3138, 1

</llo_original>
